<compile_context>
chip_gen: v5e
topology: v5e:2x2
jax: 0.10.0
libtpu: 0.0.40
codegen_flags: <defaults>
</compile_context>

<pallas_src>
import jax
import jax.numpy as jnp
from jax import lax
from jax.experimental import pallas as pl
from jax.experimental.pallas import tpu as pltpu

N_CLASS = 2
NCLS_PAD = 128        # lane-dense padded output width
BN_EPS = 1e-5
BT = 8                # samples per grid step


# ------------------------------ Pallas kernel --------------------------------

def _eegnet_fused_kernel(pw_ref, w1_ref, b1_ref, w2_ref, b2_ref, p4_ref,
                         w3_ref, b3_ref, p8_ref, w4_ref, gap_ref,
                         wh_ref, bh_ref, o_ref, s_ref):
    f32, bf16 = jnp.float32, jnp.bfloat16
    bw = s_ref.shape[1]                       # Bt * (W1p + 16)

    # Conv2d(1,8,(1,64)) for all EEG channels & Bt samples: one block-diag matmul.
    y1 = jnp.dot(w1_ref[...], pw_ref[...], preferred_element_type=f32)
    y1 = jnp.maximum(y1 + b1_ref[...], 0.0)                 # BN1 + ReLU, (8C, Bt*To)

    # Grouped Conv2d(8,16,(C,1)): one dense (16, 8C) matmul.
    y2 = jnp.dot(w2_ref[...], y1.astype(bf16), preferred_element_type=f32)
    y2 = jnp.maximum(y2 + b2_ref[...], 0.0)                 # BN2 + ReLU, (16, Bt*To)

    # AvgPool2d((1,4)) + the (0,8) zero padding of conv3 (+16 zero tail cols),
    # per-sample block-diagonal pooling matrix.  (Dropout = identity.)
    y2pp = jnp.dot(y2.astype(bf16), p4_ref[...],
                   preferred_element_type=f32).astype(bf16)  # (16, bw + 16)

    # Build the (256, bw) conv3 operand: row block k holds y2pp shifted left by
    # k lanes.  Per-sample windows (tau < 33, k < 16) never cross the 48-wide
    # per-sample block; the spill columns are finite junk that the pool8
    # matrix's zero rows discard.
    for k in range(16):
        s_ref[k * 16:(k + 1) * 16, :] = y2pp[:, k:k + bw]

    # Conv2d(16,16,(1,16), pad (0,8)) as ONE (16,256)x(256,bw) matmul + BN3 + ReLU.
    y3 = jnp.dot(w3_ref[...], s_ref[...], preferred_element_type=f32)
    y3 = jnp.maximum(y3 + b3_ref[...], 0.0)                  # (16, bw)

    # AvgPool2d((1,8)) (floor mode) as a matmul.  (Dropout = identity.)
    y3p = jnp.dot(y3.astype(bf16), p8_ref[...], preferred_element_type=f32)

    # Conv2d(16,16,1) + ReLU.
    y4 = jnp.maximum(jnp.dot(w4_ref[...], y3p.astype(bf16),
                             preferred_element_type=f32), 0.0)

    # Global average pool (as a matmul) + classifier head (lane-dense output).
    feat = jnp.dot(y4.astype(bf16), gap_ref[...], preferred_element_type=f32)  # (16, Bt)
    logits = lax.dot_general(feat.astype(bf16), wh_ref[...],
                             (((0,), (0,)), ((), ())),
                             preferred_element_type=f32) + bh_ref[...]          # (Bt, 128)
    o_ref[...] = logits


# ------------------------------ wrapper (JAX) ---------------------------------

def eegnet_forward(params, x, *, bt=BT):
    """x: (B, 1, C, T) float32 -> logits (B, N_CLASS)."""
    B, _, C, T = x.shape
    To = T + 1                    # width after Conv2d(1,8,(1,64), pad (0,32))
    W1p = To // 4                 # after AvgPool2d((1,4))
    PB = W1p + 16                 # pooled width + (8,8) zero pad of conv3
    Wo = W1p + 1                  # conv3 output width
    W2p = Wo // 8                 # after AvgPool2d((1,8)) (floor)
    f32, bf16 = jnp.float32, jnp.bfloat16

    Bp = ((B + bt - 1) // bt) * bt
    if Bp != B:
        x = jnp.pad(x, ((0, Bp - B), (0, 0), (0, 0), (0, 0)))
    assert (bt * To) % 128 == 0, "batch tile must be lane aligned"

    # ---- fold eval-mode BatchNorm into the conv weights ----------------------
    s1 = params["g1"] / jnp.sqrt(params["v1"] + BN_EPS)
    w1f = params["w1"] * s1[:, None]                                    # (8, 64)
    b1f = params["be1"] - s1 * params["m1"]                             # (8,)
    w1bd = jnp.kron(jnp.eye(C, dtype=f32), w1f).astype(bf16)            # (8C, 64C)
    b1r = jnp.tile(b1f, C).reshape(8 * C, 1)

    s2 = params["g2"] / jnp.sqrt(params["v2"] + BN_EPS)
    w2f = params["w2"] * s2[:, None]                                    # (16, C)
    b2f = (params["be2"] - s2 * params["m2"]).reshape(16, 1)
    # groups=8: output channel oc only reads conv1 filter oc // 2.
    sel = (jnp.arange(8)[None, :] == (jnp.arange(16) // 2)[:, None]).astype(f32)
    w2d = (w2f[:, :, None] * sel[:, None, :]).reshape(16, 8 * C).astype(bf16)

    s3 = params["g3"] / jnp.sqrt(params["v3"] + BN_EPS)
    w3f = params["w3"] * s3[:, None, None]                              # (oc, ic, k)
    b3f = (params["be3"] - s3 * params["m3"]).reshape(16, 1)
    w3flat = jnp.transpose(w3f, (0, 2, 1)).reshape(16, 256).astype(bf16)  # (oc, k*16+ic)

    w4 = params["w4"].astype(bf16)
    whp = jnp.zeros((16, NCLS_PAD), f32).at[:, :N_CLASS].set(params["wh"]).astype(bf16)
    bhp = jnp.zeros((1, NCLS_PAD), f32).at[0, :N_CLASS].set(params["bh"])

    # ---- pooling / padding / GAP matrices (hoisted, constant index_maps) -----
    t = jnp.arange(To)
    j = jnp.arange(PB)
    p4 = jnp.where((j[None, :] == t[:, None] // 4 + 8) & (t[:, None] < 4 * W1p),
                   0.25, 0.0).astype(f32)                               # (To, PB)
    p4bd = jnp.kron(jnp.eye(bt, dtype=f32), p4)                         # (bt*To, bt*PB)
    p4e = jnp.concatenate([p4bd, jnp.zeros((bt * To, 16), f32)], 1).astype(bf16)

    jj = jnp.arange(PB)
    uu = jnp.arange(W2p)
    p8 = jnp.where((jj[:, None] // 8 == uu[None, :]) & (jj[:, None] < 8 * W2p),
                   0.125, 0.0).astype(f32)                              # (PB, W2p)
    p8bd = jnp.kron(jnp.eye(bt, dtype=f32), p8).astype(bf16)            # (bt*PB, bt*W2p)

    gap = jnp.kron(jnp.eye(bt, dtype=f32),
                   jnp.full((W2p, 1), 1.0 / W2p, f32)).astype(bf16)     # (bt*W2p, bt)

    # ---- im2col for the temporal conv, channel-stacked along K and
    #      batch-stacked along lanes: (C*64, Bp*To), bf16 ----------------------
    xp = jnp.pad(x[:, 0], ((0, 0), (0, 0), (32, 32)))                   # (Bp, C, T+64)
    idx = jnp.arange(64)[:, None] + jnp.arange(To)[None, :]             # (64, To)
    pw = jnp.transpose(xp[:, :, idx], (1, 2, 0, 3)).reshape(C * 64, Bp * To)
    pw = pw.astype(bf16)

    const = lambda i: (0, 0)
    out = pl.pallas_call(
        _eegnet_fused_kernel,
        out_shape=jax.ShapeDtypeStruct((Bp, NCLS_PAD), f32),
        grid=(Bp // bt,),
        in_specs=[
            pl.BlockSpec((C * 64, bt * To), lambda i: (0, i)),   # patches (bf16)
            pl.BlockSpec((8 * C, 64 * C), const),                # conv1 block-diag (BN folded)
            pl.BlockSpec((8 * C, 1), const),                     # BN1 bias
            pl.BlockSpec((16, 8 * C), const),                    # grouped conv2 (BN folded)
            pl.BlockSpec((16, 1), const),                        # BN2 bias
            pl.BlockSpec((bt * To, bt * PB + 16), const),        # pool4 + pad (+16 zero cols)
            pl.BlockSpec((16, 256), const),                      # conv3 stacked (BN folded)
            pl.BlockSpec((16, 1), const),                        # BN3 bias
            pl.BlockSpec((bt * PB, bt * W2p), const),            # pool8 (floor)
            pl.BlockSpec((16, 16), const),                       # conv4 1x1
            pl.BlockSpec((bt * W2p, bt), const),                 # global avg pool
            pl.BlockSpec((16, NCLS_PAD), const),                 # head W (padded)
            pl.BlockSpec((1, NCLS_PAD), const),                  # head b (padded)
        ],
        out_specs=pl.BlockSpec((bt, NCLS_PAD), lambda i: (i, 0)),
        scratch_shapes=[pltpu.VMEM((256, bt * PB), bf16)],       # conv3 operand
        compiler_params=pltpu.CompilerParams(
            dimension_semantics=("parallel",),
            # tiles are ~2.5 MiB total, well within the v7x 64 MiB physical VMEM
            vmem_limit_bytes=32 * 1024 * 1024),
    )(pw, w1bd, b1r, w2d, b2f, p4e, w3flat, b3f, p8bd, w4, gap, whp, bhp)
    return out[:B, :N_CLASS]


# ------------------------- parameters & pure-JAX reference --------------------

def init_params(key, C, n_cls=N_CLASS):
    ks = jax.random.split(key, 12)
    s = 0.1
    p = {
        "w1": s * jax.random.normal(ks[0], (8, 64), jnp.float32),        # Conv2d(1,8,(1,64))
        "w2": s * jax.random.normal(ks[1], (16, C), jnp.float32),        # Conv2d(8,16,(C,1),groups=8)
        "w3": s * jax.random.normal(ks[2], (16, 16, 16), jnp.float32),   # Conv2d(16,16,(1,16)) (o,i,k)
        "w4": s * jax.random.normal(ks[3], (16, 16), jnp.float32),       # Conv2d(16,16,1)
        "wh": s * jax.random.normal(ks[4], (16, n_cls), jnp.float32),    # Linear(16,n_cls) (in,out)
        "bh": s * jax.random.normal(ks[5], (n_cls,), jnp.float32),
    }
    for i, (name, n) in enumerate([("1", 8), ("2", 16), ("3", 16)]):
        k = jax.random.split(ks[6 + i], 4)
        p["g" + name] = 1.0 + s * jax.random.normal(k[0], (n,), jnp.float32)
        p["be" + name] = s * jax.random.normal(k[1], (n,), jnp.float32)
        p["m" + name] = s * jax.random.normal(k[2], (n,), jnp.float32)
        p["v" + name] = 0.8 + 0.4 * jax.random.uniform(k[3], (n,), jnp.float32)
    return p


def reference(params, x):
    hp = lax.Precision.HIGHEST
    B, _, C, T = x.shape

    def bn(y, g, b, m, v):
        return ((y - m[None, :, None, None])
                / jnp.sqrt(v + BN_EPS)[None, :, None, None]
                * g[None, :, None, None] + b[None, :, None, None])

    y = lax.conv_general_dilated(x, params["w1"].reshape(8, 1, 1, 64), (1, 1),
                                 [(0, 0), (32, 32)],
                                 dimension_numbers=("NCHW", "OIHW", "NCHW"),
                                 precision=hp)
    y = jax.nn.relu(bn(y, params["g1"], params["be1"], params["m1"], params["v1"]))

    y = lax.conv_general_dilated(y, params["w2"].reshape(16, 1, C, 1), (1, 1),
                                 [(0, 0), (0, 0)],
                                 dimension_numbers=("NCHW", "OIHW", "NCHW"),
                                 feature_group_count=8, precision=hp)
    y = jax.nn.relu(bn(y, params["g2"], params["be2"], params["m2"], params["v2"]))

    W = y.shape[-1]
    y = y[..., :(W // 4) * 4].reshape(B, 16, 1, W // 4, 4).mean(-1)      # AvgPool (1,4)

    y = lax.conv_general_dilated(y, params["w3"].reshape(16, 16, 1, 16), (1, 1),
                                 [(0, 0), (8, 8)],
                                 dimension_numbers=("NCHW", "OIHW", "NCHW"),
                                 precision=hp)
    y = jax.nn.relu(bn(y, params["g3"], params["be3"], params["m3"], params["v3"]))

    W = y.shape[-1]
    y = y[..., :(W // 8) * 8].reshape(B, 16, 1, W // 8, 8).mean(-1)      # AvgPool (1,8)

    y = lax.conv_general_dilated(y, params["w4"].reshape(16, 16, 1, 1), (1, 1),
                                 [(0, 0), (0, 0)],
                                 dimension_numbers=("NCHW", "OIHW", "NCHW"),
                                 precision=hp)
    y = jax.nn.relu(y)
    feat = y.mean(axis=(2, 3))
    return feat @ params["wh"] + params["bh"]


# ------------------------------------ main ------------------------------------

if __name__ == "__main__":
    key = jax.random.PRNGKey(0)
    # To = T + 1 = 128 (lane dense); grid = B / BT = 2 (>= 2 keeps both v7x TCs busy).
    B, C, T = 16, 4, 127
    kx, kp = jax.random.split(key)

    x = jax.random.normal(kx, (B, 1, C, T), jnp.float32)   # NCHW input
    params = init_params(kp, C)

    logits = jax.jit(eegnet_forward)(params, x)
    jax.block_until_ready(logits)

    ref = reference(params, x)
    assert logits.shape == (B, N_CLASS)
    assert bool(jnp.allclose(logits, ref, rtol=2e-2, atol=2e-2)), (logits, ref)

    print("KERNEL_OK")
</pallas_src>

<mosaic_0001>
module attributes {stable_mosaic.version = 11 : i64} {
  func.func @_eegnet_fused_kernel(%arg0: i32, %arg1: memref<256x1024xbf16, #tpu.memory_space<vmem>>, %arg2: memref<32x256xbf16, #tpu.memory_space<vmem>>, %arg3: memref<32x1xf32, #tpu.memory_space<vmem>>, %arg4: memref<16x32xbf16, #tpu.memory_space<vmem>>, %arg5: memref<16x1xf32, #tpu.memory_space<vmem>>, %arg6: memref<1024x400xbf16, #tpu.memory_space<vmem>>, %arg7: memref<16x256xbf16, #tpu.memory_space<vmem>>, %arg8: memref<16x1xf32, #tpu.memory_space<vmem>>, %arg9: memref<384x32xbf16, #tpu.memory_space<vmem>>, %arg10: memref<16x16xbf16, #tpu.memory_space<vmem>>, %arg11: memref<32x8xbf16, #tpu.memory_space<vmem>>, %arg12: memref<16x128xbf16, #tpu.memory_space<vmem>>, %arg13: memref<1x128xf32, #tpu.memory_space<vmem>>, %arg14: memref<8x128xf32, #tpu.memory_space<vmem>>, %arg15: memref<256x384xbf16, #tpu.memory_space<vmem>>) attributes {dimension_semantics = [#tpu.dimension_semantics<parallel>], iteration_bounds = array<i64: 2>, scalar_prefetch = 0 : i64, scratch_operands = 1 : i64, tpu.core_type = #tpu.core_type<tc>, window_params = [{transform_indices = @transform_0, window_bounds = array<i64: 256, 1024>}, {pipeline_mode = #tpu.pipeline_mode<synchronous>, transform_indices = @transform_1, window_bounds = array<i64: 32, 256>}, {pipeline_mode = #tpu.pipeline_mode<synchronous>, transform_indices = @transform_2, window_bounds = array<i64: 32, 1>}, {pipeline_mode = #tpu.pipeline_mode<synchronous>, transform_indices = @transform_3, window_bounds = array<i64: 16, 32>}, {pipeline_mode = #tpu.pipeline_mode<synchronous>, transform_indices = @transform_4, window_bounds = array<i64: 16, 1>}, {pipeline_mode = #tpu.pipeline_mode<synchronous>, transform_indices = @transform_5, window_bounds = array<i64: 1024, 400>}, {pipeline_mode = #tpu.pipeline_mode<synchronous>, transform_indices = @transform_6, window_bounds = array<i64: 16, 256>}, {pipeline_mode = #tpu.pipeline_mode<synchronous>, transform_indices = @transform_7, window_bounds = array<i64: 16, 1>}, {pipeline_mode = #tpu.pipeline_mode<synchronous>, transform_indices = @transform_8, window_bounds = array<i64: 384, 32>}, {pipeline_mode = #tpu.pipeline_mode<synchronous>, transform_indices = @transform_9, window_bounds = array<i64: 16, 16>}, {pipeline_mode = #tpu.pipeline_mode<synchronous>, transform_indices = @transform_10, window_bounds = array<i64: 32, 8>}, {pipeline_mode = #tpu.pipeline_mode<synchronous>, transform_indices = @transform_11, window_bounds = array<i64: 16, 128>}, {pipeline_mode = #tpu.pipeline_mode<synchronous>, transform_indices = @transform_12, window_bounds = array<i64: 1, 128>}, {transform_indices = @transform_13, window_bounds = array<i64: 8, 128>}]} {
    %c0 = arith.constant 0 : index
    %c0_0 = arith.constant 0 : index
    %0 = vector.load %arg2[%c0, %c0_0] : memref<32x256xbf16, #tpu.memory_space<vmem>>, vector<32x256xbf16>
    %c0_1 = arith.constant 0 : index
    %c0_2 = arith.constant 0 : index
    %1 = vector.load %arg1[%c0_1, %c0_2] : memref<256x1024xbf16, #tpu.memory_space<vmem>>, vector<256x1024xbf16>
    %cst = arith.constant dense<0.000000e+00> : vector<32x1024xf32>
    %2 = tpu.matmul %0, %1, %cst {dimension_numbers = #tpu.dot_dimension_numbers<[1], [0], [0], [1], [0, 0, 1, 1], [], []>} : vector<32x256xbf16>, vector<256x1024xbf16>, vector<32x1024xf32> -> vector<32x1024xf32>
    %c0_3 = arith.constant 0 : index
    %c0_4 = arith.constant 0 : index
    %3 = vector.load %arg3[%c0_3, %c0_4] : memref<32x1xf32, #tpu.memory_space<vmem>>, vector<32x1xf32>
    %4 = vector.broadcast %3 : vector<32x1xf32> to vector<32x1024xf32>
    %5 = arith.addf %2, %4 : vector<32x1024xf32>
    %cst_5 = arith.constant 0.000000e+00 : f32
    %6 = vector.broadcast %cst_5 : f32 to vector<32x1024xf32>
    %7 = arith.maximumf %5, %6 : vector<32x1024xf32>
    %c0_6 = arith.constant 0 : index
    %c0_7 = arith.constant 0 : index
    %8 = vector.load %arg4[%c0_6, %c0_7] : memref<16x32xbf16, #tpu.memory_space<vmem>>, vector<16x32xbf16>
    %9 = arith.truncf %7 : vector<32x1024xf32> to vector<32x1024xbf16>
    %cst_8 = arith.constant dense<0.000000e+00> : vector<16x1024xf32>
    %10 = tpu.matmul %8, %9, %cst_8 {dimension_numbers = #tpu.dot_dimension_numbers<[1], [0], [0], [1], [0, 0, 1, 1], [], []>} : vector<16x32xbf16>, vector<32x1024xbf16>, vector<16x1024xf32> -> vector<16x1024xf32>
    %c0_9 = arith.constant 0 : index
    %c0_10 = arith.constant 0 : index
    %11 = vector.load %arg5[%c0_9, %c0_10] : memref<16x1xf32, #tpu.memory_space<vmem>>, vector<16x1xf32>
    %12 = vector.broadcast %11 : vector<16x1xf32> to vector<16x1024xf32>
    %13 = arith.addf %10, %12 : vector<16x1024xf32>
    %cst_11 = arith.constant 0.000000e+00 : f32
    %14 = vector.broadcast %cst_11 : f32 to vector<16x1024xf32>
    %15 = arith.maximumf %13, %14 : vector<16x1024xf32>
    %16 = arith.truncf %15 : vector<16x1024xf32> to vector<16x1024xbf16>
    %c0_12 = arith.constant 0 : index
    %c0_13 = arith.constant 0 : index
    %17 = vector.load %arg6[%c0_12, %c0_13] : memref<1024x400xbf16, #tpu.memory_space<vmem>>, vector<1024x400xbf16>
    %cst_14 = arith.constant dense<0.000000e+00> : vector<16x400xf32>
    %18 = tpu.matmul %16, %17, %cst_14 {dimension_numbers = #tpu.dot_dimension_numbers<[1], [0], [0], [1], [0, 0, 1, 1], [], []>} : vector<16x1024xbf16>, vector<1024x400xbf16>, vector<16x400xf32> -> vector<16x400xf32>
    %19 = arith.truncf %18 : vector<16x400xf32> to vector<16x400xbf16>
    %20 = vector.extract_strided_slice %19 {offsets = [0, 0], sizes = [16, 384], strides = [1, 1]} : vector<16x400xbf16> to vector<16x384xbf16>
    %c0_15 = arith.constant 0 : index
    %c0_16 = arith.constant 0 : index
    %21 = vector.load %arg15[%c0_15, %c0_16] : memref<256x384xbf16, #tpu.memory_space<vmem>>, vector<16x384xbf16>
    tpu.vector_store %arg15[%c0_15, %c0_16], %20 {strides = array<i32>} : memref<256x384xbf16, #tpu.memory_space<vmem>>, vector<16x384xbf16>,
    %22 = vector.extract_strided_slice %19 {offsets = [0, 1], sizes = [16, 384], strides = [1, 1]} : vector<16x400xbf16> to vector<16x384xbf16>
    %c16 = arith.constant 16 : index
    %c0_17 = arith.constant 0 : index
    %23 = vector.load %arg15[%c16, %c0_17] : memref<256x384xbf16, #tpu.memory_space<vmem>>, vector<16x384xbf16>
    tpu.vector_store %arg15[%c16, %c0_17], %22 {strides = array<i32>} : memref<256x384xbf16, #tpu.memory_space<vmem>>, vector<16x384xbf16>,
    %24 = vector.extract_strided_slice %19 {offsets = [0, 2], sizes = [16, 384], strides = [1, 1]} : vector<16x400xbf16> to vector<16x384xbf16>
    %c32 = arith.constant 32 : index
    %c0_18 = arith.constant 0 : index
    %25 = vector.load %arg15[%c32, %c0_18] : memref<256x384xbf16, #tpu.memory_space<vmem>>, vector<16x384xbf16>
    tpu.vector_store %arg15[%c32, %c0_18], %24 {strides = array<i32>} : memref<256x384xbf16, #tpu.memory_space<vmem>>, vector<16x384xbf16>,
    %26 = vector.extract_strided_slice %19 {offsets = [0, 3], sizes = [16, 384], strides = [1, 1]} : vector<16x400xbf16> to vector<16x384xbf16>
    %c48 = arith.constant 48 : index
    %c0_19 = arith.constant 0 : index
    %27 = vector.load %arg15[%c48, %c0_19] : memref<256x384xbf16, #tpu.memory_space<vmem>>, vector<16x384xbf16>
    tpu.vector_store %arg15[%c48, %c0_19], %26 {strides = array<i32>} : memref<256x384xbf16, #tpu.memory_space<vmem>>, vector<16x384xbf16>,
    %28 = vector.extract_strided_slice %19 {offsets = [0, 4], sizes = [16, 384], strides = [1, 1]} : vector<16x400xbf16> to vector<16x384xbf16>
    %c64 = arith.constant 64 : index
    %c0_20 = arith.constant 0 : index
    %29 = vector.load %arg15[%c64, %c0_20] : memref<256x384xbf16, #tpu.memory_space<vmem>>, vector<16x384xbf16>
    tpu.vector_store %arg15[%c64, %c0_20], %28 {strides = array<i32>} : memref<256x384xbf16, #tpu.memory_space<vmem>>, vector<16x384xbf16>,
    %30 = vector.extract_strided_slice %19 {offsets = [0, 5], sizes = [16, 384], strides = [1, 1]} : vector<16x400xbf16> to vector<16x384xbf16>
    %c80 = arith.constant 80 : index
    %c0_21 = arith.constant 0 : index
    %31 = vector.load %arg15[%c80, %c0_21] : memref<256x384xbf16, #tpu.memory_space<vmem>>, vector<16x384xbf16>
    tpu.vector_store %arg15[%c80, %c0_21], %30 {strides = array<i32>} : memref<256x384xbf16, #tpu.memory_space<vmem>>, vector<16x384xbf16>,
    %32 = vector.extract_strided_slice %19 {offsets = [0, 6], sizes = [16, 384], strides = [1, 1]} : vector<16x400xbf16> to vector<16x384xbf16>
    %c96 = arith.constant 96 : index
    %c0_22 = arith.constant 0 : index
    %33 = vector.load %arg15[%c96, %c0_22] : memref<256x384xbf16, #tpu.memory_space<vmem>>, vector<16x384xbf16>
    tpu.vector_store %arg15[%c96, %c0_22], %32 {strides = array<i32>} : memref<256x384xbf16, #tpu.memory_space<vmem>>, vector<16x384xbf16>,
    %34 = vector.extract_strided_slice %19 {offsets = [0, 7], sizes = [16, 384], strides = [1, 1]} : vector<16x400xbf16> to vector<16x384xbf16>
    %c112 = arith.constant 112 : index
    %c0_23 = arith.constant 0 : index
    %35 = vector.load %arg15[%c112, %c0_23] : memref<256x384xbf16, #tpu.memory_space<vmem>>, vector<16x384xbf16>
    tpu.vector_store %arg15[%c112, %c0_23], %34 {strides = array<i32>} : memref<256x384xbf16, #tpu.memory_space<vmem>>, vector<16x384xbf16>,
    %36 = vector.extract_strided_slice %19 {offsets = [0, 8], sizes = [16, 384], strides = [1, 1]} : vector<16x400xbf16> to vector<16x384xbf16>
    %c128 = arith.constant 128 : index
    %c0_24 = arith.constant 0 : index
    %37 = vector.load %arg15[%c128, %c0_24] : memref<256x384xbf16, #tpu.memory_space<vmem>>, vector<16x384xbf16>
    tpu.vector_store %arg15[%c128, %c0_24], %36 {strides = array<i32>} : memref<256x384xbf16, #tpu.memory_space<vmem>>, vector<16x384xbf16>,
    %38 = vector.extract_strided_slice %19 {offsets = [0, 9], sizes = [16, 384], strides = [1, 1]} : vector<16x400xbf16> to vector<16x384xbf16>
    %c144 = arith.constant 144 : index
    %c0_25 = arith.constant 0 : index
    %39 = vector.load %arg15[%c144, %c0_25] : memref<256x384xbf16, #tpu.memory_space<vmem>>, vector<16x384xbf16>
    tpu.vector_store %arg15[%c144, %c0_25], %38 {strides = array<i32>} : memref<256x384xbf16, #tpu.memory_space<vmem>>, vector<16x384xbf16>,
    %40 = vector.extract_strided_slice %19 {offsets = [0, 10], sizes = [16, 384], strides = [1, 1]} : vector<16x400xbf16> to vector<16x384xbf16>
    %c160 = arith.constant 160 : index
    %c0_26 = arith.constant 0 : index
    %41 = vector.load %arg15[%c160, %c0_26] : memref<256x384xbf16, #tpu.memory_space<vmem>>, vector<16x384xbf16>
    tpu.vector_store %arg15[%c160, %c0_26], %40 {strides = array<i32>} : memref<256x384xbf16, #tpu.memory_space<vmem>>, vector<16x384xbf16>,
    %42 = vector.extract_strided_slice %19 {offsets = [0, 11], sizes = [16, 384], strides = [1, 1]} : vector<16x400xbf16> to vector<16x384xbf16>
    %c176 = arith.constant 176 : index
    %c0_27 = arith.constant 0 : index
    %43 = vector.load %arg15[%c176, %c0_27] : memref<256x384xbf16, #tpu.memory_space<vmem>>, vector<16x384xbf16>
    tpu.vector_store %arg15[%c176, %c0_27], %42 {strides = array<i32>} : memref<256x384xbf16, #tpu.memory_space<vmem>>, vector<16x384xbf16>,
    %44 = vector.extract_strided_slice %19 {offsets = [0, 12], sizes = [16, 384], strides = [1, 1]} : vector<16x400xbf16> to vector<16x384xbf16>
    %c192 = arith.constant 192 : index
    %c0_28 = arith.constant 0 : index
    %45 = vector.load %arg15[%c192, %c0_28] : memref<256x384xbf16, #tpu.memory_space<vmem>>, vector<16x384xbf16>
    tpu.vector_store %arg15[%c192, %c0_28], %44 {strides = array<i32>} : memref<256x384xbf16, #tpu.memory_space<vmem>>, vector<16x384xbf16>,
    %46 = vector.extract_strided_slice %19 {offsets = [0, 13], sizes = [16, 384], strides = [1, 1]} : vector<16x400xbf16> to vector<16x384xbf16>
    %c208 = arith.constant 208 : index
    %c0_29 = arith.constant 0 : index
    %47 = vector.load %arg15[%c208, %c0_29] : memref<256x384xbf16, #tpu.memory_space<vmem>>, vector<16x384xbf16>
    tpu.vector_store %arg15[%c208, %c0_29], %46 {strides = array<i32>} : memref<256x384xbf16, #tpu.memory_space<vmem>>, vector<16x384xbf16>,
    %48 = vector.extract_strided_slice %19 {offsets = [0, 14], sizes = [16, 384], strides = [1, 1]} : vector<16x400xbf16> to vector<16x384xbf16>
    %c224 = arith.constant 224 : index
    %c0_30 = arith.constant 0 : index
    %49 = vector.load %arg15[%c224, %c0_30] : memref<256x384xbf16, #tpu.memory_space<vmem>>, vector<16x384xbf16>
    tpu.vector_store %arg15[%c224, %c0_30], %48 {strides = array<i32>} : memref<256x384xbf16, #tpu.memory_space<vmem>>, vector<16x384xbf16>,
    %50 = vector.extract_strided_slice %19 {offsets = [0, 15], sizes = [16, 384], strides = [1, 1]} : vector<16x400xbf16> to vector<16x384xbf16>
    %c240 = arith.constant 240 : index
    %c0_31 = arith.constant 0 : index
    %51 = vector.load %arg15[%c240, %c0_31] : memref<256x384xbf16, #tpu.memory_space<vmem>>, vector<16x384xbf16>
    tpu.vector_store %arg15[%c240, %c0_31], %50 {strides = array<i32>} : memref<256x384xbf16, #tpu.memory_space<vmem>>, vector<16x384xbf16>,
    %c0_32 = arith.constant 0 : index
    %c0_33 = arith.constant 0 : index
    %52 = vector.load %arg7[%c0_32, %c0_33] : memref<16x256xbf16, #tpu.memory_space<vmem>>, vector<16x256xbf16>
    %c0_34 = arith.constant 0 : index
    %c0_35 = arith.constant 0 : index
    %53 = vector.load %arg15[%c0_34, %c0_35] : memref<256x384xbf16, #tpu.memory_space<vmem>>, vector<256x384xbf16>
    %cst_36 = arith.constant dense<0.000000e+00> : vector<16x384xf32>
    %54 = tpu.matmul %52, %53, %cst_36 {dimension_numbers = #tpu.dot_dimension_numbers<[1], [0], [0], [1], [0, 0, 1, 1], [], []>} : vector<16x256xbf16>, vector<256x384xbf16>, vector<16x384xf32> -> vector<16x384xf32>
    %c0_37 = arith.constant 0 : index
    %c0_38 = arith.constant 0 : index
    %55 = vector.load %arg8[%c0_37, %c0_38] : memref<16x1xf32, #tpu.memory_space<vmem>>, vector<16x1xf32>
    %56 = vector.broadcast %55 : vector<16x1xf32> to vector<16x384xf32>
    %57 = arith.addf %54, %56 : vector<16x384xf32>
    %cst_39 = arith.constant 0.000000e+00 : f32
    %58 = vector.broadcast %cst_39 : f32 to vector<16x384xf32>
    %59 = arith.maximumf %57, %58 : vector<16x384xf32>
    %60 = arith.truncf %59 : vector<16x384xf32> to vector<16x384xbf16>
    %c0_40 = arith.constant 0 : index
    %c0_41 = arith.constant 0 : index
    %61 = vector.load %arg9[%c0_40, %c0_41] : memref<384x32xbf16, #tpu.memory_space<vmem>>, vector<384x32xbf16>
    %cst_42 = arith.constant dense<0.000000e+00> : vector<16x32xf32>
    %62 = tpu.matmul %60, %61, %cst_42 {dimension_numbers = #tpu.dot_dimension_numbers<[1], [0], [0], [1], [0, 0, 1, 1], [], []>} : vector<16x384xbf16>, vector<384x32xbf16>, vector<16x32xf32> -> vector<16x32xf32>
    %c0_43 = arith.constant 0 : index
    %c0_44 = arith.constant 0 : index
    %63 = vector.load %arg10[%c0_43, %c0_44] : memref<16x16xbf16, #tpu.memory_space<vmem>>, vector<16x16xbf16>
    %64 = arith.truncf %62 : vector<16x32xf32> to vector<16x32xbf16>
    %cst_45 = arith.constant dense<0.000000e+00> : vector<16x32xf32>
    %65 = tpu.matmul %63, %64, %cst_45 {dimension_numbers = #tpu.dot_dimension_numbers<[1], [0], [0], [1], [0, 0, 1, 1], [], []>} : vector<16x16xbf16>, vector<16x32xbf16>, vector<16x32xf32> -> vector<16x32xf32>
    %cst_46 = arith.constant 0.000000e+00 : f32
    %66 = vector.broadcast %cst_46 : f32 to vector<16x32xf32>
    %67 = arith.maximumf %65, %66 : vector<16x32xf32>
    %68 = arith.truncf %67 : vector<16x32xf32> to vector<16x32xbf16>
    %c0_47 = arith.constant 0 : index
    %c0_48 = arith.constant 0 : index
    %69 = vector.load %arg11[%c0_47, %c0_48] : memref<32x8xbf16, #tpu.memory_space<vmem>>, vector<32x8xbf16>
    %cst_49 = arith.constant dense<0.000000e+00> : vector<16x8xf32>
    %70 = tpu.matmul %68, %69, %cst_49 {dimension_numbers = #tpu.dot_dimension_numbers<[1], [0], [0], [1], [0, 0, 1, 1], [], []>} : vector<16x32xbf16>, vector<32x8xbf16>, vector<16x8xf32> -> vector<16x8xf32>
    %71 = arith.truncf %70 : vector<16x8xf32> to vector<16x8xbf16>
    %c0_50 = arith.constant 0 : index
    %c0_51 = arith.constant 0 : index
    %72 = vector.load %arg12[%c0_50, %c0_51] : memref<16x128xbf16, #tpu.memory_space<vmem>>, vector<16x128xbf16>
    %cst_52 = arith.constant dense<0.000000e+00> : vector<8x128xf32>
    %73 = tpu.matmul %71, %72, %cst_52 {dimension_numbers = #tpu.dot_dimension_numbers<[0], [0], [1], [1], [0, 1, 1, 1], [], []>} : vector<16x8xbf16>, vector<16x128xbf16>, vector<8x128xf32> -> vector<8x128xf32>
    %c0_53 = arith.constant 0 : index
    %c0_54 = arith.constant 0 : index
    %74 = vector.load %arg13[%c0_53, %c0_54] : memref<1x128xf32, #tpu.memory_space<vmem>>, vector<1x128xf32>
    %75 = vector.broadcast %74 : vector<1x128xf32> to vector<8x128xf32>
    %76 = arith.addf %73, %75 : vector<8x128xf32>
    %c0_55 = arith.constant 0 : index
    %c0_56 = arith.constant 0 : index
    %77 = vector.load %arg14[%c0_55, %c0_56] : memref<8x128xf32, #tpu.memory_space<vmem>>, vector<8x128xf32>
    tpu.vector_store %arg14[%c0_55, %c0_56], %76 {strides = array<i32>} : memref<8x128xf32, #tpu.memory_space<vmem>>, vector<8x128xf32>,
    return
  }
  func.func @transform_0(%arg0: i32) -> (i32, i32) {
    %c0_i32 = arith.constant 0 : i32
    %c0_i32_0 = arith.constant 0 : i32
    return %c0_i32, %arg0 : i32, i32
  }
  func.func @transform_1(%arg0: i32) -> (i32, i32) {
    %c0_i32 = arith.constant 0 : i32
    %c0_i32_0 = arith.constant 0 : i32
    %c0_i32_1 = arith.constant 0 : i32
    return %c0_i32, %c0_i32_0 : i32, i32
  }
  func.func @transform_2(%arg0: i32) -> (i32, i32) {
    %c0_i32 = arith.constant 0 : i32
    %c0_i32_0 = arith.constant 0 : i32
    %c0_i32_1 = arith.constant 0 : i32
    return %c0_i32, %c0_i32_0 : i32, i32
  }
  func.func @transform_3(%arg0: i32) -> (i32, i32) {
    %c0_i32 = arith.constant 0 : i32
    %c0_i32_0 = arith.constant 0 : i32
    %c0_i32_1 = arith.constant 0 : i32
    return %c0_i32, %c0_i32_0 : i32, i32
  }
  func.func @transform_4(%arg0: i32) -> (i32, i32) {
    %c0_i32 = arith.constant 0 : i32
    %c0_i32_0 = arith.constant 0 : i32
    %c0_i32_1 = arith.constant 0 : i32
    return %c0_i32, %c0_i32_0 : i32, i32
  }
  func.func @transform_5(%arg0: i32) -> (i32, i32) {
    %c0_i32 = arith.constant 0 : i32
    %c0_i32_0 = arith.constant 0 : i32
    %c0_i32_1 = arith.constant 0 : i32
    return %c0_i32, %c0_i32_0 : i32, i32
  }
  func.func @transform_6(%arg0: i32) -> (i32, i32) {
    %c0_i32 = arith.constant 0 : i32
    %c0_i32_0 = arith.constant 0 : i32
    %c0_i32_1 = arith.constant 0 : i32
    return %c0_i32, %c0_i32_0 : i32, i32
  }
  func.func @transform_7(%arg0: i32) -> (i32, i32) {
    %c0_i32 = arith.constant 0 : i32
    %c0_i32_0 = arith.constant 0 : i32
    %c0_i32_1 = arith.constant 0 : i32
    return %c0_i32, %c0_i32_0 : i32, i32
  }
  func.func @transform_8(%arg0: i32) -> (i32, i32) {
    %c0_i32 = arith.constant 0 : i32
    %c0_i32_0 = arith.constant 0 : i32
    %c0_i32_1 = arith.constant 0 : i32
    return %c0_i32, %c0_i32_0 : i32, i32
  }
  func.func @transform_9(%arg0: i32) -> (i32, i32) {
    %c0_i32 = arith.constant 0 : i32
    %c0_i32_0 = arith.constant 0 : i32
    %c0_i32_1 = arith.constant 0 : i32
    return %c0_i32, %c0_i32_0 : i32, i32
  }
  func.func @transform_10(%arg0: i32) -> (i32, i32) {
    %c0_i32 = arith.constant 0 : i32
    %c0_i32_0 = arith.constant 0 : i32
    %c0_i32_1 = arith.constant 0 : i32
    return %c0_i32, %c0_i32_0 : i32, i32
  }
  func.func @transform_11(%arg0: i32) -> (i32, i32) {
    %c0_i32 = arith.constant 0 : i32
    %c0_i32_0 = arith.constant 0 : i32
    %c0_i32_1 = arith.constant 0 : i32
    return %c0_i32, %c0_i32_0 : i32, i32
  }
  func.func @transform_12(%arg0: i32) -> (i32, i32) {
    %c0_i32 = arith.constant 0 : i32
    %c0_i32_0 = arith.constant 0 : i32
    %c0_i32_1 = arith.constant 0 : i32
    return %c0_i32, %c0_i32_0 : i32, i32
  }
  func.func @transform_13(%arg0: i32) -> (i32, i32) {
    %c0_i32 = arith.constant 0 : i32
    %c0_i32_0 = arith.constant 0 : i32
    return %arg0, %c0_i32 : i32, i32
  }
}

</mosaic_0001>

<llo_original>
// kernel: tile.8
$region0: #{tile.8}
  #allocation0 [shape = 's32[1]{0}', space=sflag, size = 0x4, scoped, tag = 'scoped memory for tile.8']
  %s0 = inlined_call_operand.vmem [shape: f32[8], index: 0, kind: input, shape index: {}]
  %s1 = inlined_call_operand.vmem [shape: f32[4,8], index: 1, kind: output, shape index: {}]
  // Predicated region
  $region2: #{tile.8} parent=0 // pred_check
    _
  $region3: #{tile.8} parent=0 // pred_check_branch
    %3 = sbr.rel (0) target = $region5
  $region4: #{tile.8} parent=0 // pred_region
    _
  $region5: #{tile.8} parent=0 // pred_fallthru
    _
  %v4 = vld [vmem:[%s0] ss:$0 sm:$0xff]
  %5 = vst [vmem:[%s1] sm:$0xf] %v4

// kernel: tile.0
$region0: #{tile.0}
  %s0 = inlined_call_operand.vmem [shape: f32[4,8], index: 0, kind: input, shape index: {}]
  %s1 = inlined_call_operand.vmem [shape: f32[32,1], index: 1, kind: output, shape index: {}]
  $region1: #{tile.0} parent=0
    #allocation0 [shape = 'u8[4096]{0}', space=vmem, size = 0x1000, scoped, tag = 'scoped mem for input reshape']
    %s3 = ssub.s32 16, 1
    %v4 = vld [vmem:[%s0] sm:%s3]
    %5 = vst [vmem:[#allocation0] sm:%s3] %v4
    %v6 = vld [vmem:[#allocation0] sm:$0xf]
    %vm7 = vcmask 7168
    %8 = vst.msk [vmem:[%s1] ss:$8 sm:$0xf] %vm7, %v6
    %v9 = vld [vmem:[#allocation0] sm:$0xf]
    %10 = vrot.lane.b32.xlu0 %v9, 127
    %v11 = vpop.permute.xlu0 %10
    %vm12 = vcmask 7168
    %s13 = scalar_lea.vmem %s1, 1
    %14 = vst.msk [vmem:[%s13] ss:$8 sm:$0xf] %vm12, %v11
    %v15 = vld [vmem:[#allocation0] sm:$0xf]
    %16 = vrot.lane.b32.xlu0 %v15, 126
    %v17 = vpop.permute.xlu0 %16
    %vm18 = vcmask 7168
    %s19 = scalar_lea.vmem %s1, 2
    %20 = vst.msk [vmem:[%s19] ss:$8 sm:$0xf] %vm18, %v17
    %v21 = vld [vmem:[#allocation0] sm:$0xf]
    %22 = vrot.lane.b32.xlu0 %v21, 125
    %v23 = vpop.permute.xlu0 %22
    %vm24 = vcmask 7168
    %s25 = scalar_lea.vmem %s1, 3
    %26 = vst.msk [vmem:[%s25] ss:$8 sm:$0xf] %vm24, %v23
    %v27 = vld [vmem:[#allocation0] sm:$0xf]
    %28 = vrot.lane.b32.xlu0 %v27, 124
    %v29 = vpop.permute.xlu0 %28
    %vm30 = vcmask 7168
    %s31 = scalar_lea.vmem %s1, 4
    %32 = vst.msk [vmem:[%s31] ss:$8 sm:$0xf] %vm30, %v29
    %v33 = vld [vmem:[#allocation0] sm:$0xf]
    %34 = vrot.lane.b32.xlu0 %v33, 123
    %v35 = vpop.permute.xlu0 %34
    %vm36 = vcmask 7168
    %s37 = scalar_lea.vmem %s1, 5
    %38 = vst.msk [vmem:[%s37] ss:$8 sm:$0xf] %vm36, %v35
    %v39 = vld [vmem:[#allocation0] sm:$0xf]
    %40 = vrot.lane.b32.xlu0 %v39, 122
    %v41 = vpop.permute.xlu0 %40
    %vm42 = vcmask 7168
    %s43 = scalar_lea.vmem %s1, 6
    %44 = vst.msk [vmem:[%s43] ss:$8 sm:$0xf] %vm42, %v41
    %v45 = vld [vmem:[#allocation0] sm:$0xf]
    %46 = vrot.lane.b32.xlu0 %v45, 121
    %v47 = vpop.permute.xlu0 %46
    %vm48 = vcmask 7168
    %s49 = scalar_lea.vmem %s1, 7
    %50 = vst.msk [vmem:[%s49] ss:$8 sm:$0xf] %vm48, %v47

// kernel: eegnet_forward.1
$region0: #{eegnet_forward.1}
  #allocation0 [shape = 'u32[]', space=smem, size = 0x4, offset = 0x4, fixed_abs, tag = 'smem constant byte address 0x4 - core index']
  #allocation1 [shape = 'u32[72,128]{1,0:T(1,128)}', space=vmem, size = 0x9000, scoped, tag = 'internal scratch']
  #allocation2 [shape = 'bf16[256,384]{1,0:T(8,128)(2,1)}', space=vmem, size = 0x30000, scoped, tag = 'scratch operand']
  %s0 = inlined_call_operand.vmem [shape: bf16[256,2048], index: 0, kind: input, shape index: {}]
  %s1 = inlined_call_operand.vmem [shape: bf16[32,256], index: 1, kind: input, shape index: {}]
  %s2 = inlined_call_operand.vmem [shape: f32[32,1], index: 2, kind: input, shape index: {}]
  %s3 = inlined_call_operand.vmem [shape: bf16[16,32], index: 3, kind: input, shape index: {}]
  %s4 = inlined_call_operand.vmem [shape: f32[16,1], index: 4, kind: input, shape index: {}]
  %s5 = inlined_call_operand.vmem [shape: bf16[1024,400], index: 5, kind: input, shape index: {}]
  %s6 = inlined_call_operand.vmem [shape: bf16[16,256], index: 6, kind: input, shape index: {}]
  %s7 = inlined_call_operand.vmem [shape: f32[16,1], index: 7, kind: input, shape index: {}]
  %s8 = inlined_call_operand.vmem [shape: bf16[384,32], index: 8, kind: input, shape index: {}]
  %s9 = inlined_call_operand.vmem [shape: bf16[16,16], index: 9, kind: input, shape index: {}]
  %s10 = inlined_call_operand.vmem [shape: bf16[32,8], index: 10, kind: input, shape index: {}]
  %s11 = inlined_call_operand.vmem [shape: bf16[16,128], index: 11, kind: input, shape index: {}]
  %s12 = inlined_call_operand.vmem [shape: f32[1,128], index: 12, kind: input, shape index: {}]
  %s13 = inlined_call_operand.vmem [shape: f32[16,128], index: 13, kind: output, shape index: {}]
  %s14 = sld [smem:[#allocation0]]
  $region108: #{eegnet_forward.1} parent=0
    _
  %s16 = ssub.s32 1, %s14
  %s17 = scalar_select 0, %s16, %s14
  $region1: #{eegnet_forward.1} parent=0
    #allocation3 [shape = 'u8[1048576]{0}', space=vmem, size = 0x100000, scoped, tag = 'input window, operand 0']
    loop: start=0, step=1, limit=4
    $region2: #{eegnet_forward.1} parent=1 // loop_pre_header
      _
    $region3: #{eegnet_forward.1} parent=1 // loop_header
      %s19 = sphi 0, %s23
      %p20 = scmp.ge.s32.totalorder %s19, 4
      %s29 = sphi 0, %s31
      %s32 = sphi 0, %s29
      %s33 = sphi 0, %s32
      %s49 = sphi 0, %s33
      %s53 = sphi 0, %s53
      %s55 = sphi 0, %s53
      %s56 = sphi 0, %s55
      %s70 = sphi 0, %s56
      %s74 = sphi 0, %s74
      %s76 = sphi 0, %s74
      %s77 = sphi 0, %s76
      %s91 = sphi 0, %s77
      %s95 = sphi 0, %s95
      %s97 = sphi 0, %s95
      %s98 = sphi 0, %s97
      %s112 = sphi 0, %s98
      %s116 = sphi 0, %s116
      %s118 = sphi 0, %s116
      %s119 = sphi 0, %s118
      %s133 = sphi 0, %s119
      %s137 = sphi 0, %s137
      %s139 = sphi 0, %s137
      %s140 = sphi 0, %s139
      %s154 = sphi 0, %s140
      %s158 = sphi 0, %s158
      %s160 = sphi 0, %s158
      %s161 = sphi 0, %s160
      %s175 = sphi 0, %s161
      %s179 = sphi 0, %s179
      %s181 = sphi 0, %s179
      %s182 = sphi 0, %s181
      %s196 = sphi 0, %s182
      %s200 = sphi 0, %s200
      %s202 = sphi 0, %s200
      %s203 = sphi 0, %s202
      %s217 = sphi 0, %s203
      %s221 = sphi 0, %s221
      %s223 = sphi 0, %s221
      %s224 = sphi 0, %s223
      %s238 = sphi 0, %s224
      %s242 = sphi 0, %s242
      %s244 = sphi 0, %s242
      %s245 = sphi 0, %s244
      %s259 = sphi 0, %s245
      %s263 = sphi 0, %s263
      %s265 = sphi 0, %s263
      %s266 = sphi 0, %s265
      %s280 = sphi 0, %s266
      %s284 = sphi 0, %s284
      %s286 = sphi 0, %s284
      %s287 = sphi 0, %s286
      %s301 = sphi 0, %s287
      %s307 = sphi 0, %s309
      %s310 = sphi 0, %s307
      %s311 = sphi 0, %s310
      %s327 = sphi 0, %s311
    $region4: #{eegnet_forward.1} parent=1 // loop_header_branch
      %22 = sbr.rel (%p20) target = $region8
    $region5: #{eegnet_forward.1} parent=1 // loop_body
      %s24 = ssub.s32 %s19, 1
      %s25 = ssub.s32 %s19, 2
      %s26 = sadd.s32 %s19, 1
      %s27 = ssub.s32 %s19, %s26
      %p28 = scmp.eq.s32.totalorder %s27, 0
      %s30 = sadd.s32 %s29, 1
      %s31 = scalar_select %p28, %s29, %s30
      %p34 = pneg %p28
      %p35 = scmp.eq.s32.totalorder %s19, 1
      %p36 = por %p34, %p35
      %p37 = scmp.ne.s32.totalorder %s29, %s32
      %p38 = scmp.eq.s32.totalorder %s19, 0
      %p39 = por %p37, %p38
      %p40 = scmp.ne.s32.totalorder %s29, %s32
      %p41 = scmp.eq.s32.totalorder %s24, 1
      %p42 = por %p40, %p41
      %p43 = scmp.ne.s32.totalorder %s32, %s33
      %p44 = scmp.eq.s32.totalorder %s24, 0
      %p45 = por %p43, %p44
      %p46 = scmp.ne.s32.totalorder %s32, %s33
      %p47 = scmp.eq.s32.totalorder %s25, 1
      %p48 = por %p46, %p47
      %p50 = scmp.ne.s32.totalorder %s33, %s49
      %p51 = scmp.eq.s32.totalorder %s25, 0
      %p52 = por %p50, %p51
      %s54 = sadd.s32 %s53, 1
      %p57 = scmp.eq.s32.totalorder %s19, 1
      %p58 = scmp.ne.s32.totalorder %s53, %s55
      %p59 = scmp.eq.s32.totalorder %s19, 0
      %p60 = por %p58, %p59
      %p61 = scmp.ne.s32.totalorder %s53, %s55
      %p62 = scmp.eq.s32.totalorder %s24, 1
      %p63 = por %p61, %p62
      %p64 = scmp.ne.s32.totalorder %s55, %s56
      %p65 = scmp.eq.s32.totalorder %s24, 0
      %p66 = por %p64, %p65
      %p67 = scmp.ne.s32.totalorder %s55, %s56
      %p68 = scmp.eq.s32.totalorder %s25, 1
      %p69 = por %p67, %p68
      %p71 = scmp.ne.s32.totalorder %s56, %s70
      %p72 = scmp.eq.s32.totalorder %s25, 0
      %p73 = por %p71, %p72
      %s75 = sadd.s32 %s74, 1
      %p78 = scmp.eq.s32.totalorder %s19, 1
      %p79 = scmp.ne.s32.totalorder %s74, %s76
      %p80 = scmp.eq.s32.totalorder %s19, 0
      %p81 = por %p79, %p80
      %p82 = scmp.ne.s32.totalorder %s74, %s76
      %p83 = scmp.eq.s32.totalorder %s24, 1
      %p84 = por %p82, %p83
      %p85 = scmp.ne.s32.totalorder %s76, %s77
      %p86 = scmp.eq.s32.totalorder %s24, 0
      %p87 = por %p85, %p86
      %p88 = scmp.ne.s32.totalorder %s76, %s77
      %p89 = scmp.eq.s32.totalorder %s25, 1
      %p90 = por %p88, %p89
      %p92 = scmp.ne.s32.totalorder %s77, %s91
      %p93 = scmp.eq.s32.totalorder %s25, 0
      %p94 = por %p92, %p93
      %s96 = sadd.s32 %s95, 1
      %p99 = scmp.eq.s32.totalorder %s19, 1
      %p100 = scmp.ne.s32.totalorder %s95, %s97
      %p101 = scmp.eq.s32.totalorder %s19, 0
      %p102 = por %p100, %p101
      %p103 = scmp.ne.s32.totalorder %s95, %s97
      %p104 = scmp.eq.s32.totalorder %s24, 1
      %p105 = por %p103, %p104
      %p106 = scmp.ne.s32.totalorder %s97, %s98
      %p107 = scmp.eq.s32.totalorder %s24, 0
      %p108 = por %p106, %p107
      %p109 = scmp.ne.s32.totalorder %s97, %s98
      %p110 = scmp.eq.s32.totalorder %s25, 1
      %p111 = por %p109, %p110
      %p113 = scmp.ne.s32.totalorder %s98, %s112
      %p114 = scmp.eq.s32.totalorder %s25, 0
      %p115 = por %p113, %p114
      %s117 = sadd.s32 %s116, 1
      %p120 = scmp.eq.s32.totalorder %s19, 1
      %p121 = scmp.ne.s32.totalorder %s116, %s118
      %p122 = scmp.eq.s32.totalorder %s19, 0
      %p123 = por %p121, %p122
      %p124 = scmp.ne.s32.totalorder %s116, %s118
      %p125 = scmp.eq.s32.totalorder %s24, 1
      %p126 = por %p124, %p125
      %p127 = scmp.ne.s32.totalorder %s118, %s119
      %p128 = scmp.eq.s32.totalorder %s24, 0
      %p129 = por %p127, %p128
      %p130 = scmp.ne.s32.totalorder %s118, %s119
      %p131 = scmp.eq.s32.totalorder %s25, 1
      %p132 = por %p130, %p131
      %p134 = scmp.ne.s32.totalorder %s119, %s133
      %p135 = scmp.eq.s32.totalorder %s25, 0
      %p136 = por %p134, %p135
      %s138 = sadd.s32 %s137, 1
      %p141 = scmp.eq.s32.totalorder %s19, 1
      %p142 = scmp.ne.s32.totalorder %s137, %s139
      %p143 = scmp.eq.s32.totalorder %s19, 0
      %p144 = por %p142, %p143
      %p145 = scmp.ne.s32.totalorder %s137, %s139
      %p146 = scmp.eq.s32.totalorder %s24, 1
      %p147 = por %p145, %p146
      %p148 = scmp.ne.s32.totalorder %s139, %s140
      %p149 = scmp.eq.s32.totalorder %s24, 0
      %p150 = por %p148, %p149
      %p151 = scmp.ne.s32.totalorder %s139, %s140
      %p152 = scmp.eq.s32.totalorder %s25, 1
      %p153 = por %p151, %p152
      %p155 = scmp.ne.s32.totalorder %s140, %s154
      %p156 = scmp.eq.s32.totalorder %s25, 0
      %p157 = por %p155, %p156
      %s159 = sadd.s32 %s158, 1
      %p162 = scmp.eq.s32.totalorder %s19, 1
      %p163 = scmp.ne.s32.totalorder %s158, %s160
      %p164 = scmp.eq.s32.totalorder %s19, 0
      %p165 = por %p163, %p164
      %p166 = scmp.ne.s32.totalorder %s158, %s160
      %p167 = scmp.eq.s32.totalorder %s24, 1
      %p168 = por %p166, %p167
      %p169 = scmp.ne.s32.totalorder %s160, %s161
      %p170 = scmp.eq.s32.totalorder %s24, 0
      %p171 = por %p169, %p170
      %p172 = scmp.ne.s32.totalorder %s160, %s161
      %p173 = scmp.eq.s32.totalorder %s25, 1
      %p174 = por %p172, %p173
      %p176 = scmp.ne.s32.totalorder %s161, %s175
      %p177 = scmp.eq.s32.totalorder %s25, 0
      %p178 = por %p176, %p177
      %s180 = sadd.s32 %s179, 1
      %p183 = scmp.eq.s32.totalorder %s19, 1
      %p184 = scmp.ne.s32.totalorder %s179, %s181
      %p185 = scmp.eq.s32.totalorder %s19, 0
      %p186 = por %p184, %p185
      %p187 = scmp.ne.s32.totalorder %s179, %s181
      %p188 = scmp.eq.s32.totalorder %s24, 1
      %p189 = por %p187, %p188
      %p190 = scmp.ne.s32.totalorder %s181, %s182
      %p191 = scmp.eq.s32.totalorder %s24, 0
      %p192 = por %p190, %p191
      %p193 = scmp.ne.s32.totalorder %s181, %s182
      %p194 = scmp.eq.s32.totalorder %s25, 1
      %p195 = por %p193, %p194
      %p197 = scmp.ne.s32.totalorder %s182, %s196
      %p198 = scmp.eq.s32.totalorder %s25, 0
      %p199 = por %p197, %p198
      %s201 = sadd.s32 %s200, 1
      %p204 = scmp.eq.s32.totalorder %s19, 1
      %p205 = scmp.ne.s32.totalorder %s200, %s202
      %p206 = scmp.eq.s32.totalorder %s19, 0
      %p207 = por %p205, %p206
      %p208 = scmp.ne.s32.totalorder %s200, %s202
      %p209 = scmp.eq.s32.totalorder %s24, 1
      %p210 = por %p208, %p209
      %p211 = scmp.ne.s32.totalorder %s202, %s203
      %p212 = scmp.eq.s32.totalorder %s24, 0
      %p213 = por %p211, %p212
      %p214 = scmp.ne.s32.totalorder %s202, %s203
      %p215 = scmp.eq.s32.totalorder %s25, 1
      %p216 = por %p214, %p215
      %p218 = scmp.ne.s32.totalorder %s203, %s217
      %p219 = scmp.eq.s32.totalorder %s25, 0
      %p220 = por %p218, %p219
      %s222 = sadd.s32 %s221, 1
      %p225 = scmp.eq.s32.totalorder %s19, 1
      %p226 = scmp.ne.s32.totalorder %s221, %s223
      %p227 = scmp.eq.s32.totalorder %s19, 0
      %p228 = por %p226, %p227
      %p229 = scmp.ne.s32.totalorder %s221, %s223
      %p230 = scmp.eq.s32.totalorder %s24, 1
      %p231 = por %p229, %p230
      %p232 = scmp.ne.s32.totalorder %s223, %s224
      %p233 = scmp.eq.s32.totalorder %s24, 0
      %p234 = por %p232, %p233
      %p235 = scmp.ne.s32.totalorder %s223, %s224
      %p236 = scmp.eq.s32.totalorder %s25, 1
      %p237 = por %p235, %p236
      %p239 = scmp.ne.s32.totalorder %s224, %s238
      %p240 = scmp.eq.s32.totalorder %s25, 0
      %p241 = por %p239, %p240
      %s243 = sadd.s32 %s242, 1
      %p246 = scmp.eq.s32.totalorder %s19, 1
      %p247 = scmp.ne.s32.totalorder %s242, %s244
      %p248 = scmp.eq.s32.totalorder %s19, 0
      %p249 = por %p247, %p248
      %p250 = scmp.ne.s32.totalorder %s242, %s244
      %p251 = scmp.eq.s32.totalorder %s24, 1
      %p252 = por %p250, %p251
      %p253 = scmp.ne.s32.totalorder %s244, %s245
      %p254 = scmp.eq.s32.totalorder %s24, 0
      %p255 = por %p253, %p254
      %p256 = scmp.ne.s32.totalorder %s244, %s245
      %p257 = scmp.eq.s32.totalorder %s25, 1
      %p258 = por %p256, %p257
      %p260 = scmp.ne.s32.totalorder %s245, %s259
      %p261 = scmp.eq.s32.totalorder %s25, 0
      %p262 = por %p260, %p261
      %s264 = sadd.s32 %s263, 1
      %p267 = scmp.eq.s32.totalorder %s19, 1
      %p268 = scmp.ne.s32.totalorder %s263, %s265
      %p269 = scmp.eq.s32.totalorder %s19, 0
      %p270 = por %p268, %p269
      %p271 = scmp.ne.s32.totalorder %s263, %s265
      %p272 = scmp.eq.s32.totalorder %s24, 1
      %p273 = por %p271, %p272
      %p274 = scmp.ne.s32.totalorder %s265, %s266
      %p275 = scmp.eq.s32.totalorder %s24, 0
      %p276 = por %p274, %p275
      %p277 = scmp.ne.s32.totalorder %s265, %s266
      %p278 = scmp.eq.s32.totalorder %s25, 1
      %p279 = por %p277, %p278
      %p281 = scmp.ne.s32.totalorder %s266, %s280
      %p282 = scmp.eq.s32.totalorder %s25, 0
      %p283 = por %p281, %p282
      %s285 = sadd.s32 %s284, 1
      %p288 = scmp.eq.s32.totalorder %s19, 1
      %p289 = scmp.ne.s32.totalorder %s284, %s286
      %p290 = scmp.eq.s32.totalorder %s19, 0
      %p291 = por %p289, %p290
      %p292 = scmp.ne.s32.totalorder %s284, %s286
      %p293 = scmp.eq.s32.totalorder %s24, 1
      %p294 = por %p292, %p293
      %p295 = scmp.ne.s32.totalorder %s286, %s287
      %p296 = scmp.eq.s32.totalorder %s24, 0
      %p297 = por %p295, %p296
      %p298 = scmp.ne.s32.totalorder %s286, %s287
      %p299 = scmp.eq.s32.totalorder %s25, 1
      %p300 = por %p298, %p299
      %p302 = scmp.ne.s32.totalorder %s287, %s301
      %p303 = scmp.eq.s32.totalorder %s25, 0
      %p304 = por %p302, %p303
      %s305 = ssub.s32 %s19, %s26
      %p306 = scmp.eq.s32.totalorder %s305, 0
      %s308 = sadd.s32 %s307, 1
      %s309 = scalar_select %p306, %s307, %s308
      %p312 = pneg %p306
      %p313 = scmp.eq.s32.totalorder %s19, 1
      %p314 = por %p312, %p313
      %p315 = scmp.ne.s32.totalorder %s307, %s310
      %p316 = scmp.eq.s32.totalorder %s19, 0
      %p317 = por %p315, %p316
      %p318 = scmp.ne.s32.totalorder %s307, %s310
      %p319 = scmp.eq.s32.totalorder %s24, 1
      %p320 = por %p318, %p319
      %p321 = scmp.ne.s32.totalorder %s310, %s311
      %p322 = scmp.eq.s32.totalorder %s24, 0
      %p323 = por %p321, %p322
      %p324 = scmp.ne.s32.totalorder %s310, %s311
      %p325 = scmp.eq.s32.totalorder %s25, 1
      %p326 = por %p324, %p325
      %p328 = scmp.ne.s32.totalorder %s311, %s327
      %p329 = scmp.eq.s32.totalorder %s25, 0
      %p330 = por %p328, %p329
      %p331 = scmp.le.s32.totalorder 1, %s19
      %p332 = scmp.lt.s32.totalorder %s19, 3
      %p333 = pnand %p331, %p332
      %p334 = pneg %p333
      // Predicated region
      $region9: #{eegnet_forward.1} parent=5 // pred_check
        _
      $region10: #{eegnet_forward.1} parent=5 // pred_check_branch
        %336 = sbr.rel (%p333) target = $region12
      $region11: #{eegnet_forward.1} parent=5 // pred_region
        %s337 = ssub.s32 %s19, 1
        // Predicated region
        $region13: #{eegnet_forward.1} parent=11 // pred_check
          %p338 = pneg %p66
        $region14: #{eegnet_forward.1} parent=11 // pred_check_branch
          %340 = sbr.rel (%p338) target = $region16
        $region15: #{eegnet_forward.1} parent=11 // pred_region
          _
        $region16: #{eegnet_forward.1} parent=11 // pred_fallthru
          _
        // Predicated region
        $region17: #{eegnet_forward.1} parent=11 // pred_check
          %p341 = pneg %p87
        $region18: #{eegnet_forward.1} parent=11 // pred_check_branch
          %343 = sbr.rel (%p341) target = $region20
        $region19: #{eegnet_forward.1} parent=11 // pred_region
          _
        $region20: #{eegnet_forward.1} parent=11 // pred_fallthru
          _
        // Predicated region
        $region21: #{eegnet_forward.1} parent=11 // pred_check
          %p344 = pneg %p108
        $region22: #{eegnet_forward.1} parent=11 // pred_check_branch
          %346 = sbr.rel (%p344) target = $region24
        $region23: #{eegnet_forward.1} parent=11 // pred_region
          _
        $region24: #{eegnet_forward.1} parent=11 // pred_fallthru
          _
        // Predicated region
        $region25: #{eegnet_forward.1} parent=11 // pred_check
          %p347 = pneg %p129
        $region26: #{eegnet_forward.1} parent=11 // pred_check_branch
          %349 = sbr.rel (%p347) target = $region28
        $region27: #{eegnet_forward.1} parent=11 // pred_region
          _
        $region28: #{eegnet_forward.1} parent=11 // pred_fallthru
          _
        // Predicated region
        $region29: #{eegnet_forward.1} parent=11 // pred_check
          %p350 = pneg %p150
        $region30: #{eegnet_forward.1} parent=11 // pred_check_branch
          %352 = sbr.rel (%p350) target = $region32
        $region31: #{eegnet_forward.1} parent=11 // pred_region
          _
        $region32: #{eegnet_forward.1} parent=11 // pred_fallthru
          _
        // Predicated region
        $region33: #{eegnet_forward.1} parent=11 // pred_check
          %p353 = pneg %p171
        $region34: #{eegnet_forward.1} parent=11 // pred_check_branch
          %355 = sbr.rel (%p353) target = $region36
        $region35: #{eegnet_forward.1} parent=11 // pred_region
          _
        $region36: #{eegnet_forward.1} parent=11 // pred_fallthru
          _
        // Predicated region
        $region37: #{eegnet_forward.1} parent=11 // pred_check
          %p356 = pneg %p192
        $region38: #{eegnet_forward.1} parent=11 // pred_check_branch
          %358 = sbr.rel (%p356) target = $region40
        $region39: #{eegnet_forward.1} parent=11 // pred_region
          _
        $region40: #{eegnet_forward.1} parent=11 // pred_fallthru
          _
        // Predicated region
        $region41: #{eegnet_forward.1} parent=11 // pred_check
          %p359 = pneg %p213
        $region42: #{eegnet_forward.1} parent=11 // pred_check_branch
          %361 = sbr.rel (%p359) target = $region44
        $region43: #{eegnet_forward.1} parent=11 // pred_region
          _
        $region44: #{eegnet_forward.1} parent=11 // pred_fallthru
          _
        // Predicated region
        $region45: #{eegnet_forward.1} parent=11 // pred_check
          %p362 = pneg %p234
        $region46: #{eegnet_forward.1} parent=11 // pred_check_branch
          %364 = sbr.rel (%p362) target = $region48
        $region47: #{eegnet_forward.1} parent=11 // pred_region
          _
        $region48: #{eegnet_forward.1} parent=11 // pred_fallthru
          _
        // Predicated region
        $region49: #{eegnet_forward.1} parent=11 // pred_check
          %p365 = pneg %p255
        $region50: #{eegnet_forward.1} parent=11 // pred_check_branch
          %367 = sbr.rel (%p365) target = $region52
        $region51: #{eegnet_forward.1} parent=11 // pred_region
          _
        $region52: #{eegnet_forward.1} parent=11 // pred_fallthru
          _
        // Predicated region
        $region53: #{eegnet_forward.1} parent=11 // pred_check
          %p368 = pneg %p276
        $region54: #{eegnet_forward.1} parent=11 // pred_check_branch
          %370 = sbr.rel (%p368) target = $region56
        $region55: #{eegnet_forward.1} parent=11 // pred_region
          _
        $region56: #{eegnet_forward.1} parent=11 // pred_fallthru
          _
        // Predicated region
        $region57: #{eegnet_forward.1} parent=11 // pred_check
          %p371 = pneg %p297
        $region58: #{eegnet_forward.1} parent=11 // pred_check_branch
          %373 = sbr.rel (%p371) target = $region60
        $region59: #{eegnet_forward.1} parent=11 // pred_region
          _
        $region60: #{eegnet_forward.1} parent=11 // pred_fallthru
          _
      $region12: #{eegnet_forward.1} parent=5 // pred_fallthru
        _
      %p374 = scmp.lt.s32.totalorder %s19, 2
      // Predicated region
      $region61: #{eegnet_forward.1} parent=5 // pred_check
        %p375 = pneg %p374
      $region62: #{eegnet_forward.1} parent=5 // pred_check_branch
        %377 = sbr.rel (%p375) target = $region64
      $region63: #{eegnet_forward.1} parent=5 // pred_region
        // Predicated region
        $region65: #{eegnet_forward.1} parent=63 // pred_check
          %p378 = pneg %p39
        $region66: #{eegnet_forward.1} parent=63 // pred_check_branch
          %380 = sbr.rel (%p378) target = $region68
        $region67: #{eegnet_forward.1} parent=63 // pred_region
          %s381 = sand.u32 %s29, 1
          %s382 = sand.u32 %s29, 1
          %s383 = smul.addr %s382, 1024
          %s384 = scalar_lea.vmem [#allocation3], %s383
          %s385 = smul.u32 8, %s19
          %s386 = smul.addr %s385, 4
          %s387 = scalar_lea.vmem %s0, %s386
          // Predicated region
          $region69: #{eegnet_forward.1} parent=67 // pred_check
            _
          $region70: #{eegnet_forward.1} parent=67 // pred_check_branch
            %389 = sbr.rel (0) target = $region72
          $region71: #{eegnet_forward.1} parent=67 // pred_region
            // Predicated region
            $region73: #{eegnet_forward.1} parent=71 // pred_check
              _
            $region74: #{eegnet_forward.1} parent=71 // pred_check_branch
              %391 = sbr.rel (0) target = $region76
            $region75: #{eegnet_forward.1} parent=71 // pred_region
              loop: start=0, step=1, limit=1
              $region77: #{eegnet_forward.1} parent=75 // loop_pre_header
                _
              $region78: #{eegnet_forward.1} parent=75 // loop_header
                %s393 = sphi 0, %s397
                %p394 = scmp.ge.s32.totalorder %s393, 1
                %s398 = sphi %s387, %s387
                %s399 = sphi %s384, %s384
              $region79: #{eegnet_forward.1} parent=75 // loop_header_branch
                %396 = sbr.rel (%p394) target = $region83
              $region80: #{eegnet_forward.1} parent=75 // loop_body
                %v400 = vld [vmem:[%s398] sm:$0xff]
                %401 = vst [vmem:[%s399] sm:$0xff] %v400
                %v402 = vld [vmem:[%s398 + $0x8] sm:$0xff]
                %403 = vst [vmem:[%s399 + $0x8] sm:$0xff] %v402
                %v404 = vld [vmem:[%s398 + $0x10] sm:$0xff]
                %405 = vst [vmem:[%s399 + $0x10] sm:$0xff] %v404
                %v406 = vld [vmem:[%s398 + $0x18] sm:$0xff]
                %407 = vst [vmem:[%s399 + $0x18] sm:$0xff] %v406
                %v408 = vld [vmem:[%s398 + $0x40] sm:$0xff]
                %409 = vst [vmem:[%s399 + $0x20] sm:$0xff] %v408
                %v410 = vld [vmem:[%s398 + $0x48] sm:$0xff]
                %411 = vst [vmem:[%s399 + $0x28] sm:$0xff] %v410
                %v412 = vld [vmem:[%s398 + $0x50] sm:$0xff]
                %413 = vst [vmem:[%s399 + $0x30] sm:$0xff] %v412
                %v414 = vld [vmem:[%s398 + $0x58] sm:$0xff]
                %415 = vst [vmem:[%s399 + $0x38] sm:$0xff] %v414
                %v416 = vld [vmem:[%s398 + $0x80] sm:$0xff]
                %417 = vst [vmem:[%s399 + $0x40] sm:$0xff] %v416
                %v418 = vld [vmem:[%s398 + $0x88] sm:$0xff]
                %419 = vst [vmem:[%s399 + $0x48] sm:$0xff] %v418
                %v420 = vld [vmem:[%s398 + $0x90] sm:$0xff]
                %421 = vst [vmem:[%s399 + $0x50] sm:$0xff] %v420
                %v422 = vld [vmem:[%s398 + $0x98] sm:$0xff]
                %423 = vst [vmem:[%s399 + $0x58] sm:$0xff] %v422
                %v424 = vld [vmem:[%s398 + $0xc0] sm:$0xff]
                %425 = vst [vmem:[%s399 + $0x60] sm:$0xff] %v424
                %v426 = vld [vmem:[%s398 + $0xc8] sm:$0xff]
                %427 = vst [vmem:[%s399 + $0x68] sm:$0xff] %v426
                %v428 = vld [vmem:[%s398 + $0xd0] sm:$0xff]
                %429 = vst [vmem:[%s399 + $0x70] sm:$0xff] %v428
                %v430 = vld [vmem:[%s398 + $0xd8] sm:$0xff]
                %431 = vst [vmem:[%s399 + $0x78] sm:$0xff] %v430
                %v432 = vld [vmem:[%s398 + $0x100] sm:$0xff]
                %433 = vst [vmem:[%s399 + $0x80] sm:$0xff] %v432
                %v434 = vld [vmem:[%s398 + $0x108] sm:$0xff]
                %435 = vst [vmem:[%s399 + $0x88] sm:$0xff] %v434
                %v436 = vld [vmem:[%s398 + $0x110] sm:$0xff]
                %437 = vst [vmem:[%s399 + $0x90] sm:$0xff] %v436
                %v438 = vld [vmem:[%s398 + $0x118] sm:$0xff]
                %439 = vst [vmem:[%s399 + $0x98] sm:$0xff] %v438
                %v440 = vld [vmem:[%s398 + $0x140] sm:$0xff]
                %441 = vst [vmem:[%s399 + $0xa0] sm:$0xff] %v440
                %v442 = vld [vmem:[%s398 + $0x148] sm:$0xff]
                %443 = vst [vmem:[%s399 + $0xa8] sm:$0xff] %v442
                %v444 = vld [vmem:[%s398 + $0x150] sm:$0xff]
                %445 = vst [vmem:[%s399 + $0xb0] sm:$0xff] %v444
                %v446 = vld [vmem:[%s398 + $0x158] sm:$0xff]
                %447 = vst [vmem:[%s399 + $0xb8] sm:$0xff] %v446
                %v448 = vld [vmem:[%s398 + $0x180] sm:$0xff]
                %449 = vst [vmem:[%s399 + $0xc0] sm:$0xff] %v448
                %v450 = vld [vmem:[%s398 + $0x188] sm:$0xff]
                %451 = vst [vmem:[%s399 + $0xc8] sm:$0xff] %v450
                %v452 = vld [vmem:[%s398 + $0x190] sm:$0xff]
                %453 = vst [vmem:[%s399 + $0xd0] sm:$0xff] %v452
                %v454 = vld [vmem:[%s398 + $0x198] sm:$0xff]
                %455 = vst [vmem:[%s399 + $0xd8] sm:$0xff] %v454
                %v456 = vld [vmem:[%s398 + $0x1c0] sm:$0xff]
                %457 = vst [vmem:[%s399 + $0xe0] sm:$0xff] %v456
                %v458 = vld [vmem:[%s398 + $0x1c8] sm:$0xff]
                %459 = vst [vmem:[%s399 + $0xe8] sm:$0xff] %v458
                %v460 = vld [vmem:[%s398 + $0x1d0] sm:$0xff]
                %461 = vst [vmem:[%s399 + $0xf0] sm:$0xff] %v460
                %v462 = vld [vmem:[%s398 + $0x1d8] sm:$0xff]
                %463 = vst [vmem:[%s399 + $0xf8] sm:$0xff] %v462
                %v464 = vld [vmem:[%s398 + $0x200] sm:$0xff]
                %465 = vst [vmem:[%s399 + $0x100] sm:$0xff] %v464
                %v466 = vld [vmem:[%s398 + $0x208] sm:$0xff]
                %467 = vst [vmem:[%s399 + $0x108] sm:$0xff] %v466
                %v468 = vld [vmem:[%s398 + $0x210] sm:$0xff]
                %469 = vst [vmem:[%s399 + $0x110] sm:$0xff] %v468
                %v470 = vld [vmem:[%s398 + $0x218] sm:$0xff]
                %471 = vst [vmem:[%s399 + $0x118] sm:$0xff] %v470
                %v472 = vld [vmem:[%s398 + $0x240] sm:$0xff]
                %473 = vst [vmem:[%s399 + $0x120] sm:$0xff] %v472
                %v474 = vld [vmem:[%s398 + $0x248] sm:$0xff]
                %475 = vst [vmem:[%s399 + $0x128] sm:$0xff] %v474
                %v476 = vld [vmem:[%s398 + $0x250] sm:$0xff]
                %477 = vst [vmem:[%s399 + $0x130] sm:$0xff] %v476
                %v478 = vld [vmem:[%s398 + $0x258] sm:$0xff]
                %479 = vst [vmem:[%s399 + $0x138] sm:$0xff] %v478
                %v480 = vld [vmem:[%s398 + $0x280] sm:$0xff]
                %481 = vst [vmem:[%s399 + $0x140] sm:$0xff] %v480
                %v482 = vld [vmem:[%s398 + $0x288] sm:$0xff]
                %483 = vst [vmem:[%s399 + $0x148] sm:$0xff] %v482
                %v484 = vld [vmem:[%s398 + $0x290] sm:$0xff]
                %485 = vst [vmem:[%s399 + $0x150] sm:$0xff] %v484
                %v486 = vld [vmem:[%s398 + $0x298] sm:$0xff]
                %487 = vst [vmem:[%s399 + $0x158] sm:$0xff] %v486
                %v488 = vld [vmem:[%s398 + $0x2c0] sm:$0xff]
                %489 = vst [vmem:[%s399 + $0x160] sm:$0xff] %v488
                %v490 = vld [vmem:[%s398 + $0x2c8] sm:$0xff]
                %491 = vst [vmem:[%s399 + $0x168] sm:$0xff] %v490
                %v492 = vld [vmem:[%s398 + $0x2d0] sm:$0xff]
                %493 = vst [vmem:[%s399 + $0x170] sm:$0xff] %v492
                %v494 = vld [vmem:[%s398 + $0x2d8] sm:$0xff]
                %495 = vst [vmem:[%s399 + $0x178] sm:$0xff] %v494
                %v496 = vld [vmem:[%s398 + $0x300] sm:$0xff]
                %497 = vst [vmem:[%s399 + $0x180] sm:$0xff] %v496
                %v498 = vld [vmem:[%s398 + $0x308] sm:$0xff]
                %499 = vst [vmem:[%s399 + $0x188] sm:$0xff] %v498
                %v500 = vld [vmem:[%s398 + $0x310] sm:$0xff]
                %501 = vst [vmem:[%s399 + $0x190] sm:$0xff] %v500
                %v502 = vld [vmem:[%s398 + $0x318] sm:$0xff]
                %503 = vst [vmem:[%s399 + $0x198] sm:$0xff] %v502
                %v504 = vld [vmem:[%s398 + $0x340] sm:$0xff]
                %505 = vst [vmem:[%s399 + $0x1a0] sm:$0xff] %v504
                %v506 = vld [vmem:[%s398 + $0x348] sm:$0xff]
                %507 = vst [vmem:[%s399 + $0x1a8] sm:$0xff] %v506
                %v508 = vld [vmem:[%s398 + $0x350] sm:$0xff]
                %509 = vst [vmem:[%s399 + $0x1b0] sm:$0xff] %v508
                %v510 = vld [vmem:[%s398 + $0x358] sm:$0xff]
                %511 = vst [vmem:[%s399 + $0x1b8] sm:$0xff] %v510
                %v512 = vld [vmem:[%s398 + $0x380] sm:$0xff]
                %513 = vst [vmem:[%s399 + $0x1c0] sm:$0xff] %v512
                %v514 = vld [vmem:[%s398 + $0x388] sm:$0xff]
                %515 = vst [vmem:[%s399 + $0x1c8] sm:$0xff] %v514
                %v516 = vld [vmem:[%s398 + $0x390] sm:$0xff]
                %517 = vst [vmem:[%s399 + $0x1d0] sm:$0xff] %v516
                %v518 = vld [vmem:[%s398 + $0x398] sm:$0xff]
                %519 = vst [vmem:[%s399 + $0x1d8] sm:$0xff] %v518
                %v520 = vld [vmem:[%s398 + $0x3c0] sm:$0xff]
                %521 = vst [vmem:[%s399 + $0x1e0] sm:$0xff] %v520
                %v522 = vld [vmem:[%s398 + $0x3c8] sm:$0xff]
                %523 = vst [vmem:[%s399 + $0x1e8] sm:$0xff] %v522
                %v524 = vld [vmem:[%s398 + $0x3d0] sm:$0xff]
                %525 = vst [vmem:[%s399 + $0x1f0] sm:$0xff] %v524
                %v526 = vld [vmem:[%s398 + $0x3d8] sm:$0xff]
                %527 = vst [vmem:[%s399 + $0x1f8] sm:$0xff] %v526
                %v528 = vld [vmem:[%s398 + $0x400] sm:$0xff]
                %529 = vst [vmem:[%s399 + $0x200] sm:$0xff] %v528
                %v530 = vld [vmem:[%s398 + $0x408] sm:$0xff]
                %531 = vst [vmem:[%s399 + $0x208] sm:$0xff] %v530
                %v532 = vld [vmem:[%s398 + $0x410] sm:$0xff]
                %533 = vst [vmem:[%s399 + $0x210] sm:$0xff] %v532
                %v534 = vld [vmem:[%s398 + $0x418] sm:$0xff]
                %535 = vst [vmem:[%s399 + $0x218] sm:$0xff] %v534
                %v536 = vld [vmem:[%s398 + $0x440] sm:$0xff]
                %537 = vst [vmem:[%s399 + $0x220] sm:$0xff] %v536
                %v538 = vld [vmem:[%s398 + $0x448] sm:$0xff]
                %539 = vst [vmem:[%s399 + $0x228] sm:$0xff] %v538
                %v540 = vld [vmem:[%s398 + $0x450] sm:$0xff]
                %541 = vst [vmem:[%s399 + $0x230] sm:$0xff] %v540
                %v542 = vld [vmem:[%s398 + $0x458] sm:$0xff]
                %543 = vst [vmem:[%s399 + $0x238] sm:$0xff] %v542
                %v544 = vld [vmem:[%s398 + $0x480] sm:$0xff]
                %545 = vst [vmem:[%s399 + $0x240] sm:$0xff] %v544
                %v546 = vld [vmem:[%s398 + $0x488] sm:$0xff]
                %547 = vst [vmem:[%s399 + $0x248] sm:$0xff] %v546
                %v548 = vld [vmem:[%s398 + $0x490] sm:$0xff]
                %549 = vst [vmem:[%s399 + $0x250] sm:$0xff] %v548
                %v550 = vld [vmem:[%s398 + $0x498] sm:$0xff]
                %551 = vst [vmem:[%s399 + $0x258] sm:$0xff] %v550
                %v552 = vld [vmem:[%s398 + $0x4c0] sm:$0xff]
                %553 = vst [vmem:[%s399 + $0x260] sm:$0xff] %v552
                %v554 = vld [vmem:[%s398 + $0x4c8] sm:$0xff]
                %555 = vst [vmem:[%s399 + $0x268] sm:$0xff] %v554
                %v556 = vld [vmem:[%s398 + $0x4d0] sm:$0xff]
                %557 = vst [vmem:[%s399 + $0x270] sm:$0xff] %v556
                %v558 = vld [vmem:[%s398 + $0x4d8] sm:$0xff]
                %559 = vst [vmem:[%s399 + $0x278] sm:$0xff] %v558
                %v560 = vld [vmem:[%s398 + $0x500] sm:$0xff]
                %561 = vst [vmem:[%s399 + $0x280] sm:$0xff] %v560
                %v562 = vld [vmem:[%s398 + $0x508] sm:$0xff]
                %563 = vst [vmem:[%s399 + $0x288] sm:$0xff] %v562
                %v564 = vld [vmem:[%s398 + $0x510] sm:$0xff]
                %565 = vst [vmem:[%s399 + $0x290] sm:$0xff] %v564
                %v566 = vld [vmem:[%s398 + $0x518] sm:$0xff]
                %567 = vst [vmem:[%s399 + $0x298] sm:$0xff] %v566
                %v568 = vld [vmem:[%s398 + $0x540] sm:$0xff]
                %569 = vst [vmem:[%s399 + $0x2a0] sm:$0xff] %v568
                %v570 = vld [vmem:[%s398 + $0x548] sm:$0xff]
                %571 = vst [vmem:[%s399 + $0x2a8] sm:$0xff] %v570
                %v572 = vld [vmem:[%s398 + $0x550] sm:$0xff]
                %573 = vst [vmem:[%s399 + $0x2b0] sm:$0xff] %v572
                %v574 = vld [vmem:[%s398 + $0x558] sm:$0xff]
                %575 = vst [vmem:[%s399 + $0x2b8] sm:$0xff] %v574
                %v576 = vld [vmem:[%s398 + $0x580] sm:$0xff]
                %577 = vst [vmem:[%s399 + $0x2c0] sm:$0xff] %v576
                %v578 = vld [vmem:[%s398 + $0x588] sm:$0xff]
                %579 = vst [vmem:[%s399 + $0x2c8] sm:$0xff] %v578
                %v580 = vld [vmem:[%s398 + $0x590] sm:$0xff]
                %581 = vst [vmem:[%s399 + $0x2d0] sm:$0xff] %v580
                %v582 = vld [vmem:[%s398 + $0x598] sm:$0xff]
                %583 = vst [vmem:[%s399 + $0x2d8] sm:$0xff] %v582
                %v584 = vld [vmem:[%s398 + $0x5c0] sm:$0xff]
                %585 = vst [vmem:[%s399 + $0x2e0] sm:$0xff] %v584
                %v586 = vld [vmem:[%s398 + $0x5c8] sm:$0xff]
                %587 = vst [vmem:[%s399 + $0x2e8] sm:$0xff] %v586
                %v588 = vld [vmem:[%s398 + $0x5d0] sm:$0xff]
                %589 = vst [vmem:[%s399 + $0x2f0] sm:$0xff] %v588
                %v590 = vld [vmem:[%s398 + $0x5d8] sm:$0xff]
                %591 = vst [vmem:[%s399 + $0x2f8] sm:$0xff] %v590
                %v592 = vld [vmem:[%s398 + $0x600] sm:$0xff]
                %593 = vst [vmem:[%s399 + $0x300] sm:$0xff] %v592
                %v594 = vld [vmem:[%s398 + $0x608] sm:$0xff]
                %595 = vst [vmem:[%s399 + $0x308] sm:$0xff] %v594
                %v596 = vld [vmem:[%s398 + $0x610] sm:$0xff]
                %597 = vst [vmem:[%s399 + $0x310] sm:$0xff] %v596
                %v598 = vld [vmem:[%s398 + $0x618] sm:$0xff]
                %599 = vst [vmem:[%s399 + $0x318] sm:$0xff] %v598
                %v600 = vld [vmem:[%s398 + $0x640] sm:$0xff]
                %601 = vst [vmem:[%s399 + $0x320] sm:$0xff] %v600
                %v602 = vld [vmem:[%s398 + $0x648] sm:$0xff]
                %603 = vst [vmem:[%s399 + $0x328] sm:$0xff] %v602
                %v604 = vld [vmem:[%s398 + $0x650] sm:$0xff]
                %605 = vst [vmem:[%s399 + $0x330] sm:$0xff] %v604
                %v606 = vld [vmem:[%s398 + $0x658] sm:$0xff]
                %607 = vst [vmem:[%s399 + $0x338] sm:$0xff] %v606
                %v608 = vld [vmem:[%s398 + $0x680] sm:$0xff]
                %609 = vst [vmem:[%s399 + $0x340] sm:$0xff] %v608
                %v610 = vld [vmem:[%s398 + $0x688] sm:$0xff]
                %611 = vst [vmem:[%s399 + $0x348] sm:$0xff] %v610
                %v612 = vld [vmem:[%s398 + $0x690] sm:$0xff]
                %613 = vst [vmem:[%s399 + $0x350] sm:$0xff] %v612
                %v614 = vld [vmem:[%s398 + $0x698] sm:$0xff]
                %615 = vst [vmem:[%s399 + $0x358] sm:$0xff] %v614
                %v616 = vld [vmem:[%s398 + $0x6c0] sm:$0xff]
                %617 = vst [vmem:[%s399 + $0x360] sm:$0xff] %v616
                %v618 = vld [vmem:[%s398 + $0x6c8] sm:$0xff]
                %619 = vst [vmem:[%s399 + $0x368] sm:$0xff] %v618
                %v620 = vld [vmem:[%s398 + $0x6d0] sm:$0xff]
                %621 = vst [vmem:[%s399 + $0x370] sm:$0xff] %v620
                %v622 = vld [vmem:[%s398 + $0x6d8] sm:$0xff]
                %623 = vst [vmem:[%s399 + $0x378] sm:$0xff] %v622
                %v624 = vld [vmem:[%s398 + $0x700] sm:$0xff]
                %625 = vst [vmem:[%s399 + $0x380] sm:$0xff] %v624
                %v626 = vld [vmem:[%s398 + $0x708] sm:$0xff]
                %627 = vst [vmem:[%s399 + $0x388] sm:$0xff] %v626
                %v628 = vld [vmem:[%s398 + $0x710] sm:$0xff]
                %629 = vst [vmem:[%s399 + $0x390] sm:$0xff] %v628
                %v630 = vld [vmem:[%s398 + $0x718] sm:$0xff]
                %631 = vst [vmem:[%s399 + $0x398] sm:$0xff] %v630
                %v632 = vld [vmem:[%s398 + $0x740] sm:$0xff]
                %633 = vst [vmem:[%s399 + $0x3a0] sm:$0xff] %v632
                %v634 = vld [vmem:[%s398 + $0x748] sm:$0xff]
                %635 = vst [vmem:[%s399 + $0x3a8] sm:$0xff] %v634
                %v636 = vld [vmem:[%s398 + $0x750] sm:$0xff]
                %637 = vst [vmem:[%s399 + $0x3b0] sm:$0xff] %v636
                %v638 = vld [vmem:[%s398 + $0x758] sm:$0xff]
                %639 = vst [vmem:[%s399 + $0x3b8] sm:$0xff] %v638
                %v640 = vld [vmem:[%s398 + $0x780] sm:$0xff]
                %641 = vst [vmem:[%s399 + $0x3c0] sm:$0xff] %v640
                %v642 = vld [vmem:[%s398 + $0x788] sm:$0xff]
                %643 = vst [vmem:[%s399 + $0x3c8] sm:$0xff] %v642
                %v644 = vld [vmem:[%s398 + $0x790] sm:$0xff]
                %645 = vst [vmem:[%s399 + $0x3d0] sm:$0xff] %v644
                %v646 = vld [vmem:[%s398 + $0x798] sm:$0xff]
                %647 = vst [vmem:[%s399 + $0x3d8] sm:$0xff] %v646
                %v648 = vld [vmem:[%s398 + $0x7c0] sm:$0xff]
                %649 = vst [vmem:[%s399 + $0x3e0] sm:$0xff] %v648
                %v650 = vld [vmem:[%s398 + $0x7c8] sm:$0xff]
                %651 = vst [vmem:[%s399 + $0x3e8] sm:$0xff] %v650
                %v652 = vld [vmem:[%s398 + $0x7d0] sm:$0xff]
                %653 = vst [vmem:[%s399 + $0x3f0] sm:$0xff] %v652
                %v654 = vld [vmem:[%s398 + $0x7d8] sm:$0xff]
                %655 = vst [vmem:[%s399 + $0x3f8] sm:$0xff] %v654
              $region81: #{eegnet_forward.1} parent=75 // loop_footer
                %s397 = sadd.s32 1, %s393
              $region82: #{eegnet_forward.1} parent=75 // loop_footer_branch
                %392 = sbr.rel target = $region78
              $region83: #{eegnet_forward.1} parent=75 // loop_exit
                _
            $region76: #{eegnet_forward.1} parent=71 // pred_fallthru
              _
            // Predicated region
            $region84: #{eegnet_forward.1} parent=71 // pred_check
              _
            $region85: #{eegnet_forward.1} parent=71 // pred_check_branch
              %657 = sbr.rel target = $region87
            $region86: #{eegnet_forward.1} parent=71 // pred_region
              _
            $region87: #{eegnet_forward.1} parent=71 // pred_fallthru
              _
          $region72: #{eegnet_forward.1} parent=67 // pred_fallthru
            _
          %658 = vnop
        $region68: #{eegnet_forward.1} parent=63 // pred_fallthru
          _
      $region64: #{eegnet_forward.1} parent=5 // pred_fallthru
        _
      %p659 = scmp.le.s32.totalorder 1, %s19
      %p660 = scmp.lt.s32.totalorder %s19, 3
      %p661 = pnand %p659, %p660
      %p662 = pneg %p661
      // Predicated region
      $region88: #{eegnet_forward.1} parent=5 // pred_check
        _
      $region89: #{eegnet_forward.1} parent=5 // pred_check_branch
        %664 = sbr.rel (%p661) target = $region91
      $region90: #{eegnet_forward.1} parent=5 // pred_region
        %s665 = ssub.s32 %s19, 1
        %s666 = sand.u32 %s32, 1
        %s667 = sand.u32 %s32, 1
        %s668 = smul.addr %s667, 1024
        %s669 = scalar_lea.vmem [#allocation3], %s668
        // Predicated region
        $region92: #{eegnet_forward.1} parent=90 // pred_check
          %p670 = pneg %p45
        $region93: #{eegnet_forward.1} parent=90 // pred_check_branch
          %672 = sbr.rel (%p670) target = $region95
        $region94: #{eegnet_forward.1} parent=90 // pred_region
          _
        $region95: #{eegnet_forward.1} parent=90 // pred_fallthru
          _
        %s673 = sand.u32 %s32, 1
        %s674 = sand.u32 %s32, 1
        %s675 = smul.addr %s674, 1024
        %s676 = scalar_lea.vmem [#allocation3], %s675
        %p677 = pneg %p45
        %p678 = pneg %p42
        %p679 = pneg %p66
        %p680 = pneg %p63
        %p681 = pneg %p87
        %p682 = pneg %p84
        %p683 = pneg %p108
        %p684 = pneg %p105
        %p685 = pneg %p129
        %p686 = pneg %p126
        %p687 = pneg %p150
        %p688 = pneg %p147
        %p689 = pneg %p171
        %p690 = pneg %p168
        %p691 = pneg %p192
        %p692 = pneg %p189
        %p693 = pneg %p213
        %p694 = pneg %p210
        %p695 = pneg %p234
        %p696 = pneg %p231
        %p697 = pneg %p255
        %p698 = pneg %p252
        %p699 = pneg %p276
        %p700 = pneg %p273
        %p701 = pneg %p297
        %p702 = pneg %p294
        %p703 = pneg %p323
        %p704 = pneg %p320
        %p705 = scmp.lt.s32.totalorder %s24, 1
        %s706 = scalar_select %p705, %s24, 1
        %s707 = smul.addr %s706, 8
        %s708 = scalar_lea.vmem %s13, %s707
        %s709 = smul.u32 8, %s24
        %p710 = scmp.lt.s32.totalorder %s24, 1
        %s711 = scalar_select %p710, %s24, 1
        %s712 = smul.addr %s711, 8
        %s713 = scalar_lea.vmem %s13, %s712
        %v715 = vld [vmem:[%s1] sm:$0xff]
        %v716 = vld [vmem:[%s1 + $0x8] sm:$0xff]
        %v717 = vld [vmem:[%s1 + $0x10] sm:$0xff]
        %v718 = vld [vmem:[%s1 + $0x18] sm:$0xff]
        %v719 = vld [vmem:[%s669] sm:$0xff]
        %v720 = vld [vmem:[%s669 + $0x8] sm:$0xff]
        %v721 = vld [vmem:[%s669 + $0x10] sm:$0xff]
        %v722 = vld [vmem:[%s669 + $0x18] sm:$0xff]
        %v723 = vld [vmem:[%s669 + $0x20] sm:$0xff]
        %v724 = vld [vmem:[%s669 + $0x28] sm:$0xff]
        %v725 = vld [vmem:[%s669 + $0x30] sm:$0xff]
        %v726 = vld [vmem:[%s669 + $0x38] sm:$0xff]
        %v727 = vld [vmem:[%s669 + $0x40] sm:$0xff]
        %v728 = vld [vmem:[%s669 + $0x48] sm:$0xff]
        %v729 = vld [vmem:[%s669 + $0x50] sm:$0xff]
        %v730 = vld [vmem:[%s669 + $0x58] sm:$0xff]
        %v731 = vld [vmem:[%s669 + $0x60] sm:$0xff]
        %v732 = vld [vmem:[%s669 + $0x68] sm:$0xff]
        %v733 = vld [vmem:[%s669 + $0x70] sm:$0xff]
        %v734 = vld [vmem:[%s669 + $0x78] sm:$0xff]
        %v735 = vld [vmem:[%s669 + $0x80] sm:$0xff]
        %v736 = vld [vmem:[%s669 + $0x88] sm:$0xff]
        %v737 = vld [vmem:[%s669 + $0x90] sm:$0xff]
        %v738 = vld [vmem:[%s669 + $0x98] sm:$0xff]
        %v739 = vld [vmem:[%s669 + $0xa0] sm:$0xff]
        %v740 = vld [vmem:[%s669 + $0xa8] sm:$0xff]
        %v741 = vld [vmem:[%s669 + $0xb0] sm:$0xff]
        %v742 = vld [vmem:[%s669 + $0xb8] sm:$0xff]
        %v743 = vld [vmem:[%s669 + $0xc0] sm:$0xff]
        %v744 = vld [vmem:[%s669 + $0xc8] sm:$0xff]
        %v745 = vld [vmem:[%s669 + $0xd0] sm:$0xff]
        %v746 = vld [vmem:[%s669 + $0xd8] sm:$0xff]
        %v747 = vld [vmem:[%s669 + $0xe0] sm:$0xff]
        %v748 = vld [vmem:[%s669 + $0xe8] sm:$0xff]
        %v749 = vld [vmem:[%s669 + $0xf0] sm:$0xff]
        %v750 = vld [vmem:[%s669 + $0xf8] sm:$0xff]
        %v751 = vld [vmem:[%s669 + $0x100] sm:$0xff]
        %v752 = vld [vmem:[%s669 + $0x108] sm:$0xff]
        %v753 = vld [vmem:[%s669 + $0x110] sm:$0xff]
        %v754 = vld [vmem:[%s669 + $0x118] sm:$0xff]
        %v755 = vld [vmem:[%s669 + $0x120] sm:$0xff]
        %v756 = vld [vmem:[%s669 + $0x128] sm:$0xff]
        %v757 = vld [vmem:[%s669 + $0x130] sm:$0xff]
        %v758 = vld [vmem:[%s669 + $0x138] sm:$0xff]
        %v759 = vld [vmem:[%s669 + $0x140] sm:$0xff]
        %v760 = vld [vmem:[%s669 + $0x148] sm:$0xff]
        %v761 = vld [vmem:[%s669 + $0x150] sm:$0xff]
        %v762 = vld [vmem:[%s669 + $0x158] sm:$0xff]
        %v763 = vld [vmem:[%s669 + $0x160] sm:$0xff]
        %v764 = vld [vmem:[%s669 + $0x168] sm:$0xff]
        %v765 = vld [vmem:[%s669 + $0x170] sm:$0xff]
        %v766 = vld [vmem:[%s669 + $0x178] sm:$0xff]
        %v767 = vld [vmem:[%s669 + $0x180] sm:$0xff]
        %v768 = vld [vmem:[%s669 + $0x188] sm:$0xff]
        %v769 = vld [vmem:[%s669 + $0x190] sm:$0xff]
        %v770 = vld [vmem:[%s669 + $0x198] sm:$0xff]
        %v771 = vld [vmem:[%s669 + $0x1a0] sm:$0xff]
        %v772 = vld [vmem:[%s669 + $0x1a8] sm:$0xff]
        %v773 = vld [vmem:[%s669 + $0x1b0] sm:$0xff]
        %v774 = vld [vmem:[%s669 + $0x1b8] sm:$0xff]
        %v775 = vld [vmem:[%s669 + $0x1c0] sm:$0xff]
        %v776 = vld [vmem:[%s669 + $0x1c8] sm:$0xff]
        %v777 = vld [vmem:[%s669 + $0x1d0] sm:$0xff]
        %v778 = vld [vmem:[%s669 + $0x1d8] sm:$0xff]
        %v779 = vld [vmem:[%s669 + $0x1e0] sm:$0xff]
        %v780 = vld [vmem:[%s669 + $0x1e8] sm:$0xff]
        %v781 = vld [vmem:[%s669 + $0x1f0] sm:$0xff]
        %v782 = vld [vmem:[%s669 + $0x1f8] sm:$0xff]
        %v783 = vld [vmem:[%s669 + $0x200] sm:$0xff]
        %v784 = vld [vmem:[%s669 + $0x208] sm:$0xff]
        %v785 = vld [vmem:[%s669 + $0x210] sm:$0xff]
        %v786 = vld [vmem:[%s669 + $0x218] sm:$0xff]
        %v787 = vld [vmem:[%s669 + $0x220] sm:$0xff]
        %v788 = vld [vmem:[%s669 + $0x228] sm:$0xff]
        %v789 = vld [vmem:[%s669 + $0x230] sm:$0xff]
        %v790 = vld [vmem:[%s669 + $0x238] sm:$0xff]
        %v791 = vld [vmem:[%s669 + $0x240] sm:$0xff]
        %v792 = vld [vmem:[%s669 + $0x248] sm:$0xff]
        %v793 = vld [vmem:[%s669 + $0x250] sm:$0xff]
        %v794 = vld [vmem:[%s669 + $0x258] sm:$0xff]
        %v795 = vld [vmem:[%s669 + $0x260] sm:$0xff]
        %v796 = vld [vmem:[%s669 + $0x268] sm:$0xff]
        %v797 = vld [vmem:[%s669 + $0x270] sm:$0xff]
        %v798 = vld [vmem:[%s669 + $0x278] sm:$0xff]
        %v799 = vld [vmem:[%s669 + $0x280] sm:$0xff]
        %v800 = vld [vmem:[%s669 + $0x288] sm:$0xff]
        %v801 = vld [vmem:[%s669 + $0x290] sm:$0xff]
        %v802 = vld [vmem:[%s669 + $0x298] sm:$0xff]
        %v803 = vld [vmem:[%s669 + $0x2a0] sm:$0xff]
        %v804 = vld [vmem:[%s669 + $0x2a8] sm:$0xff]
        %v805 = vld [vmem:[%s669 + $0x2b0] sm:$0xff]
        %v806 = vld [vmem:[%s669 + $0x2b8] sm:$0xff]
        %v807 = vld [vmem:[%s669 + $0x2c0] sm:$0xff]
        %v808 = vld [vmem:[%s669 + $0x2c8] sm:$0xff]
        %v809 = vld [vmem:[%s669 + $0x2d0] sm:$0xff]
        %v810 = vld [vmem:[%s669 + $0x2d8] sm:$0xff]
        %v811 = vld [vmem:[%s669 + $0x2e0] sm:$0xff]
        %v812 = vld [vmem:[%s669 + $0x2e8] sm:$0xff]
        %v813 = vld [vmem:[%s669 + $0x2f0] sm:$0xff]
        %v814 = vld [vmem:[%s669 + $0x2f8] sm:$0xff]
        %v815 = vld [vmem:[%s669 + $0x300] sm:$0xff]
        %v816 = vld [vmem:[%s669 + $0x308] sm:$0xff]
        %v817 = vld [vmem:[%s669 + $0x310] sm:$0xff]
        %v818 = vld [vmem:[%s669 + $0x318] sm:$0xff]
        %v819 = vld [vmem:[%s669 + $0x320] sm:$0xff]
        %v820 = vld [vmem:[%s669 + $0x328] sm:$0xff]
        %v821 = vld [vmem:[%s669 + $0x330] sm:$0xff]
        %v822 = vld [vmem:[%s669 + $0x338] sm:$0xff]
        %v823 = vld [vmem:[%s669 + $0x340] sm:$0xff]
        %v824 = vld [vmem:[%s669 + $0x348] sm:$0xff]
        %v825 = vld [vmem:[%s669 + $0x350] sm:$0xff]
        %v826 = vld [vmem:[%s669 + $0x358] sm:$0xff]
        %v827 = vld [vmem:[%s669 + $0x360] sm:$0xff]
        %v828 = vld [vmem:[%s669 + $0x368] sm:$0xff]
        %v829 = vld [vmem:[%s669 + $0x370] sm:$0xff]
        %v830 = vld [vmem:[%s669 + $0x378] sm:$0xff]
        %v831 = vld [vmem:[%s669 + $0x380] sm:$0xff]
        %v832 = vld [vmem:[%s669 + $0x388] sm:$0xff]
        %v833 = vld [vmem:[%s669 + $0x390] sm:$0xff]
        %v834 = vld [vmem:[%s669 + $0x398] sm:$0xff]
        %v835 = vld [vmem:[%s669 + $0x3a0] sm:$0xff]
        %v836 = vld [vmem:[%s669 + $0x3a8] sm:$0xff]
        %v837 = vld [vmem:[%s669 + $0x3b0] sm:$0xff]
        %v838 = vld [vmem:[%s669 + $0x3b8] sm:$0xff]
        %v839 = vld [vmem:[%s669 + $0x3c0] sm:$0xff]
        %v840 = vld [vmem:[%s669 + $0x3c8] sm:$0xff]
        %v841 = vld [vmem:[%s669 + $0x3d0] sm:$0xff]
        %v842 = vld [vmem:[%s669 + $0x3d8] sm:$0xff]
        %v843 = vld [vmem:[%s669 + $0x3e0] sm:$0xff]
        %v844 = vld [vmem:[%s669 + $0x3e8] sm:$0xff]
        %v845 = vld [vmem:[%s669 + $0x3f0] sm:$0xff]
        %v846 = vld [vmem:[%s669 + $0x3f8] sm:$0xff]
        %v847 = vld [vmem:[%s2] sm:$0xff]
        %v848 = vld [vmem:[%s2 + $0x8] sm:$0xff]
        %v849 = vld [vmem:[%s2 + $0x10] sm:$0xff]
        %v850 = vld [vmem:[%s2 + $0x18] sm:$0xff]
        %852 = vset.pattern.permute.xlu0 0
        %853 = vperm.xlu0 %852, %v847
        %v854 = vpop.permute.xlu0 %853
        %857 = vset.pattern.permute.xlu0 0
        %858 = vperm.xlu0 %857, %v848
        %v859 = vpop.permute.xlu0 %858
        %862 = vset.pattern.permute.xlu0 0
        %863 = vperm.xlu0 %862, %v849
        %v864 = vpop.permute.xlu0 %863
        %867 = vset.pattern.permute.xlu0 0
        %868 = vperm.xlu0 %867, %v850
        %v869 = vpop.permute.xlu0 %868
        %v875 = vunpack.c.l.b16 %v715
        %v876 = vunpack.c.h.b16 %v715
        %v877 = vunpack.c.l.b16 %v716
        %v878 = vunpack.c.h.b16 %v716
        %v879 = vunpack.c.l.b16 %v717
        %v880 = vunpack.c.h.b16 %v717
        %v881 = vunpack.c.l.b16 %v718
        %v882 = vunpack.c.h.b16 %v718
        %v883 = vpack.c.b16 %v877, %v875
        %v884 = vpack.c.b16 %v878, %v876
        %v885 = vpack.c.b16 %v881, %v879
        %v886 = vpack.c.b16 %v882, %v880
        %v1019 = vunpack.c.l.b16 %v719
        %v1020 = vunpack.c.h.b16 %v719
        %v1021 = vunpack.c.l.b16 %v720
        %v1022 = vunpack.c.h.b16 %v720
        %v1023 = vunpack.c.l.b16 %v721
        %v1024 = vunpack.c.h.b16 %v721
        %v1025 = vunpack.c.l.b16 %v722
        %v1026 = vunpack.c.h.b16 %v722
        %v1027 = vunpack.c.l.b16 %v723
        %v1028 = vunpack.c.h.b16 %v723
        %v1029 = vunpack.c.l.b16 %v724
        %v1030 = vunpack.c.h.b16 %v724
        %v1031 = vunpack.c.l.b16 %v725
        %v1032 = vunpack.c.h.b16 %v725
        %v1033 = vunpack.c.l.b16 %v726
        %v1034 = vunpack.c.h.b16 %v726
        %v1035 = vunpack.c.l.b16 %v727
        %v1036 = vunpack.c.h.b16 %v727
        %v1037 = vunpack.c.l.b16 %v728
        %v1038 = vunpack.c.h.b16 %v728
        %v1039 = vunpack.c.l.b16 %v729
        %v1040 = vunpack.c.h.b16 %v729
        %v1041 = vunpack.c.l.b16 %v730
        %v1042 = vunpack.c.h.b16 %v730
        %v1043 = vunpack.c.l.b16 %v731
        %v1044 = vunpack.c.h.b16 %v731
        %v1045 = vunpack.c.l.b16 %v732
        %v1046 = vunpack.c.h.b16 %v732
        %v1047 = vunpack.c.l.b16 %v733
        %v1048 = vunpack.c.h.b16 %v733
        %v1049 = vunpack.c.l.b16 %v734
        %v1050 = vunpack.c.h.b16 %v734
        %v1051 = vunpack.c.l.b16 %v735
        %v1052 = vunpack.c.h.b16 %v735
        %v1053 = vunpack.c.l.b16 %v736
        %v1054 = vunpack.c.h.b16 %v736
        %v1055 = vunpack.c.l.b16 %v737
        %v1056 = vunpack.c.h.b16 %v737
        %v1057 = vunpack.c.l.b16 %v738
        %v1058 = vunpack.c.h.b16 %v738
        %v1059 = vunpack.c.l.b16 %v739
        %v1060 = vunpack.c.h.b16 %v739
        %v1061 = vunpack.c.l.b16 %v740
        %v1062 = vunpack.c.h.b16 %v740
        %v1063 = vunpack.c.l.b16 %v741
        %v1064 = vunpack.c.h.b16 %v741
        %v1065 = vunpack.c.l.b16 %v742
        %v1066 = vunpack.c.h.b16 %v742
        %v1067 = vunpack.c.l.b16 %v743
        %v1068 = vunpack.c.h.b16 %v743
        %v1069 = vunpack.c.l.b16 %v744
        %v1070 = vunpack.c.h.b16 %v744
        %v1071 = vunpack.c.l.b16 %v745
        %v1072 = vunpack.c.h.b16 %v745
        %v1073 = vunpack.c.l.b16 %v746
        %v1074 = vunpack.c.h.b16 %v746
        %v1075 = vunpack.c.l.b16 %v747
        %v1076 = vunpack.c.h.b16 %v747
        %v1077 = vunpack.c.l.b16 %v748
        %v1078 = vunpack.c.h.b16 %v748
        %v1079 = vunpack.c.l.b16 %v749
        %v1080 = vunpack.c.h.b16 %v749
        %v1081 = vunpack.c.l.b16 %v750
        %v1082 = vunpack.c.h.b16 %v750
        %v1083 = vunpack.c.l.b16 %v751
        %v1084 = vunpack.c.h.b16 %v751
        %v1085 = vunpack.c.l.b16 %v752
        %v1086 = vunpack.c.h.b16 %v752
        %v1087 = vunpack.c.l.b16 %v753
        %v1088 = vunpack.c.h.b16 %v753
        %v1089 = vunpack.c.l.b16 %v754
        %v1090 = vunpack.c.h.b16 %v754
        %v1091 = vunpack.c.l.b16 %v755
        %v1092 = vunpack.c.h.b16 %v755
        %v1093 = vunpack.c.l.b16 %v756
        %v1094 = vunpack.c.h.b16 %v756
        %v1095 = vunpack.c.l.b16 %v757
        %v1096 = vunpack.c.h.b16 %v757
        %v1097 = vunpack.c.l.b16 %v758
        %v1098 = vunpack.c.h.b16 %v758
        %v1099 = vunpack.c.l.b16 %v759
        %v1100 = vunpack.c.h.b16 %v759
        %v1101 = vunpack.c.l.b16 %v760
        %v1102 = vunpack.c.h.b16 %v760
        %v1103 = vunpack.c.l.b16 %v761
        %v1104 = vunpack.c.h.b16 %v761
        %v1105 = vunpack.c.l.b16 %v762
        %v1106 = vunpack.c.h.b16 %v762
        %v1107 = vunpack.c.l.b16 %v763
        %v1108 = vunpack.c.h.b16 %v763
        %v1109 = vunpack.c.l.b16 %v764
        %v1110 = vunpack.c.h.b16 %v764
        %v1111 = vunpack.c.l.b16 %v765
        %v1112 = vunpack.c.h.b16 %v765
        %v1113 = vunpack.c.l.b16 %v766
        %v1114 = vunpack.c.h.b16 %v766
        %v1115 = vunpack.c.l.b16 %v767
        %v1116 = vunpack.c.h.b16 %v767
        %v1117 = vunpack.c.l.b16 %v768
        %v1118 = vunpack.c.h.b16 %v768
        %v1119 = vunpack.c.l.b16 %v769
        %v1120 = vunpack.c.h.b16 %v769
        %v1121 = vunpack.c.l.b16 %v770
        %v1122 = vunpack.c.h.b16 %v770
        %v1123 = vunpack.c.l.b16 %v771
        %v1124 = vunpack.c.h.b16 %v771
        %v1125 = vunpack.c.l.b16 %v772
        %v1126 = vunpack.c.h.b16 %v772
        %v1127 = vunpack.c.l.b16 %v773
        %v1128 = vunpack.c.h.b16 %v773
        %v1129 = vunpack.c.l.b16 %v774
        %v1130 = vunpack.c.h.b16 %v774
        %v1131 = vunpack.c.l.b16 %v775
        %v1132 = vunpack.c.h.b16 %v775
        %v1133 = vunpack.c.l.b16 %v776
        %v1134 = vunpack.c.h.b16 %v776
        %v1135 = vunpack.c.l.b16 %v777
        %v1136 = vunpack.c.h.b16 %v777
        %v1137 = vunpack.c.l.b16 %v778
        %v1138 = vunpack.c.h.b16 %v778
        %v1139 = vunpack.c.l.b16 %v779
        %v1140 = vunpack.c.h.b16 %v779
        %v1141 = vunpack.c.l.b16 %v780
        %v1142 = vunpack.c.h.b16 %v780
        %v1143 = vunpack.c.l.b16 %v781
        %v1144 = vunpack.c.h.b16 %v781
        %v1145 = vunpack.c.l.b16 %v782
        %v1146 = vunpack.c.h.b16 %v782
        %v1147 = vunpack.c.l.b16 %v783
        %v1148 = vunpack.c.h.b16 %v783
        %v1149 = vunpack.c.l.b16 %v784
        %v1150 = vunpack.c.h.b16 %v784
        %v1151 = vunpack.c.l.b16 %v785
        %v1152 = vunpack.c.h.b16 %v785
        %v1153 = vunpack.c.l.b16 %v786
        %v1154 = vunpack.c.h.b16 %v786
        %v1155 = vunpack.c.l.b16 %v787
        %v1156 = vunpack.c.h.b16 %v787
        %v1157 = vunpack.c.l.b16 %v788
        %v1158 = vunpack.c.h.b16 %v788
        %v1159 = vunpack.c.l.b16 %v789
        %v1160 = vunpack.c.h.b16 %v789
        %v1161 = vunpack.c.l.b16 %v790
        %v1162 = vunpack.c.h.b16 %v790
        %v1163 = vunpack.c.l.b16 %v791
        %v1164 = vunpack.c.h.b16 %v791
        %v1165 = vunpack.c.l.b16 %v792
        %v1166 = vunpack.c.h.b16 %v792
        %v1167 = vunpack.c.l.b16 %v793
        %v1168 = vunpack.c.h.b16 %v793
        %v1169 = vunpack.c.l.b16 %v794
        %v1170 = vunpack.c.h.b16 %v794
        %v1171 = vunpack.c.l.b16 %v795
        %v1172 = vunpack.c.h.b16 %v795
        %v1173 = vunpack.c.l.b16 %v796
        %v1174 = vunpack.c.h.b16 %v796
        %v1175 = vunpack.c.l.b16 %v797
        %v1176 = vunpack.c.h.b16 %v797
        %v1177 = vunpack.c.l.b16 %v798
        %v1178 = vunpack.c.h.b16 %v798
        %v1179 = vunpack.c.l.b16 %v799
        %v1180 = vunpack.c.h.b16 %v799
        %v1181 = vunpack.c.l.b16 %v800
        %v1182 = vunpack.c.h.b16 %v800
        %v1183 = vunpack.c.l.b16 %v801
        %v1184 = vunpack.c.h.b16 %v801
        %v1185 = vunpack.c.l.b16 %v802
        %v1186 = vunpack.c.h.b16 %v802
        %v1187 = vunpack.c.l.b16 %v803
        %v1188 = vunpack.c.h.b16 %v803
        %v1189 = vunpack.c.l.b16 %v804
        %v1190 = vunpack.c.h.b16 %v804
        %v1191 = vunpack.c.l.b16 %v805
        %v1192 = vunpack.c.h.b16 %v805
        %v1193 = vunpack.c.l.b16 %v806
        %v1194 = vunpack.c.h.b16 %v806
        %v1195 = vunpack.c.l.b16 %v807
        %v1196 = vunpack.c.h.b16 %v807
        %v1197 = vunpack.c.l.b16 %v808
        %v1198 = vunpack.c.h.b16 %v808
        %v1199 = vunpack.c.l.b16 %v809
        %v1200 = vunpack.c.h.b16 %v809
        %v1201 = vunpack.c.l.b16 %v810
        %v1202 = vunpack.c.h.b16 %v810
        %v1203 = vunpack.c.l.b16 %v811
        %v1204 = vunpack.c.h.b16 %v811
        %v1205 = vunpack.c.l.b16 %v812
        %v1206 = vunpack.c.h.b16 %v812
        %v1207 = vunpack.c.l.b16 %v813
        %v1208 = vunpack.c.h.b16 %v813
        %v1209 = vunpack.c.l.b16 %v814
        %v1210 = vunpack.c.h.b16 %v814
        %v1211 = vunpack.c.l.b16 %v815
        %v1212 = vunpack.c.h.b16 %v815
        %v1213 = vunpack.c.l.b16 %v816
        %v1214 = vunpack.c.h.b16 %v816
        %v1215 = vunpack.c.l.b16 %v817
        %v1216 = vunpack.c.h.b16 %v817
        %v1217 = vunpack.c.l.b16 %v818
        %v1218 = vunpack.c.h.b16 %v818
        %v1219 = vunpack.c.l.b16 %v819
        %v1220 = vunpack.c.h.b16 %v819
        %v1221 = vunpack.c.l.b16 %v820
        %v1222 = vunpack.c.h.b16 %v820
        %v1223 = vunpack.c.l.b16 %v821
        %v1224 = vunpack.c.h.b16 %v821
        %v1225 = vunpack.c.l.b16 %v822
        %v1226 = vunpack.c.h.b16 %v822
        %v1227 = vunpack.c.l.b16 %v823
        %v1228 = vunpack.c.h.b16 %v823
        %v1229 = vunpack.c.l.b16 %v824
        %v1230 = vunpack.c.h.b16 %v824
        %v1231 = vunpack.c.l.b16 %v825
        %v1232 = vunpack.c.h.b16 %v825
        %v1233 = vunpack.c.l.b16 %v826
        %v1234 = vunpack.c.h.b16 %v826
        %v1235 = vunpack.c.l.b16 %v827
        %v1236 = vunpack.c.h.b16 %v827
        %v1237 = vunpack.c.l.b16 %v828
        %v1238 = vunpack.c.h.b16 %v828
        %v1239 = vunpack.c.l.b16 %v829
        %v1240 = vunpack.c.h.b16 %v829
        %v1241 = vunpack.c.l.b16 %v830
        %v1242 = vunpack.c.h.b16 %v830
        %v1243 = vunpack.c.l.b16 %v831
        %v1244 = vunpack.c.h.b16 %v831
        %v1245 = vunpack.c.l.b16 %v832
        %v1246 = vunpack.c.h.b16 %v832
        %v1247 = vunpack.c.l.b16 %v833
        %v1248 = vunpack.c.h.b16 %v833
        %v1249 = vunpack.c.l.b16 %v834
        %v1250 = vunpack.c.h.b16 %v834
        %v1251 = vunpack.c.l.b16 %v835
        %v1252 = vunpack.c.h.b16 %v835
        %v1253 = vunpack.c.l.b16 %v836
        %v1254 = vunpack.c.h.b16 %v836
        %v1255 = vunpack.c.l.b16 %v837
        %v1256 = vunpack.c.h.b16 %v837
        %v1257 = vunpack.c.l.b16 %v838
        %v1258 = vunpack.c.h.b16 %v838
        %v1259 = vunpack.c.l.b16 %v839
        %v1260 = vunpack.c.h.b16 %v839
        %v1261 = vunpack.c.l.b16 %v840
        %v1262 = vunpack.c.h.b16 %v840
        %v1263 = vunpack.c.l.b16 %v841
        %v1264 = vunpack.c.h.b16 %v841
        %v1265 = vunpack.c.l.b16 %v842
        %v1266 = vunpack.c.h.b16 %v842
        %v1267 = vunpack.c.l.b16 %v843
        %v1268 = vunpack.c.h.b16 %v843
        %v1269 = vunpack.c.l.b16 %v844
        %v1270 = vunpack.c.h.b16 %v844
        %v1271 = vunpack.c.l.b16 %v845
        %v1272 = vunpack.c.h.b16 %v845
        %v1273 = vunpack.c.l.b16 %v846
        %v1274 = vunpack.c.h.b16 %v846
        %v1275 = vpack.c.b16 %v1027, %v1019
        %v1276 = vpack.c.b16 %v1028, %v1020
        %v1277 = vpack.c.b16 %v1029, %v1021
        %v1278 = vpack.c.b16 %v1030, %v1022
        %v1279 = vpack.c.b16 %v1031, %v1023
        %v1280 = vpack.c.b16 %v1032, %v1024
        %v1281 = vpack.c.b16 %v1033, %v1025
        %v1282 = vpack.c.b16 %v1034, %v1026
        %v1283 = vpack.c.b16 %v1043, %v1035
        %v1284 = vpack.c.b16 %v1044, %v1036
        %v1285 = vpack.c.b16 %v1045, %v1037
        %v1286 = vpack.c.b16 %v1046, %v1038
        %v1287 = vpack.c.b16 %v1047, %v1039
        %v1288 = vpack.c.b16 %v1048, %v1040
        %v1289 = vpack.c.b16 %v1049, %v1041
        %v1290 = vpack.c.b16 %v1050, %v1042
        %v1291 = vpack.c.b16 %v1059, %v1051
        %v1292 = vpack.c.b16 %v1060, %v1052
        %v1293 = vpack.c.b16 %v1061, %v1053
        %v1294 = vpack.c.b16 %v1062, %v1054
        %v1295 = vpack.c.b16 %v1063, %v1055
        %v1296 = vpack.c.b16 %v1064, %v1056
        %v1297 = vpack.c.b16 %v1065, %v1057
        %v1298 = vpack.c.b16 %v1066, %v1058
        %v1299 = vpack.c.b16 %v1075, %v1067
        %v1300 = vpack.c.b16 %v1076, %v1068
        %v1301 = vpack.c.b16 %v1077, %v1069
        %v1302 = vpack.c.b16 %v1078, %v1070
        %v1303 = vpack.c.b16 %v1079, %v1071
        %v1304 = vpack.c.b16 %v1080, %v1072
        %v1305 = vpack.c.b16 %v1081, %v1073
        %v1306 = vpack.c.b16 %v1082, %v1074
        %v1307 = vpack.c.b16 %v1091, %v1083
        %v1308 = vpack.c.b16 %v1092, %v1084
        %v1309 = vpack.c.b16 %v1093, %v1085
        %v1310 = vpack.c.b16 %v1094, %v1086
        %v1311 = vpack.c.b16 %v1095, %v1087
        %v1312 = vpack.c.b16 %v1096, %v1088
        %v1313 = vpack.c.b16 %v1097, %v1089
        %v1314 = vpack.c.b16 %v1098, %v1090
        %v1315 = vpack.c.b16 %v1107, %v1099
        %v1316 = vpack.c.b16 %v1108, %v1100
        %v1317 = vpack.c.b16 %v1109, %v1101
        %v1318 = vpack.c.b16 %v1110, %v1102
        %v1319 = vpack.c.b16 %v1111, %v1103
        %v1320 = vpack.c.b16 %v1112, %v1104
        %v1321 = vpack.c.b16 %v1113, %v1105
        %v1322 = vpack.c.b16 %v1114, %v1106
        %v1323 = vpack.c.b16 %v1123, %v1115
        %v1324 = vpack.c.b16 %v1124, %v1116
        %v1325 = vpack.c.b16 %v1125, %v1117
        %v1326 = vpack.c.b16 %v1126, %v1118
        %v1327 = vpack.c.b16 %v1127, %v1119
        %v1328 = vpack.c.b16 %v1128, %v1120
        %v1329 = vpack.c.b16 %v1129, %v1121
        %v1330 = vpack.c.b16 %v1130, %v1122
        %v1331 = vpack.c.b16 %v1139, %v1131
        %v1332 = vpack.c.b16 %v1140, %v1132
        %v1333 = vpack.c.b16 %v1141, %v1133
        %v1334 = vpack.c.b16 %v1142, %v1134
        %v1335 = vpack.c.b16 %v1143, %v1135
        %v1336 = vpack.c.b16 %v1144, %v1136
        %v1337 = vpack.c.b16 %v1145, %v1137
        %v1338 = vpack.c.b16 %v1146, %v1138
        %v1339 = vpack.c.b16 %v1155, %v1147
        %v1340 = vpack.c.b16 %v1156, %v1148
        %v1341 = vpack.c.b16 %v1157, %v1149
        %v1342 = vpack.c.b16 %v1158, %v1150
        %v1343 = vpack.c.b16 %v1159, %v1151
        %v1344 = vpack.c.b16 %v1160, %v1152
        %v1345 = vpack.c.b16 %v1161, %v1153
        %v1346 = vpack.c.b16 %v1162, %v1154
        %v1347 = vpack.c.b16 %v1171, %v1163
        %v1348 = vpack.c.b16 %v1172, %v1164
        %v1349 = vpack.c.b16 %v1173, %v1165
        %v1350 = vpack.c.b16 %v1174, %v1166
        %v1351 = vpack.c.b16 %v1175, %v1167
        %v1352 = vpack.c.b16 %v1176, %v1168
        %v1353 = vpack.c.b16 %v1177, %v1169
        %v1354 = vpack.c.b16 %v1178, %v1170
        %v1355 = vpack.c.b16 %v1187, %v1179
        %v1356 = vpack.c.b16 %v1188, %v1180
        %v1357 = vpack.c.b16 %v1189, %v1181
        %v1358 = vpack.c.b16 %v1190, %v1182
        %v1359 = vpack.c.b16 %v1191, %v1183
        %v1360 = vpack.c.b16 %v1192, %v1184
        %v1361 = vpack.c.b16 %v1193, %v1185
        %v1362 = vpack.c.b16 %v1194, %v1186
        %v1363 = vpack.c.b16 %v1203, %v1195
        %v1364 = vpack.c.b16 %v1204, %v1196
        %v1365 = vpack.c.b16 %v1205, %v1197
        %v1366 = vpack.c.b16 %v1206, %v1198
        %v1367 = vpack.c.b16 %v1207, %v1199
        %v1368 = vpack.c.b16 %v1208, %v1200
        %v1369 = vpack.c.b16 %v1209, %v1201
        %v1370 = vpack.c.b16 %v1210, %v1202
        %v1371 = vpack.c.b16 %v1219, %v1211
        %v1372 = vpack.c.b16 %v1220, %v1212
        %v1373 = vpack.c.b16 %v1221, %v1213
        %v1374 = vpack.c.b16 %v1222, %v1214
        %v1375 = vpack.c.b16 %v1223, %v1215
        %v1376 = vpack.c.b16 %v1224, %v1216
        %v1377 = vpack.c.b16 %v1225, %v1217
        %v1378 = vpack.c.b16 %v1226, %v1218
        %v1379 = vpack.c.b16 %v1235, %v1227
        %v1380 = vpack.c.b16 %v1236, %v1228
        %v1381 = vpack.c.b16 %v1237, %v1229
        %v1382 = vpack.c.b16 %v1238, %v1230
        %v1383 = vpack.c.b16 %v1239, %v1231
        %v1384 = vpack.c.b16 %v1240, %v1232
        %v1385 = vpack.c.b16 %v1241, %v1233
        %v1386 = vpack.c.b16 %v1242, %v1234
        %v1387 = vpack.c.b16 %v1251, %v1243
        %v1388 = vpack.c.b16 %v1252, %v1244
        %v1389 = vpack.c.b16 %v1253, %v1245
        %v1390 = vpack.c.b16 %v1254, %v1246
        %v1391 = vpack.c.b16 %v1255, %v1247
        %v1392 = vpack.c.b16 %v1256, %v1248
        %v1393 = vpack.c.b16 %v1257, %v1249
        %v1394 = vpack.c.b16 %v1258, %v1250
        %v1395 = vpack.c.b16 %v1267, %v1259
        %v1396 = vpack.c.b16 %v1268, %v1260
        %v1397 = vpack.c.b16 %v1269, %v1261
        %v1398 = vpack.c.b16 %v1270, %v1262
        %v1399 = vpack.c.b16 %v1271, %v1263
        %v1400 = vpack.c.b16 %v1272, %v1264
        %v1401 = vpack.c.b16 %v1273, %v1265
        %v1402 = vpack.c.b16 %v1274, %v1266
        %1531 = vmatpush.bf16.msra.mxu0 %v1331
        %1532 = vmatpush.bf16.msra.mxu0 %v1323
        %1533 = vmatpush.bf16.msra.mxu0 %v1315
        %1534 = vmatpush.bf16.msra.mxu0 %v1307
        %1535 = vmatpush.bf16.msra.mxu0 %v1299
        %1536 = vmatpush.bf16.msra.mxu0 %v1291
        %1537 = vmatpush.bf16.msra.mxu0 %v1283
        %1538 = vmatpush.bf16.msra.mxu0 %v1275
        %1539 = vmatmul.bf16.gmra.mxu0 %v883
        %v1540 = vpop.f32.mrf.mxu0
        %v1541 = vadd.f32 %v854, %v1540
        %v1542 = vpop.f32.mrf.mxu0
        %v1543 = vadd.f32 %v859, %v1542
        %1544 = vmatmul.bf16.gmra.mxu0 %v885
        %v1545 = vpop.f32.mrf.mxu0
        %v1546 = vadd.f32 %v864, %v1545
        %v1547 = vpop.f32.mrf.mxu0
        %v1548 = vadd.f32 %v869, %v1547
        %1549 = vdwg.mxu0
        %1550 = vmatpush.bf16.msra.mxu0 %v1395
        %1551 = vmatpush.bf16.msra.mxu0 %v1387
        %1552 = vmatpush.bf16.msra.mxu0 %v1379
        %1553 = vmatpush.bf16.msra.mxu0 %v1371
        %1554 = vmatpush.bf16.msra.mxu0 %v1363
        %1555 = vmatpush.bf16.msra.mxu0 %v1355
        %1556 = vmatpush.bf16.msra.mxu0 %v1347
        %1557 = vmatpush.bf16.msra.mxu0 %v1339
        %1558 = vmatmul.bf16.gmra.mxu0 %v884
        %v1559 = vpop.f32.mrf.mxu0
        %v1560 = vadd.f32 %v1541, %v1559
        %v1561 = vpop.f32.mrf.mxu0
        %v1562 = vadd.f32 %v1543, %v1561
        %1563 = vmatmul.bf16.gmra.mxu0 %v886
        %v1564 = vpop.f32.mrf.mxu0
        %v1565 = vadd.f32 %v1546, %v1564
        %v1566 = vpop.f32.mrf.mxu0
        %v1567 = vadd.f32 %v1548, %v1566
        %1568 = vdwg.mxu0
        %1569 = vmatpush.bf16.msra.mxu0 %v1332
        %1570 = vmatpush.bf16.msra.mxu0 %v1324
        %1571 = vmatpush.bf16.msra.mxu0 %v1316
        %1572 = vmatpush.bf16.msra.mxu0 %v1308
        %1573 = vmatpush.bf16.msra.mxu0 %v1300
        %1574 = vmatpush.bf16.msra.mxu0 %v1292
        %1575 = vmatpush.bf16.msra.mxu0 %v1284
        %1576 = vmatpush.bf16.msra.mxu0 %v1276
        %1577 = vmatmul.bf16.gmra.mxu0 %v883
        %v1578 = vpop.f32.mrf.mxu0
        %v1579 = vadd.f32 %v854, %v1578
        %v1580 = vpop.f32.mrf.mxu0
        %v1581 = vadd.f32 %v859, %v1580
        %1582 = vmatmul.bf16.gmra.mxu0 %v885
        %v1583 = vpop.f32.mrf.mxu0
        %v1584 = vadd.f32 %v864, %v1583
        %v1585 = vpop.f32.mrf.mxu0
        %v1586 = vadd.f32 %v869, %v1585
        %1587 = vdwg.mxu0
        %1588 = vmatpush.bf16.msra.mxu0 %v1396
        %1589 = vmatpush.bf16.msra.mxu0 %v1388
        %1590 = vmatpush.bf16.msra.mxu0 %v1380
        %1591 = vmatpush.bf16.msra.mxu0 %v1372
        %1592 = vmatpush.bf16.msra.mxu0 %v1364
        %1593 = vmatpush.bf16.msra.mxu0 %v1356
        %1594 = vmatpush.bf16.msra.mxu0 %v1348
        %1595 = vmatpush.bf16.msra.mxu0 %v1340
        %1596 = vmatmul.bf16.gmra.mxu0 %v884
        %v1597 = vpop.f32.mrf.mxu0
        %v1598 = vadd.f32 %v1579, %v1597
        %v1599 = vpop.f32.mrf.mxu0
        %v1600 = vadd.f32 %v1581, %v1599
        %1601 = vmatmul.bf16.gmra.mxu0 %v886
        %v1602 = vpop.f32.mrf.mxu0
        %v1603 = vadd.f32 %v1584, %v1602
        %v1604 = vpop.f32.mrf.mxu0
        %v1605 = vadd.f32 %v1586, %v1604
        %1606 = vdwg.mxu0
        %1607 = vmatpush.bf16.msra.mxu0 %v1333
        %1608 = vmatpush.bf16.msra.mxu0 %v1325
        %1609 = vmatpush.bf16.msra.mxu0 %v1317
        %1610 = vmatpush.bf16.msra.mxu0 %v1309
        %1611 = vmatpush.bf16.msra.mxu0 %v1301
        %1612 = vmatpush.bf16.msra.mxu0 %v1293
        %1613 = vmatpush.bf16.msra.mxu0 %v1285
        %1614 = vmatpush.bf16.msra.mxu0 %v1277
        %1615 = vmatmul.bf16.gmra.mxu0 %v883
        %v1616 = vpop.f32.mrf.mxu0
        %v1617 = vadd.f32 %v854, %v1616
        %v1618 = vpop.f32.mrf.mxu0
        %v1619 = vadd.f32 %v859, %v1618
        %1620 = vmatmul.bf16.gmra.mxu0 %v885
        %v1621 = vpop.f32.mrf.mxu0
        %v1622 = vadd.f32 %v864, %v1621
        %v1623 = vpop.f32.mrf.mxu0
        %v1624 = vadd.f32 %v869, %v1623
        %1625 = vdwg.mxu0
        %1626 = vmatpush.bf16.msra.mxu0 %v1397
        %1627 = vmatpush.bf16.msra.mxu0 %v1389
        %1628 = vmatpush.bf16.msra.mxu0 %v1381
        %1629 = vmatpush.bf16.msra.mxu0 %v1373
        %1630 = vmatpush.bf16.msra.mxu0 %v1365
        %1631 = vmatpush.bf16.msra.mxu0 %v1357
        %1632 = vmatpush.bf16.msra.mxu0 %v1349
        %1633 = vmatpush.bf16.msra.mxu0 %v1341
        %1634 = vmatmul.bf16.gmra.mxu0 %v884
        %v1635 = vpop.f32.mrf.mxu0
        %v1636 = vadd.f32 %v1617, %v1635
        %v1637 = vpop.f32.mrf.mxu0
        %v1638 = vadd.f32 %v1619, %v1637
        %1639 = vmatmul.bf16.gmra.mxu0 %v886
        %v1640 = vpop.f32.mrf.mxu0
        %v1641 = vadd.f32 %v1622, %v1640
        %v1642 = vpop.f32.mrf.mxu0
        %v1643 = vadd.f32 %v1624, %v1642
        %1644 = vdwg.mxu0
        %1645 = vmatpush.bf16.msra.mxu0 %v1334
        %1646 = vmatpush.bf16.msra.mxu0 %v1326
        %1647 = vmatpush.bf16.msra.mxu0 %v1318
        %1648 = vmatpush.bf16.msra.mxu0 %v1310
        %1649 = vmatpush.bf16.msra.mxu0 %v1302
        %1650 = vmatpush.bf16.msra.mxu0 %v1294
        %1651 = vmatpush.bf16.msra.mxu0 %v1286
        %1652 = vmatpush.bf16.msra.mxu0 %v1278
        %1653 = vmatmul.bf16.gmra.mxu0 %v883
        %v1654 = vpop.f32.mrf.mxu0
        %v1655 = vadd.f32 %v854, %v1654
        %v1656 = vpop.f32.mrf.mxu0
        %v1657 = vadd.f32 %v859, %v1656
        %1658 = vmatmul.bf16.gmra.mxu0 %v885
        %v1659 = vpop.f32.mrf.mxu0
        %v1660 = vadd.f32 %v864, %v1659
        %v1661 = vpop.f32.mrf.mxu0
        %v1662 = vadd.f32 %v869, %v1661
        %1663 = vdwg.mxu0
        %1664 = vmatpush.bf16.msra.mxu0 %v1398
        %1665 = vmatpush.bf16.msra.mxu0 %v1390
        %1666 = vmatpush.bf16.msra.mxu0 %v1382
        %1667 = vmatpush.bf16.msra.mxu0 %v1374
        %1668 = vmatpush.bf16.msra.mxu0 %v1366
        %1669 = vmatpush.bf16.msra.mxu0 %v1358
        %1670 = vmatpush.bf16.msra.mxu0 %v1350
        %1671 = vmatpush.bf16.msra.mxu0 %v1342
        %1672 = vmatmul.bf16.gmra.mxu0 %v884
        %v1673 = vpop.f32.mrf.mxu0
        %v1674 = vadd.f32 %v1655, %v1673
        %v1675 = vpop.f32.mrf.mxu0
        %v1676 = vadd.f32 %v1657, %v1675
        %1677 = vmatmul.bf16.gmra.mxu0 %v886
        %v1678 = vpop.f32.mrf.mxu0
        %v1679 = vadd.f32 %v1660, %v1678
        %v1680 = vpop.f32.mrf.mxu0
        %v1681 = vadd.f32 %v1662, %v1680
        %1682 = vdwg.mxu0
        %1683 = vmatpush.bf16.msra.mxu0 %v1335
        %1684 = vmatpush.bf16.msra.mxu0 %v1327
        %1685 = vmatpush.bf16.msra.mxu0 %v1319
        %1686 = vmatpush.bf16.msra.mxu0 %v1311
        %1687 = vmatpush.bf16.msra.mxu0 %v1303
        %1688 = vmatpush.bf16.msra.mxu0 %v1295
        %1689 = vmatpush.bf16.msra.mxu0 %v1287
        %1690 = vmatpush.bf16.msra.mxu0 %v1279
        %1691 = vmatmul.bf16.gmra.mxu0 %v883
        %v1692 = vpop.f32.mrf.mxu0
        %v1693 = vadd.f32 %v854, %v1692
        %v1694 = vpop.f32.mrf.mxu0
        %v1695 = vadd.f32 %v859, %v1694
        %1696 = vmatmul.bf16.gmra.mxu0 %v885
        %v1697 = vpop.f32.mrf.mxu0
        %v1698 = vadd.f32 %v864, %v1697
        %v1699 = vpop.f32.mrf.mxu0
        %v1700 = vadd.f32 %v869, %v1699
        %1701 = vdwg.mxu0
        %1702 = vmatpush.bf16.msra.mxu0 %v1399
        %1703 = vmatpush.bf16.msra.mxu0 %v1391
        %1704 = vmatpush.bf16.msra.mxu0 %v1383
        %1705 = vmatpush.bf16.msra.mxu0 %v1375
        %1706 = vmatpush.bf16.msra.mxu0 %v1367
        %1707 = vmatpush.bf16.msra.mxu0 %v1359
        %1708 = vmatpush.bf16.msra.mxu0 %v1351
        %1709 = vmatpush.bf16.msra.mxu0 %v1343
        %1710 = vmatmul.bf16.gmra.mxu0 %v884
        %v1711 = vpop.f32.mrf.mxu0
        %v1712 = vadd.f32 %v1693, %v1711
        %v1713 = vpop.f32.mrf.mxu0
        %v1714 = vadd.f32 %v1695, %v1713
        %1715 = vmatmul.bf16.gmra.mxu0 %v886
        %v1716 = vpop.f32.mrf.mxu0
        %v1717 = vadd.f32 %v1698, %v1716
        %v1718 = vpop.f32.mrf.mxu0
        %v1719 = vadd.f32 %v1700, %v1718
        %1720 = vdwg.mxu0
        %1721 = vmatpush.bf16.msra.mxu0 %v1336
        %1722 = vmatpush.bf16.msra.mxu0 %v1328
        %1723 = vmatpush.bf16.msra.mxu0 %v1320
        %1724 = vmatpush.bf16.msra.mxu0 %v1312
        %1725 = vmatpush.bf16.msra.mxu0 %v1304
        %1726 = vmatpush.bf16.msra.mxu0 %v1296
        %1727 = vmatpush.bf16.msra.mxu0 %v1288
        %1728 = vmatpush.bf16.msra.mxu0 %v1280
        %1729 = vmatmul.bf16.gmra.mxu0 %v883
        %v1730 = vpop.f32.mrf.mxu0
        %v1731 = vadd.f32 %v854, %v1730
        %v1732 = vpop.f32.mrf.mxu0
        %v1733 = vadd.f32 %v859, %v1732
        %1734 = vmatmul.bf16.gmra.mxu0 %v885
        %v1735 = vpop.f32.mrf.mxu0
        %v1736 = vadd.f32 %v864, %v1735
        %v1737 = vpop.f32.mrf.mxu0
        %v1738 = vadd.f32 %v869, %v1737
        %1739 = vdwg.mxu0
        %1740 = vmatpush.bf16.msra.mxu0 %v1400
        %1741 = vmatpush.bf16.msra.mxu0 %v1392
        %1742 = vmatpush.bf16.msra.mxu0 %v1384
        %1743 = vmatpush.bf16.msra.mxu0 %v1376
        %1744 = vmatpush.bf16.msra.mxu0 %v1368
        %1745 = vmatpush.bf16.msra.mxu0 %v1360
        %1746 = vmatpush.bf16.msra.mxu0 %v1352
        %1747 = vmatpush.bf16.msra.mxu0 %v1344
        %1748 = vmatmul.bf16.gmra.mxu0 %v884
        %v1749 = vpop.f32.mrf.mxu0
        %v1750 = vadd.f32 %v1731, %v1749
        %v1751 = vpop.f32.mrf.mxu0
        %v1752 = vadd.f32 %v1733, %v1751
        %1753 = vmatmul.bf16.gmra.mxu0 %v886
        %v1754 = vpop.f32.mrf.mxu0
        %v1755 = vadd.f32 %v1736, %v1754
        %v1756 = vpop.f32.mrf.mxu0
        %v1757 = vadd.f32 %v1738, %v1756
        %1758 = vdwg.mxu0
        %1759 = vmatpush.bf16.msra.mxu0 %v1337
        %1760 = vmatpush.bf16.msra.mxu0 %v1329
        %1761 = vmatpush.bf16.msra.mxu0 %v1321
        %1762 = vmatpush.bf16.msra.mxu0 %v1313
        %1763 = vmatpush.bf16.msra.mxu0 %v1305
        %1764 = vmatpush.bf16.msra.mxu0 %v1297
        %1765 = vmatpush.bf16.msra.mxu0 %v1289
        %1766 = vmatpush.bf16.msra.mxu0 %v1281
        %1767 = vmatmul.bf16.gmra.mxu0 %v883
        %v1768 = vpop.f32.mrf.mxu0
        %v1769 = vadd.f32 %v854, %v1768
        %v1770 = vpop.f32.mrf.mxu0
        %v1771 = vadd.f32 %v859, %v1770
        %1772 = vmatmul.bf16.gmra.mxu0 %v885
        %v1773 = vpop.f32.mrf.mxu0
        %v1774 = vadd.f32 %v864, %v1773
        %v1775 = vpop.f32.mrf.mxu0
        %v1776 = vadd.f32 %v869, %v1775
        %1777 = vdwg.mxu0
        %1778 = vmatpush.bf16.msra.mxu0 %v1401
        %1779 = vmatpush.bf16.msra.mxu0 %v1393
        %1780 = vmatpush.bf16.msra.mxu0 %v1385
        %1781 = vmatpush.bf16.msra.mxu0 %v1377
        %1782 = vmatpush.bf16.msra.mxu0 %v1369
        %1783 = vmatpush.bf16.msra.mxu0 %v1361
        %1784 = vmatpush.bf16.msra.mxu0 %v1353
        %1785 = vmatpush.bf16.msra.mxu0 %v1345
        %1786 = vmatmul.bf16.gmra.mxu0 %v884
        %v1787 = vpop.f32.mrf.mxu0
        %v1788 = vadd.f32 %v1769, %v1787
        %v1789 = vpop.f32.mrf.mxu0
        %v1790 = vadd.f32 %v1771, %v1789
        %1791 = vmatmul.bf16.gmra.mxu0 %v886
        %v1792 = vpop.f32.mrf.mxu0
        %v1793 = vadd.f32 %v1774, %v1792
        %v1794 = vpop.f32.mrf.mxu0
        %v1795 = vadd.f32 %v1776, %v1794
        %1796 = vdwg.mxu0
        %1797 = vmatpush.bf16.msra.mxu0 %v1338
        %1798 = vmatpush.bf16.msra.mxu0 %v1330
        %1799 = vmatpush.bf16.msra.mxu0 %v1322
        %1800 = vmatpush.bf16.msra.mxu0 %v1314
        %1801 = vmatpush.bf16.msra.mxu0 %v1306
        %1802 = vmatpush.bf16.msra.mxu0 %v1298
        %1803 = vmatpush.bf16.msra.mxu0 %v1290
        %1804 = vmatpush.bf16.msra.mxu0 %v1282
        %1805 = vmatmul.bf16.gmra.mxu0 %v883
        %v1806 = vpop.f32.mrf.mxu0
        %v1807 = vadd.f32 %v854, %v1806
        %v1808 = vpop.f32.mrf.mxu0
        %v1809 = vadd.f32 %v859, %v1808
        %1810 = vmatmul.bf16.gmra.mxu0 %v885
        %v1811 = vpop.f32.mrf.mxu0
        %v1812 = vadd.f32 %v864, %v1811
        %v1813 = vpop.f32.mrf.mxu0
        %v1814 = vadd.f32 %v869, %v1813
        %1815 = vdwg.mxu0
        %1816 = vmatpush.bf16.msra.mxu0 %v1402
        %1817 = vmatpush.bf16.msra.mxu0 %v1394
        %1818 = vmatpush.bf16.msra.mxu0 %v1386
        %1819 = vmatpush.bf16.msra.mxu0 %v1378
        %1820 = vmatpush.bf16.msra.mxu0 %v1370
        %1821 = vmatpush.bf16.msra.mxu0 %v1362
        %1822 = vmatpush.bf16.msra.mxu0 %v1354
        %1823 = vmatpush.bf16.msra.mxu0 %v1346
        %1824 = vmatmul.bf16.gmra.mxu0 %v884
        %v1825 = vpop.f32.mrf.mxu0
        %v1826 = vadd.f32 %v1807, %v1825
        %v1827 = vpop.f32.mrf.mxu0
        %v1828 = vadd.f32 %v1809, %v1827
        %1829 = vmatmul.bf16.gmra.mxu0 %v886
        %v1830 = vpop.f32.mrf.mxu0
        %v1831 = vadd.f32 %v1812, %v1830
        %v1832 = vpop.f32.mrf.mxu0
        %v1833 = vadd.f32 %v1814, %v1832
        %1834 = vdwg.mxu0
        %v1835 = vmax.f32 %v1560, 0.0
        %v1836 = vmax.f32 %v1598, 0.0
        %v1837 = vmax.f32 %v1636, 0.0
        %v1838 = vmax.f32 %v1674, 0.0
        %v1839 = vmax.f32 %v1712, 0.0
        %v1840 = vmax.f32 %v1750, 0.0
        %v1841 = vmax.f32 %v1788, 0.0
        %v1842 = vmax.f32 %v1826, 0.0
        %v1843 = vmax.f32 %v1562, 0.0
        %v1844 = vmax.f32 %v1600, 0.0
        %v1845 = vmax.f32 %v1638, 0.0
        %v1846 = vmax.f32 %v1676, 0.0
        %v1847 = vmax.f32 %v1714, 0.0
        %v1848 = vmax.f32 %v1752, 0.0
        %v1849 = vmax.f32 %v1790, 0.0
        %v1850 = vmax.f32 %v1828, 0.0
        %v1851 = vmax.f32 %v1565, 0.0
        %v1852 = vmax.f32 %v1603, 0.0
        %v1853 = vmax.f32 %v1641, 0.0
        %v1854 = vmax.f32 %v1679, 0.0
        %v1855 = vmax.f32 %v1717, 0.0
        %v1856 = vmax.f32 %v1755, 0.0
        %v1857 = vmax.f32 %v1793, 0.0
        %v1858 = vmax.f32 %v1831, 0.0
        %v1859 = vmax.f32 %v1567, 0.0
        %v1860 = vmax.f32 %v1605, 0.0
        %v1861 = vmax.f32 %v1643, 0.0
        %v1862 = vmax.f32 %v1681, 0.0
        %v1863 = vmax.f32 %v1719, 0.0
        %v1864 = vmax.f32 %v1757, 0.0
        %v1865 = vmax.f32 %v1795, 0.0
        %v1866 = vmax.f32 %v1833, 0.0
        %v1867 = vld [vmem:[%s3] sm:$0xf]
        %v1868 = vld [vmem:[%s3 + $0x4] sm:$0xf]
        %v1869 = vpack.c.bf16 %v1843, %v1835
        %v1870 = vpack.c.bf16 %v1844, %v1836
        %v1871 = vpack.c.bf16 %v1845, %v1837
        %v1872 = vpack.c.bf16 %v1846, %v1838
        %v1873 = vpack.c.bf16 %v1847, %v1839
        %v1874 = vpack.c.bf16 %v1848, %v1840
        %v1875 = vpack.c.bf16 %v1849, %v1841
        %v1876 = vpack.c.bf16 %v1850, %v1842
        %v1877 = vpack.c.bf16 %v1859, %v1851
        %v1878 = vpack.c.bf16 %v1860, %v1852
        %v1879 = vpack.c.bf16 %v1861, %v1853
        %v1880 = vpack.c.bf16 %v1862, %v1854
        %v1881 = vpack.c.bf16 %v1863, %v1855
        %v1882 = vpack.c.bf16 %v1864, %v1856
        %v1883 = vpack.c.bf16 %v1865, %v1857
        %v1884 = vpack.c.bf16 %v1866, %v1858
        %v1885 = vld [vmem:[%s4] sm:$0xff]
        %v1886 = vld [vmem:[%s4 + $0x8] sm:$0xff]
        %1888 = vset.pattern.permute.xlu0 0
        %1889 = vperm.xlu0 %1888, %v1885
        %v1890 = vpop.permute.xlu0 %1889
        %1893 = vset.pattern.permute.xlu0 0
        %1894 = vperm.xlu0 %1893, %v1886
        %v1895 = vpop.permute.xlu0 %1894
        %v1899 = vunpack.c.l.b16 %v1867
        %v1900 = vunpack.c.l.b16 %v1868
        %v1901 = vpack.c.b16 %v1900, %v1899
        %vm1902 = vcmask 261120
        %v1904 = vsel %vm1902, %v1901, 0
        %1906 = vmatpush.bf16.msra.mxu0 0
        %1907 = vmatpush.bf16.msra.mxu0 0
        %1908 = vmatpush.bf16.msra.mxu0 0
        %1909 = vmatpush.bf16.msra.mxu0 0
        %1910 = vmatpush.bf16.msra.mxu0 0
        %1911 = vmatpush.bf16.msra.mxu0 0
        %1912 = vmatpush.bf16.msra.mxu0 %v1877
        %1913 = vmatpush.bf16.msra.mxu0 %v1869
        %1914 = vmatmul.bf16.gmra.mxu0 %v1904
        %v1915 = vpop.f32.mrf.mxu0
        %v1916 = vadd.f32 %v1890, %v1915
        %v1917 = vpop.f32.mrf.mxu0
        %v1918 = vadd.f32 %v1895, %v1917
        %1919 = vdwg.mxu0
        %1920 = vmatpush.bf16.msra.mxu0 0
        %1921 = vmatpush.bf16.msra.mxu0 0
        %1922 = vmatpush.bf16.msra.mxu0 0
        %1923 = vmatpush.bf16.msra.mxu0 0
        %1924 = vmatpush.bf16.msra.mxu0 0
        %1925 = vmatpush.bf16.msra.mxu0 0
        %1926 = vmatpush.bf16.msra.mxu0 %v1878
        %1927 = vmatpush.bf16.msra.mxu0 %v1870
        %1928 = vmatmul.bf16.gmra.mxu0 %v1904
        %v1929 = vpop.f32.mrf.mxu0
        %v1930 = vadd.f32 %v1890, %v1929
        %v1931 = vpop.f32.mrf.mxu0
        %v1932 = vadd.f32 %v1895, %v1931
        %1933 = vdwg.mxu0
        %1934 = vmatpush.bf16.msra.mxu0 0
        %1935 = vmatpush.bf16.msra.mxu0 0
        %1936 = vmatpush.bf16.msra.mxu0 0
        %1937 = vmatpush.bf16.msra.mxu0 0
        %1938 = vmatpush.bf16.msra.mxu0 0
        %1939 = vmatpush.bf16.msra.mxu0 0
        %1940 = vmatpush.bf16.msra.mxu0 %v1879
        %1941 = vmatpush.bf16.msra.mxu0 %v1871
        %1942 = vmatmul.bf16.gmra.mxu0 %v1904
        %v1943 = vpop.f32.mrf.mxu0
        %v1944 = vadd.f32 %v1890, %v1943
        %v1945 = vpop.f32.mrf.mxu0
        %v1946 = vadd.f32 %v1895, %v1945
        %1947 = vdwg.mxu0
        %1948 = vmatpush.bf16.msra.mxu0 0
        %1949 = vmatpush.bf16.msra.mxu0 0
        %1950 = vmatpush.bf16.msra.mxu0 0
        %1951 = vmatpush.bf16.msra.mxu0 0
        %1952 = vmatpush.bf16.msra.mxu0 0
        %1953 = vmatpush.bf16.msra.mxu0 0
        %1954 = vmatpush.bf16.msra.mxu0 %v1880
        %1955 = vmatpush.bf16.msra.mxu0 %v1872
        %1956 = vmatmul.bf16.gmra.mxu0 %v1904
        %v1957 = vpop.f32.mrf.mxu0
        %v1958 = vadd.f32 %v1890, %v1957
        %v1959 = vpop.f32.mrf.mxu0
        %v1960 = vadd.f32 %v1895, %v1959
        %1961 = vdwg.mxu0
        %1962 = vmatpush.bf16.msra.mxu0 0
        %1963 = vmatpush.bf16.msra.mxu0 0
        %1964 = vmatpush.bf16.msra.mxu0 0
        %1965 = vmatpush.bf16.msra.mxu0 0
        %1966 = vmatpush.bf16.msra.mxu0 0
        %1967 = vmatpush.bf16.msra.mxu0 0
        %1968 = vmatpush.bf16.msra.mxu0 %v1881
        %1969 = vmatpush.bf16.msra.mxu0 %v1873
        %1970 = vmatmul.bf16.gmra.mxu0 %v1904
        %v1971 = vpop.f32.mrf.mxu0
        %v1972 = vadd.f32 %v1890, %v1971
        %v1973 = vpop.f32.mrf.mxu0
        %v1974 = vadd.f32 %v1895, %v1973
        %1975 = vdwg.mxu0
        %1976 = vmatpush.bf16.msra.mxu0 0
        %1977 = vmatpush.bf16.msra.mxu0 0
        %1978 = vmatpush.bf16.msra.mxu0 0
        %1979 = vmatpush.bf16.msra.mxu0 0
        %1980 = vmatpush.bf16.msra.mxu0 0
        %1981 = vmatpush.bf16.msra.mxu0 0
        %1982 = vmatpush.bf16.msra.mxu0 %v1882
        %1983 = vmatpush.bf16.msra.mxu0 %v1874
        %1984 = vmatmul.bf16.gmra.mxu0 %v1904
        %v1985 = vpop.f32.mrf.mxu0
        %v1986 = vadd.f32 %v1890, %v1985
        %v1987 = vpop.f32.mrf.mxu0
        %v1988 = vadd.f32 %v1895, %v1987
        %1989 = vdwg.mxu0
        %1990 = vmatpush.bf16.msra.mxu0 0
        %1991 = vmatpush.bf16.msra.mxu0 0
        %1992 = vmatpush.bf16.msra.mxu0 0
        %1993 = vmatpush.bf16.msra.mxu0 0
        %1994 = vmatpush.bf16.msra.mxu0 0
        %1995 = vmatpush.bf16.msra.mxu0 0
        %1996 = vmatpush.bf16.msra.mxu0 %v1883
        %1997 = vmatpush.bf16.msra.mxu0 %v1875
        %1998 = vmatmul.bf16.gmra.mxu0 %v1904
        %v1999 = vpop.f32.mrf.mxu0
        %v2000 = vadd.f32 %v1890, %v1999
        %v2001 = vpop.f32.mrf.mxu0
        %v2002 = vadd.f32 %v1895, %v2001
        %2003 = vdwg.mxu0
        %2004 = vmatpush.bf16.msra.mxu0 0
        %2005 = vmatpush.bf16.msra.mxu0 0
        %2006 = vmatpush.bf16.msra.mxu0 0
        %2007 = vmatpush.bf16.msra.mxu0 0
        %2008 = vmatpush.bf16.msra.mxu0 0
        %2009 = vmatpush.bf16.msra.mxu0 0
        %2010 = vmatpush.bf16.msra.mxu0 %v1884
        %2011 = vmatpush.bf16.msra.mxu0 %v1876
        %2012 = vmatmul.bf16.gmra.mxu0 %v1904
        %v2013 = vpop.f32.mrf.mxu0
        %v2014 = vadd.f32 %v1890, %v2013
        %v2015 = vpop.f32.mrf.mxu0
        %v2016 = vadd.f32 %v1895, %v2015
        %2017 = vdwg.mxu0
        %v2018 = vmax.f32 %v1916, 0.0
        %v2019 = vmax.f32 %v1930, 0.0
        %v2020 = vmax.f32 %v1944, 0.0
        %v2021 = vmax.f32 %v1958, 0.0
        %v2022 = vmax.f32 %v1972, 0.0
        %v2023 = vmax.f32 %v1986, 0.0
        %v2024 = vmax.f32 %v2000, 0.0
        %v2025 = vmax.f32 %v2014, 0.0
        %v2026 = vmax.f32 %v1918, 0.0
        %v2027 = vmax.f32 %v1932, 0.0
        %v2028 = vmax.f32 %v1946, 0.0
        %v2029 = vmax.f32 %v1960, 0.0
        %v2030 = vmax.f32 %v1974, 0.0
        %v2031 = vmax.f32 %v1988, 0.0
        %v2032 = vmax.f32 %v2002, 0.0
        %v2033 = vmax.f32 %v2016, 0.0
        %v2034 = vpack.c.bf16 %v2026, %v2018
        %v2035 = vpack.c.bf16 %v2027, %v2019
        %v2036 = vpack.c.bf16 %v2028, %v2020
        %v2037 = vpack.c.bf16 %v2029, %v2021
        %v2038 = vpack.c.bf16 %v2030, %v2022
        %v2039 = vpack.c.bf16 %v2031, %v2023
        %v2040 = vpack.c.bf16 %v2032, %v2024
        %v2041 = vpack.c.bf16 %v2033, %v2025
        %v2042 = vld [vmem:[%s5] sm:$0xff]
        %v2043 = vld [vmem:[%s5 + $0x8] sm:$0xff]
        %v2044 = vld [vmem:[%s5 + $0x10] sm:$0xff]
        %v2045 = vld [vmem:[%s5 + $0x18] sm:$0xff]
        %v2046 = vld [vmem:[%s5 + $0x20] sm:$0xff]
        %v2047 = vld [vmem:[%s5 + $0x28] sm:$0xff]
        %v2048 = vld [vmem:[%s5 + $0x30] sm:$0xff]
        %v2049 = vld [vmem:[%s5 + $0x38] sm:$0xff]
        %v2050 = vld [vmem:[%s5 + $0x40] sm:$0xff]
        %v2051 = vld [vmem:[%s5 + $0x48] sm:$0xff]
        %v2052 = vld [vmem:[%s5 + $0x50] sm:$0xff]
        %v2053 = vld [vmem:[%s5 + $0x58] sm:$0xff]
        %v2054 = vld [vmem:[%s5 + $0x60] sm:$0xff]
        %v2055 = vld [vmem:[%s5 + $0x68] sm:$0xff]
        %v2056 = vld [vmem:[%s5 + $0x70] sm:$0xff]
        %v2057 = vld [vmem:[%s5 + $0x78] sm:$0xff]
        %v2058 = vld [vmem:[%s5 + $0x80] sm:$0xff]
        %v2059 = vld [vmem:[%s5 + $0x88] sm:$0xff]
        %v2060 = vld [vmem:[%s5 + $0x90] sm:$0xff]
        %v2061 = vld [vmem:[%s5 + $0x98] sm:$0xff]
        %v2062 = vld [vmem:[%s5 + $0xa0] sm:$0xff]
        %v2063 = vld [vmem:[%s5 + $0xa8] sm:$0xff]
        %v2064 = vld [vmem:[%s5 + $0xb0] sm:$0xff]
        %v2065 = vld [vmem:[%s5 + $0xb8] sm:$0xff]
        %v2066 = vld [vmem:[%s5 + $0xc0] sm:$0xff]
        %v2067 = vld [vmem:[%s5 + $0xc8] sm:$0xff]
        %v2068 = vld [vmem:[%s5 + $0xd0] sm:$0xff]
        %v2069 = vld [vmem:[%s5 + $0xd8] sm:$0xff]
        %v2070 = vld [vmem:[%s5 + $0xe0] sm:$0xff]
        %v2071 = vld [vmem:[%s5 + $0xe8] sm:$0xff]
        %v2072 = vld [vmem:[%s5 + $0xf0] sm:$0xff]
        %v2073 = vld [vmem:[%s5 + $0xf8] sm:$0xff]
        %v2074 = vld [vmem:[%s5 + $0x100] sm:$0xff]
        %v2075 = vld [vmem:[%s5 + $0x108] sm:$0xff]
        %v2076 = vld [vmem:[%s5 + $0x110] sm:$0xff]
        %v2077 = vld [vmem:[%s5 + $0x118] sm:$0xff]
        %v2078 = vld [vmem:[%s5 + $0x120] sm:$0xff]
        %v2079 = vld [vmem:[%s5 + $0x128] sm:$0xff]
        %v2080 = vld [vmem:[%s5 + $0x130] sm:$0xff]
        %v2081 = vld [vmem:[%s5 + $0x138] sm:$0xff]
        %v2082 = vld [vmem:[%s5 + $0x140] sm:$0xff]
        %v2083 = vld [vmem:[%s5 + $0x148] sm:$0xff]
        %v2084 = vld [vmem:[%s5 + $0x150] sm:$0xff]
        %v2085 = vld [vmem:[%s5 + $0x158] sm:$0xff]
        %v2086 = vld [vmem:[%s5 + $0x160] sm:$0xff]
        %v2087 = vld [vmem:[%s5 + $0x168] sm:$0xff]
        %v2088 = vld [vmem:[%s5 + $0x170] sm:$0xff]
        %v2089 = vld [vmem:[%s5 + $0x178] sm:$0xff]
        %v2090 = vld [vmem:[%s5 + $0x180] sm:$0xff]
        %v2091 = vld [vmem:[%s5 + $0x188] sm:$0xff]
        %v2092 = vld [vmem:[%s5 + $0x190] sm:$0xff]
        %v2093 = vld [vmem:[%s5 + $0x198] sm:$0xff]
        %v2094 = vld [vmem:[%s5 + $0x1a0] sm:$0xff]
        %v2095 = vld [vmem:[%s5 + $0x1a8] sm:$0xff]
        %v2096 = vld [vmem:[%s5 + $0x1b0] sm:$0xff]
        %v2097 = vld [vmem:[%s5 + $0x1b8] sm:$0xff]
        %v2098 = vld [vmem:[%s5 + $0x1c0] sm:$0xff]
        %v2099 = vld [vmem:[%s5 + $0x1c8] sm:$0xff]
        %v2100 = vld [vmem:[%s5 + $0x1d0] sm:$0xff]
        %v2101 = vld [vmem:[%s5 + $0x1d8] sm:$0xff]
        %v2102 = vld [vmem:[%s5 + $0x1e0] sm:$0xff]
        %v2103 = vld [vmem:[%s5 + $0x1e8] sm:$0xff]
        %v2104 = vld [vmem:[%s5 + $0x1f0] sm:$0xff]
        %v2105 = vld [vmem:[%s5 + $0x1f8] sm:$0xff]
        %v2106 = vld [vmem:[%s5 + $0x200] sm:$0xff]
        %v2107 = vld [vmem:[%s5 + $0x208] sm:$0xff]
        %v2108 = vld [vmem:[%s5 + $0x210] sm:$0xff]
        %v2109 = vld [vmem:[%s5 + $0x218] sm:$0xff]
        %v2110 = vld [vmem:[%s5 + $0x220] sm:$0xff]
        %v2111 = vld [vmem:[%s5 + $0x228] sm:$0xff]
        %v2112 = vld [vmem:[%s5 + $0x230] sm:$0xff]
        %v2113 = vld [vmem:[%s5 + $0x238] sm:$0xff]
        %v2114 = vld [vmem:[%s5 + $0x240] sm:$0xff]
        %v2115 = vld [vmem:[%s5 + $0x248] sm:$0xff]
        %v2116 = vld [vmem:[%s5 + $0x250] sm:$0xff]
        %v2117 = vld [vmem:[%s5 + $0x258] sm:$0xff]
        %v2118 = vld [vmem:[%s5 + $0x260] sm:$0xff]
        %v2119 = vld [vmem:[%s5 + $0x268] sm:$0xff]
        %v2120 = vld [vmem:[%s5 + $0x270] sm:$0xff]
        %v2121 = vld [vmem:[%s5 + $0x278] sm:$0xff]
        %v2122 = vld [vmem:[%s5 + $0x280] sm:$0xff]
        %v2123 = vld [vmem:[%s5 + $0x288] sm:$0xff]
        %v2124 = vld [vmem:[%s5 + $0x290] sm:$0xff]
        %v2125 = vld [vmem:[%s5 + $0x298] sm:$0xff]
        %v2126 = vld [vmem:[%s5 + $0x2a0] sm:$0xff]
        %v2127 = vld [vmem:[%s5 + $0x2a8] sm:$0xff]
        %v2128 = vld [vmem:[%s5 + $0x2b0] sm:$0xff]
        %v2129 = vld [vmem:[%s5 + $0x2b8] sm:$0xff]
        %v2130 = vld [vmem:[%s5 + $0x2c0] sm:$0xff]
        %v2131 = vld [vmem:[%s5 + $0x2c8] sm:$0xff]
        %v2132 = vld [vmem:[%s5 + $0x2d0] sm:$0xff]
        %v2133 = vld [vmem:[%s5 + $0x2d8] sm:$0xff]
        %v2134 = vld [vmem:[%s5 + $0x2e0] sm:$0xff]
        %v2135 = vld [vmem:[%s5 + $0x2e8] sm:$0xff]
        %v2136 = vld [vmem:[%s5 + $0x2f0] sm:$0xff]
        %v2137 = vld [vmem:[%s5 + $0x2f8] sm:$0xff]
        %v2138 = vld [vmem:[%s5 + $0x300] sm:$0xff]
        %v2139 = vld [vmem:[%s5 + $0x308] sm:$0xff]
        %v2140 = vld [vmem:[%s5 + $0x310] sm:$0xff]
        %v2141 = vld [vmem:[%s5 + $0x318] sm:$0xff]
        %v2142 = vld [vmem:[%s5 + $0x320] sm:$0xff]
        %v2143 = vld [vmem:[%s5 + $0x328] sm:$0xff]
        %v2144 = vld [vmem:[%s5 + $0x330] sm:$0xff]
        %v2145 = vld [vmem:[%s5 + $0x338] sm:$0xff]
        %v2146 = vld [vmem:[%s5 + $0x340] sm:$0xff]
        %v2147 = vld [vmem:[%s5 + $0x348] sm:$0xff]
        %v2148 = vld [vmem:[%s5 + $0x350] sm:$0xff]
        %v2149 = vld [vmem:[%s5 + $0x358] sm:$0xff]
        %v2150 = vld [vmem:[%s5 + $0x360] sm:$0xff]
        %v2151 = vld [vmem:[%s5 + $0x368] sm:$0xff]
        %v2152 = vld [vmem:[%s5 + $0x370] sm:$0xff]
        %v2153 = vld [vmem:[%s5 + $0x378] sm:$0xff]
        %v2154 = vld [vmem:[%s5 + $0x380] sm:$0xff]
        %v2155 = vld [vmem:[%s5 + $0x388] sm:$0xff]
        %v2156 = vld [vmem:[%s5 + $0x390] sm:$0xff]
        %v2157 = vld [vmem:[%s5 + $0x398] sm:$0xff]
        %v2158 = vld [vmem:[%s5 + $0x3a0] sm:$0xff]
        %v2159 = vld [vmem:[%s5 + $0x3a8] sm:$0xff]
        %v2160 = vld [vmem:[%s5 + $0x3b0] sm:$0xff]
        %v2161 = vld [vmem:[%s5 + $0x3b8] sm:$0xff]
        %v2162 = vld [vmem:[%s5 + $0x3c0] sm:$0xff]
        %v2163 = vld [vmem:[%s5 + $0x3c8] sm:$0xff]
        %v2164 = vld [vmem:[%s5 + $0x3d0] sm:$0xff]
        %v2165 = vld [vmem:[%s5 + $0x3d8] sm:$0xff]
        %v2166 = vld [vmem:[%s5 + $0x3e0] sm:$0xff]
        %v2167 = vld [vmem:[%s5 + $0x3e8] sm:$0xff]
        %v2168 = vld [vmem:[%s5 + $0x3f0] sm:$0xff]
        %v2169 = vld [vmem:[%s5 + $0x3f8] sm:$0xff]
        %v2170 = vld [vmem:[%s5 + $0x400] sm:$0xff]
        %v2171 = vld [vmem:[%s5 + $0x408] sm:$0xff]
        %v2172 = vld [vmem:[%s5 + $0x410] sm:$0xff]
        %v2173 = vld [vmem:[%s5 + $0x418] sm:$0xff]
        %v2174 = vld [vmem:[%s5 + $0x420] sm:$0xff]
        %v2175 = vld [vmem:[%s5 + $0x428] sm:$0xff]
        %v2176 = vld [vmem:[%s5 + $0x430] sm:$0xff]
        %v2177 = vld [vmem:[%s5 + $0x438] sm:$0xff]
        %v2178 = vld [vmem:[%s5 + $0x440] sm:$0xff]
        %v2179 = vld [vmem:[%s5 + $0x448] sm:$0xff]
        %v2180 = vld [vmem:[%s5 + $0x450] sm:$0xff]
        %v2181 = vld [vmem:[%s5 + $0x458] sm:$0xff]
        %v2182 = vld [vmem:[%s5 + $0x460] sm:$0xff]
        %v2183 = vld [vmem:[%s5 + $0x468] sm:$0xff]
        %v2184 = vld [vmem:[%s5 + $0x470] sm:$0xff]
        %v2185 = vld [vmem:[%s5 + $0x478] sm:$0xff]
        %v2186 = vld [vmem:[%s5 + $0x480] sm:$0xff]
        %v2187 = vld [vmem:[%s5 + $0x488] sm:$0xff]
        %v2188 = vld [vmem:[%s5 + $0x490] sm:$0xff]
        %v2189 = vld [vmem:[%s5 + $0x498] sm:$0xff]
        %v2190 = vld [vmem:[%s5 + $0x4a0] sm:$0xff]
        %v2191 = vld [vmem:[%s5 + $0x4a8] sm:$0xff]
        %v2192 = vld [vmem:[%s5 + $0x4b0] sm:$0xff]
        %v2193 = vld [vmem:[%s5 + $0x4b8] sm:$0xff]
        %v2194 = vld [vmem:[%s5 + $0x4c0] sm:$0xff]
        %v2195 = vld [vmem:[%s5 + $0x4c8] sm:$0xff]
        %v2196 = vld [vmem:[%s5 + $0x4d0] sm:$0xff]
        %v2197 = vld [vmem:[%s5 + $0x4d8] sm:$0xff]
        %v2198 = vld [vmem:[%s5 + $0x4e0] sm:$0xff]
        %v2199 = vld [vmem:[%s5 + $0x4e8] sm:$0xff]
        %v2200 = vld [vmem:[%s5 + $0x4f0] sm:$0xff]
        %v2201 = vld [vmem:[%s5 + $0x4f8] sm:$0xff]
        %v2202 = vld [vmem:[%s5 + $0x500] sm:$0xff]
        %v2203 = vld [vmem:[%s5 + $0x508] sm:$0xff]
        %v2204 = vld [vmem:[%s5 + $0x510] sm:$0xff]
        %v2205 = vld [vmem:[%s5 + $0x518] sm:$0xff]
        %v2206 = vld [vmem:[%s5 + $0x520] sm:$0xff]
        %v2207 = vld [vmem:[%s5 + $0x528] sm:$0xff]
        %v2208 = vld [vmem:[%s5 + $0x530] sm:$0xff]
        %v2209 = vld [vmem:[%s5 + $0x538] sm:$0xff]
        %v2210 = vld [vmem:[%s5 + $0x540] sm:$0xff]
        %v2211 = vld [vmem:[%s5 + $0x548] sm:$0xff]
        %v2212 = vld [vmem:[%s5 + $0x550] sm:$0xff]
        %v2213 = vld [vmem:[%s5 + $0x558] sm:$0xff]
        %v2214 = vld [vmem:[%s5 + $0x560] sm:$0xff]
        %v2215 = vld [vmem:[%s5 + $0x568] sm:$0xff]
        %v2216 = vld [vmem:[%s5 + $0x570] sm:$0xff]
        %v2217 = vld [vmem:[%s5 + $0x578] sm:$0xff]
        %v2218 = vld [vmem:[%s5 + $0x580] sm:$0xff]
        %v2219 = vld [vmem:[%s5 + $0x588] sm:$0xff]
        %v2220 = vld [vmem:[%s5 + $0x590] sm:$0xff]
        %v2221 = vld [vmem:[%s5 + $0x598] sm:$0xff]
        %v2222 = vld [vmem:[%s5 + $0x5a0] sm:$0xff]
        %v2223 = vld [vmem:[%s5 + $0x5a8] sm:$0xff]
        %v2224 = vld [vmem:[%s5 + $0x5b0] sm:$0xff]
        %v2225 = vld [vmem:[%s5 + $0x5b8] sm:$0xff]
        %v2226 = vld [vmem:[%s5 + $0x5c0] sm:$0xff]
        %v2227 = vld [vmem:[%s5 + $0x5c8] sm:$0xff]
        %v2228 = vld [vmem:[%s5 + $0x5d0] sm:$0xff]
        %v2229 = vld [vmem:[%s5 + $0x5d8] sm:$0xff]
        %v2230 = vld [vmem:[%s5 + $0x5e0] sm:$0xff]
        %v2231 = vld [vmem:[%s5 + $0x5e8] sm:$0xff]
        %v2232 = vld [vmem:[%s5 + $0x5f0] sm:$0xff]
        %v2233 = vld [vmem:[%s5 + $0x5f8] sm:$0xff]
        %v2234 = vld [vmem:[%s5 + $0x600] sm:$0xff]
        %v2235 = vld [vmem:[%s5 + $0x608] sm:$0xff]
        %v2236 = vld [vmem:[%s5 + $0x610] sm:$0xff]
        %v2237 = vld [vmem:[%s5 + $0x618] sm:$0xff]
        %v2238 = vld [vmem:[%s5 + $0x620] sm:$0xff]
        %v2239 = vld [vmem:[%s5 + $0x628] sm:$0xff]
        %v2240 = vld [vmem:[%s5 + $0x630] sm:$0xff]
        %v2241 = vld [vmem:[%s5 + $0x638] sm:$0xff]
        %v2242 = vld [vmem:[%s5 + $0x640] sm:$0xff]
        %v2243 = vld [vmem:[%s5 + $0x648] sm:$0xff]
        %v2244 = vld [vmem:[%s5 + $0x650] sm:$0xff]
        %v2245 = vld [vmem:[%s5 + $0x658] sm:$0xff]
        %v2246 = vld [vmem:[%s5 + $0x660] sm:$0xff]
        %v2247 = vld [vmem:[%s5 + $0x668] sm:$0xff]
        %v2248 = vld [vmem:[%s5 + $0x670] sm:$0xff]
        %v2249 = vld [vmem:[%s5 + $0x678] sm:$0xff]
        %v2250 = vld [vmem:[%s5 + $0x680] sm:$0xff]
        %v2251 = vld [vmem:[%s5 + $0x688] sm:$0xff]
        %v2252 = vld [vmem:[%s5 + $0x690] sm:$0xff]
        %v2253 = vld [vmem:[%s5 + $0x698] sm:$0xff]
        %v2254 = vld [vmem:[%s5 + $0x6a0] sm:$0xff]
        %v2255 = vld [vmem:[%s5 + $0x6a8] sm:$0xff]
        %v2256 = vld [vmem:[%s5 + $0x6b0] sm:$0xff]
        %v2257 = vld [vmem:[%s5 + $0x6b8] sm:$0xff]
        %v2258 = vld [vmem:[%s5 + $0x6c0] sm:$0xff]
        %v2259 = vld [vmem:[%s5 + $0x6c8] sm:$0xff]
        %v2260 = vld [vmem:[%s5 + $0x6d0] sm:$0xff]
        %v2261 = vld [vmem:[%s5 + $0x6d8] sm:$0xff]
        %v2262 = vld [vmem:[%s5 + $0x6e0] sm:$0xff]
        %v2263 = vld [vmem:[%s5 + $0x6e8] sm:$0xff]
        %v2264 = vld [vmem:[%s5 + $0x6f0] sm:$0xff]
        %v2265 = vld [vmem:[%s5 + $0x6f8] sm:$0xff]
        %v2266 = vld [vmem:[%s5 + $0x700] sm:$0xff]
        %v2267 = vld [vmem:[%s5 + $0x708] sm:$0xff]
        %v2268 = vld [vmem:[%s5 + $0x710] sm:$0xff]
        %v2269 = vld [vmem:[%s5 + $0x718] sm:$0xff]
        %v2270 = vld [vmem:[%s5 + $0x720] sm:$0xff]
        %v2271 = vld [vmem:[%s5 + $0x728] sm:$0xff]
        %v2272 = vld [vmem:[%s5 + $0x730] sm:$0xff]
        %v2273 = vld [vmem:[%s5 + $0x738] sm:$0xff]
        %v2274 = vld [vmem:[%s5 + $0x740] sm:$0xff]
        %v2275 = vld [vmem:[%s5 + $0x748] sm:$0xff]
        %v2276 = vld [vmem:[%s5 + $0x750] sm:$0xff]
        %v2277 = vld [vmem:[%s5 + $0x758] sm:$0xff]
        %v2278 = vld [vmem:[%s5 + $0x760] sm:$0xff]
        %v2279 = vld [vmem:[%s5 + $0x768] sm:$0xff]
        %v2280 = vld [vmem:[%s5 + $0x770] sm:$0xff]
        %v2281 = vld [vmem:[%s5 + $0x778] sm:$0xff]
        %v2282 = vld [vmem:[%s5 + $0x780] sm:$0xff]
        %v2283 = vld [vmem:[%s5 + $0x788] sm:$0xff]
        %v2284 = vld [vmem:[%s5 + $0x790] sm:$0xff]
        %v2285 = vld [vmem:[%s5 + $0x798] sm:$0xff]
        %v2286 = vld [vmem:[%s5 + $0x7a0] sm:$0xff]
        %v2287 = vld [vmem:[%s5 + $0x7a8] sm:$0xff]
        %v2288 = vld [vmem:[%s5 + $0x7b0] sm:$0xff]
        %v2289 = vld [vmem:[%s5 + $0x7b8] sm:$0xff]
        %v2290 = vld [vmem:[%s5 + $0x7c0] sm:$0xff]
        %v2291 = vld [vmem:[%s5 + $0x7c8] sm:$0xff]
        %v2292 = vld [vmem:[%s5 + $0x7d0] sm:$0xff]
        %v2293 = vld [vmem:[%s5 + $0x7d8] sm:$0xff]
        %v2294 = vld [vmem:[%s5 + $0x7e0] sm:$0xff]
        %v2295 = vld [vmem:[%s5 + $0x7e8] sm:$0xff]
        %v2296 = vld [vmem:[%s5 + $0x7f0] sm:$0xff]
        %v2297 = vld [vmem:[%s5 + $0x7f8] sm:$0xff]
        %v2554 = vunpack.c.l.b16 %v2042
        %v2555 = vunpack.c.h.b16 %v2042
        %v2556 = vunpack.c.l.b16 %v2043
        %v2557 = vunpack.c.h.b16 %v2043
        %v2558 = vunpack.c.l.b16 %v2044
        %v2559 = vunpack.c.h.b16 %v2044
        %v2560 = vunpack.c.l.b16 %v2045
        %v2561 = vunpack.c.h.b16 %v2045
        %v2562 = vunpack.c.l.b16 %v2046
        %v2563 = vunpack.c.h.b16 %v2046
        %v2564 = vunpack.c.l.b16 %v2047
        %v2565 = vunpack.c.h.b16 %v2047
        %v2566 = vunpack.c.l.b16 %v2048
        %v2567 = vunpack.c.h.b16 %v2048
        %v2568 = vunpack.c.l.b16 %v2049
        %v2569 = vunpack.c.h.b16 %v2049
        %v2570 = vunpack.c.l.b16 %v2050
        %v2571 = vunpack.c.h.b16 %v2050
        %v2572 = vunpack.c.l.b16 %v2051
        %v2573 = vunpack.c.h.b16 %v2051
        %v2574 = vunpack.c.l.b16 %v2052
        %v2575 = vunpack.c.h.b16 %v2052
        %v2576 = vunpack.c.l.b16 %v2053
        %v2577 = vunpack.c.h.b16 %v2053
        %v2578 = vunpack.c.l.b16 %v2054
        %v2579 = vunpack.c.h.b16 %v2054
        %v2580 = vunpack.c.l.b16 %v2055
        %v2581 = vunpack.c.h.b16 %v2055
        %v2582 = vunpack.c.l.b16 %v2056
        %v2583 = vunpack.c.h.b16 %v2056
        %v2584 = vunpack.c.l.b16 %v2057
        %v2585 = vunpack.c.h.b16 %v2057
        %v2586 = vunpack.c.l.b16 %v2058
        %v2587 = vunpack.c.h.b16 %v2058
        %v2588 = vunpack.c.l.b16 %v2059
        %v2589 = vunpack.c.h.b16 %v2059
        %v2590 = vunpack.c.l.b16 %v2060
        %v2591 = vunpack.c.h.b16 %v2060
        %v2592 = vunpack.c.l.b16 %v2061
        %v2593 = vunpack.c.h.b16 %v2061
        %v2594 = vunpack.c.l.b16 %v2062
        %v2595 = vunpack.c.h.b16 %v2062
        %v2596 = vunpack.c.l.b16 %v2063
        %v2597 = vunpack.c.h.b16 %v2063
        %v2598 = vunpack.c.l.b16 %v2064
        %v2599 = vunpack.c.h.b16 %v2064
        %v2600 = vunpack.c.l.b16 %v2065
        %v2601 = vunpack.c.h.b16 %v2065
        %v2602 = vunpack.c.l.b16 %v2066
        %v2603 = vunpack.c.h.b16 %v2066
        %v2604 = vunpack.c.l.b16 %v2067
        %v2605 = vunpack.c.h.b16 %v2067
        %v2606 = vunpack.c.l.b16 %v2068
        %v2607 = vunpack.c.h.b16 %v2068
        %v2608 = vunpack.c.l.b16 %v2069
        %v2609 = vunpack.c.h.b16 %v2069
        %v2610 = vunpack.c.l.b16 %v2070
        %v2611 = vunpack.c.h.b16 %v2070
        %v2612 = vunpack.c.l.b16 %v2071
        %v2613 = vunpack.c.h.b16 %v2071
        %v2614 = vunpack.c.l.b16 %v2072
        %v2615 = vunpack.c.h.b16 %v2072
        %v2616 = vunpack.c.l.b16 %v2073
        %v2617 = vunpack.c.h.b16 %v2073
        %v2618 = vunpack.c.l.b16 %v2074
        %v2619 = vunpack.c.h.b16 %v2074
        %v2620 = vunpack.c.l.b16 %v2075
        %v2621 = vunpack.c.h.b16 %v2075
        %v2622 = vunpack.c.l.b16 %v2076
        %v2623 = vunpack.c.h.b16 %v2076
        %v2624 = vunpack.c.l.b16 %v2077
        %v2625 = vunpack.c.h.b16 %v2077
        %v2626 = vunpack.c.l.b16 %v2078
        %v2627 = vunpack.c.h.b16 %v2078
        %v2628 = vunpack.c.l.b16 %v2079
        %v2629 = vunpack.c.h.b16 %v2079
        %v2630 = vunpack.c.l.b16 %v2080
        %v2631 = vunpack.c.h.b16 %v2080
        %v2632 = vunpack.c.l.b16 %v2081
        %v2633 = vunpack.c.h.b16 %v2081
        %v2634 = vunpack.c.l.b16 %v2082
        %v2635 = vunpack.c.h.b16 %v2082
        %v2636 = vunpack.c.l.b16 %v2083
        %v2637 = vunpack.c.h.b16 %v2083
        %v2638 = vunpack.c.l.b16 %v2084
        %v2639 = vunpack.c.h.b16 %v2084
        %v2640 = vunpack.c.l.b16 %v2085
        %v2641 = vunpack.c.h.b16 %v2085
        %v2642 = vunpack.c.l.b16 %v2086
        %v2643 = vunpack.c.h.b16 %v2086
        %v2644 = vunpack.c.l.b16 %v2087
        %v2645 = vunpack.c.h.b16 %v2087
        %v2646 = vunpack.c.l.b16 %v2088
        %v2647 = vunpack.c.h.b16 %v2088
        %v2648 = vunpack.c.l.b16 %v2089
        %v2649 = vunpack.c.h.b16 %v2089
        %v2650 = vunpack.c.l.b16 %v2090
        %v2651 = vunpack.c.h.b16 %v2090
        %v2652 = vunpack.c.l.b16 %v2091
        %v2653 = vunpack.c.h.b16 %v2091
        %v2654 = vunpack.c.l.b16 %v2092
        %v2655 = vunpack.c.h.b16 %v2092
        %v2656 = vunpack.c.l.b16 %v2093
        %v2657 = vunpack.c.h.b16 %v2093
        %v2658 = vunpack.c.l.b16 %v2094
        %v2659 = vunpack.c.h.b16 %v2094
        %v2660 = vunpack.c.l.b16 %v2095
        %v2661 = vunpack.c.h.b16 %v2095
        %v2662 = vunpack.c.l.b16 %v2096
        %v2663 = vunpack.c.h.b16 %v2096
        %v2664 = vunpack.c.l.b16 %v2097
        %v2665 = vunpack.c.h.b16 %v2097
        %v2666 = vunpack.c.l.b16 %v2098
        %v2667 = vunpack.c.h.b16 %v2098
        %v2668 = vunpack.c.l.b16 %v2099
        %v2669 = vunpack.c.h.b16 %v2099
        %v2670 = vunpack.c.l.b16 %v2100
        %v2671 = vunpack.c.h.b16 %v2100
        %v2672 = vunpack.c.l.b16 %v2101
        %v2673 = vunpack.c.h.b16 %v2101
        %v2674 = vunpack.c.l.b16 %v2102
        %v2675 = vunpack.c.h.b16 %v2102
        %v2676 = vunpack.c.l.b16 %v2103
        %v2677 = vunpack.c.h.b16 %v2103
        %v2678 = vunpack.c.l.b16 %v2104
        %v2679 = vunpack.c.h.b16 %v2104
        %v2680 = vunpack.c.l.b16 %v2105
        %v2681 = vunpack.c.h.b16 %v2105
        %v2682 = vunpack.c.l.b16 %v2106
        %v2683 = vunpack.c.h.b16 %v2106
        %v2684 = vunpack.c.l.b16 %v2107
        %v2685 = vunpack.c.h.b16 %v2107
        %v2686 = vunpack.c.l.b16 %v2108
        %v2687 = vunpack.c.h.b16 %v2108
        %v2688 = vunpack.c.l.b16 %v2109
        %v2689 = vunpack.c.h.b16 %v2109
        %v2690 = vunpack.c.l.b16 %v2110
        %v2691 = vunpack.c.h.b16 %v2110
        %v2692 = vunpack.c.l.b16 %v2111
        %v2693 = vunpack.c.h.b16 %v2111
        %v2694 = vunpack.c.l.b16 %v2112
        %v2695 = vunpack.c.h.b16 %v2112
        %v2696 = vunpack.c.l.b16 %v2113
        %v2697 = vunpack.c.h.b16 %v2113
        %v2698 = vunpack.c.l.b16 %v2114
        %v2699 = vunpack.c.h.b16 %v2114
        %v2700 = vunpack.c.l.b16 %v2115
        %v2701 = vunpack.c.h.b16 %v2115
        %v2702 = vunpack.c.l.b16 %v2116
        %v2703 = vunpack.c.h.b16 %v2116
        %v2704 = vunpack.c.l.b16 %v2117
        %v2705 = vunpack.c.h.b16 %v2117
        %v2706 = vunpack.c.l.b16 %v2118
        %v2707 = vunpack.c.h.b16 %v2118
        %v2708 = vunpack.c.l.b16 %v2119
        %v2709 = vunpack.c.h.b16 %v2119
        %v2710 = vunpack.c.l.b16 %v2120
        %v2711 = vunpack.c.h.b16 %v2120
        %v2712 = vunpack.c.l.b16 %v2121
        %v2713 = vunpack.c.h.b16 %v2121
        %v2714 = vunpack.c.l.b16 %v2122
        %v2715 = vunpack.c.h.b16 %v2122
        %v2716 = vunpack.c.l.b16 %v2123
        %v2717 = vunpack.c.h.b16 %v2123
        %v2718 = vunpack.c.l.b16 %v2124
        %v2719 = vunpack.c.h.b16 %v2124
        %v2720 = vunpack.c.l.b16 %v2125
        %v2721 = vunpack.c.h.b16 %v2125
        %v2722 = vunpack.c.l.b16 %v2126
        %v2723 = vunpack.c.h.b16 %v2126
        %v2724 = vunpack.c.l.b16 %v2127
        %v2725 = vunpack.c.h.b16 %v2127
        %v2726 = vunpack.c.l.b16 %v2128
        %v2727 = vunpack.c.h.b16 %v2128
        %v2728 = vunpack.c.l.b16 %v2129
        %v2729 = vunpack.c.h.b16 %v2129
        %v2730 = vunpack.c.l.b16 %v2130
        %v2731 = vunpack.c.h.b16 %v2130
        %v2732 = vunpack.c.l.b16 %v2131
        %v2733 = vunpack.c.h.b16 %v2131
        %v2734 = vunpack.c.l.b16 %v2132
        %v2735 = vunpack.c.h.b16 %v2132
        %v2736 = vunpack.c.l.b16 %v2133
        %v2737 = vunpack.c.h.b16 %v2133
        %v2738 = vunpack.c.l.b16 %v2134
        %v2739 = vunpack.c.h.b16 %v2134
        %v2740 = vunpack.c.l.b16 %v2135
        %v2741 = vunpack.c.h.b16 %v2135
        %v2742 = vunpack.c.l.b16 %v2136
        %v2743 = vunpack.c.h.b16 %v2136
        %v2744 = vunpack.c.l.b16 %v2137
        %v2745 = vunpack.c.h.b16 %v2137
        %v2746 = vunpack.c.l.b16 %v2138
        %v2747 = vunpack.c.h.b16 %v2138
        %v2748 = vunpack.c.l.b16 %v2139
        %v2749 = vunpack.c.h.b16 %v2139
        %v2750 = vunpack.c.l.b16 %v2140
        %v2751 = vunpack.c.h.b16 %v2140
        %v2752 = vunpack.c.l.b16 %v2141
        %v2753 = vunpack.c.h.b16 %v2141
        %v2754 = vunpack.c.l.b16 %v2142
        %v2755 = vunpack.c.h.b16 %v2142
        %v2756 = vunpack.c.l.b16 %v2143
        %v2757 = vunpack.c.h.b16 %v2143
        %v2758 = vunpack.c.l.b16 %v2144
        %v2759 = vunpack.c.h.b16 %v2144
        %v2760 = vunpack.c.l.b16 %v2145
        %v2761 = vunpack.c.h.b16 %v2145
        %v2762 = vunpack.c.l.b16 %v2146
        %v2763 = vunpack.c.h.b16 %v2146
        %v2764 = vunpack.c.l.b16 %v2147
        %v2765 = vunpack.c.h.b16 %v2147
        %v2766 = vunpack.c.l.b16 %v2148
        %v2767 = vunpack.c.h.b16 %v2148
        %v2768 = vunpack.c.l.b16 %v2149
        %v2769 = vunpack.c.h.b16 %v2149
        %v2770 = vunpack.c.l.b16 %v2150
        %v2771 = vunpack.c.h.b16 %v2150
        %v2772 = vunpack.c.l.b16 %v2151
        %v2773 = vunpack.c.h.b16 %v2151
        %v2774 = vunpack.c.l.b16 %v2152
        %v2775 = vunpack.c.h.b16 %v2152
        %v2776 = vunpack.c.l.b16 %v2153
        %v2777 = vunpack.c.h.b16 %v2153
        %v2778 = vunpack.c.l.b16 %v2154
        %v2779 = vunpack.c.h.b16 %v2154
        %v2780 = vunpack.c.l.b16 %v2155
        %v2781 = vunpack.c.h.b16 %v2155
        %v2782 = vunpack.c.l.b16 %v2156
        %v2783 = vunpack.c.h.b16 %v2156
        %v2784 = vunpack.c.l.b16 %v2157
        %v2785 = vunpack.c.h.b16 %v2157
        %v2786 = vunpack.c.l.b16 %v2158
        %v2787 = vunpack.c.h.b16 %v2158
        %v2788 = vunpack.c.l.b16 %v2159
        %v2789 = vunpack.c.h.b16 %v2159
        %v2790 = vunpack.c.l.b16 %v2160
        %v2791 = vunpack.c.h.b16 %v2160
        %v2792 = vunpack.c.l.b16 %v2161
        %v2793 = vunpack.c.h.b16 %v2161
        %v2794 = vunpack.c.l.b16 %v2162
        %v2795 = vunpack.c.h.b16 %v2162
        %v2796 = vunpack.c.l.b16 %v2163
        %v2797 = vunpack.c.h.b16 %v2163
        %v2798 = vunpack.c.l.b16 %v2164
        %v2799 = vunpack.c.h.b16 %v2164
        %v2800 = vunpack.c.l.b16 %v2165
        %v2801 = vunpack.c.h.b16 %v2165
        %v2802 = vunpack.c.l.b16 %v2166
        %v2803 = vunpack.c.h.b16 %v2166
        %v2804 = vunpack.c.l.b16 %v2167
        %v2805 = vunpack.c.h.b16 %v2167
        %v2806 = vunpack.c.l.b16 %v2168
        %v2807 = vunpack.c.h.b16 %v2168
        %v2808 = vunpack.c.l.b16 %v2169
        %v2809 = vunpack.c.h.b16 %v2169
        %v2810 = vunpack.c.l.b16 %v2170
        %v2811 = vunpack.c.h.b16 %v2170
        %v2812 = vunpack.c.l.b16 %v2171
        %v2813 = vunpack.c.h.b16 %v2171
        %v2814 = vunpack.c.l.b16 %v2172
        %v2815 = vunpack.c.h.b16 %v2172
        %v2816 = vunpack.c.l.b16 %v2173
        %v2817 = vunpack.c.h.b16 %v2173
        %v2818 = vunpack.c.l.b16 %v2174
        %v2819 = vunpack.c.h.b16 %v2174
        %v2820 = vunpack.c.l.b16 %v2175
        %v2821 = vunpack.c.h.b16 %v2175
        %v2822 = vunpack.c.l.b16 %v2176
        %v2823 = vunpack.c.h.b16 %v2176
        %v2824 = vunpack.c.l.b16 %v2177
        %v2825 = vunpack.c.h.b16 %v2177
        %v2826 = vunpack.c.l.b16 %v2178
        %v2827 = vunpack.c.h.b16 %v2178
        %v2828 = vunpack.c.l.b16 %v2179
        %v2829 = vunpack.c.h.b16 %v2179
        %v2830 = vunpack.c.l.b16 %v2180
        %v2831 = vunpack.c.h.b16 %v2180
        %v2832 = vunpack.c.l.b16 %v2181
        %v2833 = vunpack.c.h.b16 %v2181
        %v2834 = vunpack.c.l.b16 %v2182
        %v2835 = vunpack.c.h.b16 %v2182
        %v2836 = vunpack.c.l.b16 %v2183
        %v2837 = vunpack.c.h.b16 %v2183
        %v2838 = vunpack.c.l.b16 %v2184
        %v2839 = vunpack.c.h.b16 %v2184
        %v2840 = vunpack.c.l.b16 %v2185
        %v2841 = vunpack.c.h.b16 %v2185
        %v2842 = vunpack.c.l.b16 %v2186
        %v2843 = vunpack.c.h.b16 %v2186
        %v2844 = vunpack.c.l.b16 %v2187
        %v2845 = vunpack.c.h.b16 %v2187
        %v2846 = vunpack.c.l.b16 %v2188
        %v2847 = vunpack.c.h.b16 %v2188
        %v2848 = vunpack.c.l.b16 %v2189
        %v2849 = vunpack.c.h.b16 %v2189
        %v2850 = vunpack.c.l.b16 %v2190
        %v2851 = vunpack.c.h.b16 %v2190
        %v2852 = vunpack.c.l.b16 %v2191
        %v2853 = vunpack.c.h.b16 %v2191
        %v2854 = vunpack.c.l.b16 %v2192
        %v2855 = vunpack.c.h.b16 %v2192
        %v2856 = vunpack.c.l.b16 %v2193
        %v2857 = vunpack.c.h.b16 %v2193
        %v2858 = vunpack.c.l.b16 %v2194
        %v2859 = vunpack.c.h.b16 %v2194
        %v2860 = vunpack.c.l.b16 %v2195
        %v2861 = vunpack.c.h.b16 %v2195
        %v2862 = vunpack.c.l.b16 %v2196
        %v2863 = vunpack.c.h.b16 %v2196
        %v2864 = vunpack.c.l.b16 %v2197
        %v2865 = vunpack.c.h.b16 %v2197
        %v2866 = vunpack.c.l.b16 %v2198
        %v2867 = vunpack.c.h.b16 %v2198
        %v2868 = vunpack.c.l.b16 %v2199
        %v2869 = vunpack.c.h.b16 %v2199
        %v2870 = vunpack.c.l.b16 %v2200
        %v2871 = vunpack.c.h.b16 %v2200
        %v2872 = vunpack.c.l.b16 %v2201
        %v2873 = vunpack.c.h.b16 %v2201
        %v2874 = vunpack.c.l.b16 %v2202
        %v2875 = vunpack.c.h.b16 %v2202
        %v2876 = vunpack.c.l.b16 %v2203
        %v2877 = vunpack.c.h.b16 %v2203
        %v2878 = vunpack.c.l.b16 %v2204
        %v2879 = vunpack.c.h.b16 %v2204
        %v2880 = vunpack.c.l.b16 %v2205
        %v2881 = vunpack.c.h.b16 %v2205
        %v2882 = vunpack.c.l.b16 %v2206
        %v2883 = vunpack.c.h.b16 %v2206
        %v2884 = vunpack.c.l.b16 %v2207
        %v2885 = vunpack.c.h.b16 %v2207
        %v2886 = vunpack.c.l.b16 %v2208
        %v2887 = vunpack.c.h.b16 %v2208
        %v2888 = vunpack.c.l.b16 %v2209
        %v2889 = vunpack.c.h.b16 %v2209
        %v2890 = vunpack.c.l.b16 %v2210
        %v2891 = vunpack.c.h.b16 %v2210
        %v2892 = vunpack.c.l.b16 %v2211
        %v2893 = vunpack.c.h.b16 %v2211
        %v2894 = vunpack.c.l.b16 %v2212
        %v2895 = vunpack.c.h.b16 %v2212
        %v2896 = vunpack.c.l.b16 %v2213
        %v2897 = vunpack.c.h.b16 %v2213
        %v2898 = vunpack.c.l.b16 %v2214
        %v2899 = vunpack.c.h.b16 %v2214
        %v2900 = vunpack.c.l.b16 %v2215
        %v2901 = vunpack.c.h.b16 %v2215
        %v2902 = vunpack.c.l.b16 %v2216
        %v2903 = vunpack.c.h.b16 %v2216
        %v2904 = vunpack.c.l.b16 %v2217
        %v2905 = vunpack.c.h.b16 %v2217
        %v2906 = vunpack.c.l.b16 %v2218
        %v2907 = vunpack.c.h.b16 %v2218
        %v2908 = vunpack.c.l.b16 %v2219
        %v2909 = vunpack.c.h.b16 %v2219
        %v2910 = vunpack.c.l.b16 %v2220
        %v2911 = vunpack.c.h.b16 %v2220
        %v2912 = vunpack.c.l.b16 %v2221
        %v2913 = vunpack.c.h.b16 %v2221
        %v2914 = vunpack.c.l.b16 %v2222
        %v2915 = vunpack.c.h.b16 %v2222
        %v2916 = vunpack.c.l.b16 %v2223
        %v2917 = vunpack.c.h.b16 %v2223
        %v2918 = vunpack.c.l.b16 %v2224
        %v2919 = vunpack.c.h.b16 %v2224
        %v2920 = vunpack.c.l.b16 %v2225
        %v2921 = vunpack.c.h.b16 %v2225
        %v2922 = vunpack.c.l.b16 %v2226
        %v2923 = vunpack.c.h.b16 %v2226
        %v2924 = vunpack.c.l.b16 %v2227
        %v2925 = vunpack.c.h.b16 %v2227
        %v2926 = vunpack.c.l.b16 %v2228
        %v2927 = vunpack.c.h.b16 %v2228
        %v2928 = vunpack.c.l.b16 %v2229
        %v2929 = vunpack.c.h.b16 %v2229
        %v2930 = vunpack.c.l.b16 %v2230
        %v2931 = vunpack.c.h.b16 %v2230
        %v2932 = vunpack.c.l.b16 %v2231
        %v2933 = vunpack.c.h.b16 %v2231
        %v2934 = vunpack.c.l.b16 %v2232
        %v2935 = vunpack.c.h.b16 %v2232
        %v2936 = vunpack.c.l.b16 %v2233
        %v2937 = vunpack.c.h.b16 %v2233
        %v2938 = vunpack.c.l.b16 %v2234
        %v2939 = vunpack.c.h.b16 %v2234
        %v2940 = vunpack.c.l.b16 %v2235
        %v2941 = vunpack.c.h.b16 %v2235
        %v2942 = vunpack.c.l.b16 %v2236
        %v2943 = vunpack.c.h.b16 %v2236
        %v2944 = vunpack.c.l.b16 %v2237
        %v2945 = vunpack.c.h.b16 %v2237
        %v2946 = vunpack.c.l.b16 %v2238
        %v2947 = vunpack.c.h.b16 %v2238
        %v2948 = vunpack.c.l.b16 %v2239
        %v2949 = vunpack.c.h.b16 %v2239
        %v2950 = vunpack.c.l.b16 %v2240
        %v2951 = vunpack.c.h.b16 %v2240
        %v2952 = vunpack.c.l.b16 %v2241
        %v2953 = vunpack.c.h.b16 %v2241
        %v2954 = vunpack.c.l.b16 %v2242
        %v2955 = vunpack.c.h.b16 %v2242
        %v2956 = vunpack.c.l.b16 %v2243
        %v2957 = vunpack.c.h.b16 %v2243
        %v2958 = vunpack.c.l.b16 %v2244
        %v2959 = vunpack.c.h.b16 %v2244
        %v2960 = vunpack.c.l.b16 %v2245
        %v2961 = vunpack.c.h.b16 %v2245
        %v2962 = vunpack.c.l.b16 %v2246
        %v2963 = vunpack.c.h.b16 %v2246
        %v2964 = vunpack.c.l.b16 %v2247
        %v2965 = vunpack.c.h.b16 %v2247
        %v2966 = vunpack.c.l.b16 %v2248
        %v2967 = vunpack.c.h.b16 %v2248
        %v2968 = vunpack.c.l.b16 %v2249
        %v2969 = vunpack.c.h.b16 %v2249
        %v2970 = vunpack.c.l.b16 %v2250
        %v2971 = vunpack.c.h.b16 %v2250
        %v2972 = vunpack.c.l.b16 %v2251
        %v2973 = vunpack.c.h.b16 %v2251
        %v2974 = vunpack.c.l.b16 %v2252
        %v2975 = vunpack.c.h.b16 %v2252
        %v2976 = vunpack.c.l.b16 %v2253
        %v2977 = vunpack.c.h.b16 %v2253
        %v2978 = vunpack.c.l.b16 %v2254
        %v2979 = vunpack.c.h.b16 %v2254
        %v2980 = vunpack.c.l.b16 %v2255
        %v2981 = vunpack.c.h.b16 %v2255
        %v2982 = vunpack.c.l.b16 %v2256
        %v2983 = vunpack.c.h.b16 %v2256
        %v2984 = vunpack.c.l.b16 %v2257
        %v2985 = vunpack.c.h.b16 %v2257
        %v2986 = vunpack.c.l.b16 %v2258
        %v2987 = vunpack.c.h.b16 %v2258
        %v2988 = vunpack.c.l.b16 %v2259
        %v2989 = vunpack.c.h.b16 %v2259
        %v2990 = vunpack.c.l.b16 %v2260
        %v2991 = vunpack.c.h.b16 %v2260
        %v2992 = vunpack.c.l.b16 %v2261
        %v2993 = vunpack.c.h.b16 %v2261
        %v2994 = vunpack.c.l.b16 %v2262
        %v2995 = vunpack.c.h.b16 %v2262
        %v2996 = vunpack.c.l.b16 %v2263
        %v2997 = vunpack.c.h.b16 %v2263
        %v2998 = vunpack.c.l.b16 %v2264
        %v2999 = vunpack.c.h.b16 %v2264
        %v3000 = vunpack.c.l.b16 %v2265
        %v3001 = vunpack.c.h.b16 %v2265
        %v3002 = vunpack.c.l.b16 %v2266
        %v3003 = vunpack.c.h.b16 %v2266
        %v3004 = vunpack.c.l.b16 %v2267
        %v3005 = vunpack.c.h.b16 %v2267
        %v3006 = vunpack.c.l.b16 %v2268
        %v3007 = vunpack.c.h.b16 %v2268
        %v3008 = vunpack.c.l.b16 %v2269
        %v3009 = vunpack.c.h.b16 %v2269
        %v3010 = vunpack.c.l.b16 %v2270
        %v3011 = vunpack.c.h.b16 %v2270
        %v3012 = vunpack.c.l.b16 %v2271
        %v3013 = vunpack.c.h.b16 %v2271
        %v3014 = vunpack.c.l.b16 %v2272
        %v3015 = vunpack.c.h.b16 %v2272
        %v3016 = vunpack.c.l.b16 %v2273
        %v3017 = vunpack.c.h.b16 %v2273
        %v3018 = vunpack.c.l.b16 %v2274
        %v3019 = vunpack.c.h.b16 %v2274
        %v3020 = vunpack.c.l.b16 %v2275
        %v3021 = vunpack.c.h.b16 %v2275
        %v3022 = vunpack.c.l.b16 %v2276
        %v3023 = vunpack.c.h.b16 %v2276
        %v3024 = vunpack.c.l.b16 %v2277
        %v3025 = vunpack.c.h.b16 %v2277
        %v3026 = vunpack.c.l.b16 %v2278
        %v3027 = vunpack.c.h.b16 %v2278
        %v3028 = vunpack.c.l.b16 %v2279
        %v3029 = vunpack.c.h.b16 %v2279
        %v3030 = vunpack.c.l.b16 %v2280
        %v3031 = vunpack.c.h.b16 %v2280
        %v3032 = vunpack.c.l.b16 %v2281
        %v3033 = vunpack.c.h.b16 %v2281
        %v3034 = vunpack.c.l.b16 %v2282
        %v3035 = vunpack.c.h.b16 %v2282
        %v3036 = vunpack.c.l.b16 %v2283
        %v3037 = vunpack.c.h.b16 %v2283
        %v3038 = vunpack.c.l.b16 %v2284
        %v3039 = vunpack.c.h.b16 %v2284
        %v3040 = vunpack.c.l.b16 %v2285
        %v3041 = vunpack.c.h.b16 %v2285
        %v3042 = vunpack.c.l.b16 %v2286
        %v3043 = vunpack.c.h.b16 %v2286
        %v3044 = vunpack.c.l.b16 %v2287
        %v3045 = vunpack.c.h.b16 %v2287
        %v3046 = vunpack.c.l.b16 %v2288
        %v3047 = vunpack.c.h.b16 %v2288
        %v3048 = vunpack.c.l.b16 %v2289
        %v3049 = vunpack.c.h.b16 %v2289
        %v3050 = vunpack.c.l.b16 %v2290
        %v3051 = vunpack.c.h.b16 %v2290
        %v3052 = vunpack.c.l.b16 %v2291
        %v3053 = vunpack.c.h.b16 %v2291
        %v3054 = vunpack.c.l.b16 %v2292
        %v3055 = vunpack.c.h.b16 %v2292
        %v3056 = vunpack.c.l.b16 %v2293
        %v3057 = vunpack.c.h.b16 %v2293
        %v3058 = vunpack.c.l.b16 %v2294
        %v3059 = vunpack.c.h.b16 %v2294
        %v3060 = vunpack.c.l.b16 %v2295
        %v3061 = vunpack.c.h.b16 %v2295
        %v3062 = vunpack.c.l.b16 %v2296
        %v3063 = vunpack.c.h.b16 %v2296
        %v3064 = vunpack.c.l.b16 %v2297
        %v3065 = vunpack.c.h.b16 %v2297
        %v3066 = vpack.c.b16 %v2558, %v2554
        %v3067 = vpack.c.b16 %v2559, %v2555
        %v3068 = vpack.c.b16 %v2560, %v2556
        %v3069 = vpack.c.b16 %v2561, %v2557
        %v3070 = vpack.c.b16 %v2566, %v2562
        %v3071 = vpack.c.b16 %v2567, %v2563
        %v3072 = vpack.c.b16 %v2568, %v2564
        %v3073 = vpack.c.b16 %v2569, %v2565
        %v3074 = vpack.c.b16 %v2574, %v2570
        %v3075 = vpack.c.b16 %v2575, %v2571
        %v3076 = vpack.c.b16 %v2576, %v2572
        %v3077 = vpack.c.b16 %v2577, %v2573
        %v3078 = vpack.c.b16 %v2582, %v2578
        %v3079 = vpack.c.b16 %v2583, %v2579
        %v3080 = vpack.c.b16 %v2584, %v2580
        %v3081 = vpack.c.b16 %v2585, %v2581
        %v3082 = vpack.c.b16 %v2590, %v2586
        %v3083 = vpack.c.b16 %v2591, %v2587
        %v3084 = vpack.c.b16 %v2592, %v2588
        %v3085 = vpack.c.b16 %v2593, %v2589
        %v3086 = vpack.c.b16 %v2598, %v2594
        %v3087 = vpack.c.b16 %v2599, %v2595
        %v3088 = vpack.c.b16 %v2600, %v2596
        %v3089 = vpack.c.b16 %v2601, %v2597
        %v3090 = vpack.c.b16 %v2606, %v2602
        %v3091 = vpack.c.b16 %v2607, %v2603
        %v3092 = vpack.c.b16 %v2608, %v2604
        %v3093 = vpack.c.b16 %v2609, %v2605
        %v3094 = vpack.c.b16 %v2614, %v2610
        %v3095 = vpack.c.b16 %v2615, %v2611
        %v3096 = vpack.c.b16 %v2616, %v2612
        %v3097 = vpack.c.b16 %v2617, %v2613
        %v3098 = vpack.c.b16 %v2622, %v2618
        %v3099 = vpack.c.b16 %v2623, %v2619
        %v3100 = vpack.c.b16 %v2624, %v2620
        %v3101 = vpack.c.b16 %v2625, %v2621
        %v3102 = vpack.c.b16 %v2630, %v2626
        %v3103 = vpack.c.b16 %v2631, %v2627
        %v3104 = vpack.c.b16 %v2632, %v2628
        %v3105 = vpack.c.b16 %v2633, %v2629
        %v3106 = vpack.c.b16 %v2638, %v2634
        %v3107 = vpack.c.b16 %v2639, %v2635
        %v3108 = vpack.c.b16 %v2640, %v2636
        %v3109 = vpack.c.b16 %v2641, %v2637
        %v3110 = vpack.c.b16 %v2646, %v2642
        %v3111 = vpack.c.b16 %v2647, %v2643
        %v3112 = vpack.c.b16 %v2648, %v2644
        %v3113 = vpack.c.b16 %v2649, %v2645
        %v3114 = vpack.c.b16 %v2654, %v2650
        %v3115 = vpack.c.b16 %v2655, %v2651
        %v3116 = vpack.c.b16 %v2656, %v2652
        %v3117 = vpack.c.b16 %v2657, %v2653
        %v3118 = vpack.c.b16 %v2662, %v2658
        %v3119 = vpack.c.b16 %v2663, %v2659
        %v3120 = vpack.c.b16 %v2664, %v2660
        %v3121 = vpack.c.b16 %v2665, %v2661
        %v3122 = vpack.c.b16 %v2670, %v2666
        %v3123 = vpack.c.b16 %v2671, %v2667
        %v3124 = vpack.c.b16 %v2672, %v2668
        %v3125 = vpack.c.b16 %v2673, %v2669
        %v3126 = vpack.c.b16 %v2678, %v2674
        %v3127 = vpack.c.b16 %v2679, %v2675
        %v3128 = vpack.c.b16 %v2680, %v2676
        %v3129 = vpack.c.b16 %v2681, %v2677
        %v3130 = vpack.c.b16 %v2686, %v2682
        %v3131 = vpack.c.b16 %v2687, %v2683
        %v3132 = vpack.c.b16 %v2688, %v2684
        %v3133 = vpack.c.b16 %v2689, %v2685
        %v3134 = vpack.c.b16 %v2694, %v2690
        %v3135 = vpack.c.b16 %v2695, %v2691
        %v3136 = vpack.c.b16 %v2696, %v2692
        %v3137 = vpack.c.b16 %v2697, %v2693
        %v3138 = vpack.c.b16 %v2702, %v2698
        %v3139 = vpack.c.b16 %v2703, %v2699
        %v3140 = vpack.c.b16 %v2704, %v2700
        %v3141 = vpack.c.b16 %v2705, %v2701
        %v3142 = vpack.c.b16 %v2710, %v2706
        %v3143 = vpack.c.b16 %v2711, %v2707
        %v3144 = vpack.c.b16 %v2712, %v2708
        %v3145 = vpack.c.b16 %v2713, %v2709
        %v3146 = vpack.c.b16 %v2718, %v2714
        %v3147 = vpack.c.b16 %v2719, %v2715
        %v3148 = vpack.c.b16 %v2720, %v2716
        %v3149 = vpack.c.b16 %v2721, %v2717
        %v3150 = vpack.c.b16 %v2726, %v2722
        %v3151 = vpack.c.b16 %v2727, %v2723
        %v3152 = vpack.c.b16 %v2728, %v2724
        %v3153 = vpack.c.b16 %v2729, %v2725
        %v3154 = vpack.c.b16 %v2734, %v2730
        %v3155 = vpack.c.b16 %v2735, %v2731
        %v3156 = vpack.c.b16 %v2736, %v2732
        %v3157 = vpack.c.b16 %v2737, %v2733
        %v3158 = vpack.c.b16 %v2742, %v2738
        %v3159 = vpack.c.b16 %v2743, %v2739
        %v3160 = vpack.c.b16 %v2744, %v2740
        %v3161 = vpack.c.b16 %v2745, %v2741
        %v3162 = vpack.c.b16 %v2750, %v2746
        %v3163 = vpack.c.b16 %v2751, %v2747
        %v3164 = vpack.c.b16 %v2752, %v2748
        %v3165 = vpack.c.b16 %v2753, %v2749
        %v3166 = vpack.c.b16 %v2758, %v2754
        %v3167 = vpack.c.b16 %v2759, %v2755
        %v3168 = vpack.c.b16 %v2760, %v2756
        %v3169 = vpack.c.b16 %v2761, %v2757
        %v3170 = vpack.c.b16 %v2766, %v2762
        %v3171 = vpack.c.b16 %v2767, %v2763
        %v3172 = vpack.c.b16 %v2768, %v2764
        %v3173 = vpack.c.b16 %v2769, %v2765
        %v3174 = vpack.c.b16 %v2774, %v2770
        %v3175 = vpack.c.b16 %v2775, %v2771
        %v3176 = vpack.c.b16 %v2776, %v2772
        %v3177 = vpack.c.b16 %v2777, %v2773
        %v3178 = vpack.c.b16 %v2782, %v2778
        %v3179 = vpack.c.b16 %v2783, %v2779
        %v3180 = vpack.c.b16 %v2784, %v2780
        %v3181 = vpack.c.b16 %v2785, %v2781
        %v3182 = vpack.c.b16 %v2790, %v2786
        %v3183 = vpack.c.b16 %v2791, %v2787
        %v3184 = vpack.c.b16 %v2792, %v2788
        %v3185 = vpack.c.b16 %v2793, %v2789
        %v3186 = vpack.c.b16 %v2798, %v2794
        %v3187 = vpack.c.b16 %v2799, %v2795
        %v3188 = vpack.c.b16 %v2800, %v2796
        %v3189 = vpack.c.b16 %v2801, %v2797
        %v3190 = vpack.c.b16 %v2806, %v2802
        %v3191 = vpack.c.b16 %v2807, %v2803
        %v3192 = vpack.c.b16 %v2808, %v2804
        %v3193 = vpack.c.b16 %v2809, %v2805
        %v3194 = vpack.c.b16 %v2814, %v2810
        %v3195 = vpack.c.b16 %v2815, %v2811
        %v3196 = vpack.c.b16 %v2816, %v2812
        %v3197 = vpack.c.b16 %v2817, %v2813
        %v3198 = vpack.c.b16 %v2822, %v2818
        %v3199 = vpack.c.b16 %v2823, %v2819
        %v3200 = vpack.c.b16 %v2824, %v2820
        %v3201 = vpack.c.b16 %v2825, %v2821
        %v3202 = vpack.c.b16 %v2830, %v2826
        %v3203 = vpack.c.b16 %v2831, %v2827
        %v3204 = vpack.c.b16 %v2832, %v2828
        %v3205 = vpack.c.b16 %v2833, %v2829
        %v3206 = vpack.c.b16 %v2838, %v2834
        %v3207 = vpack.c.b16 %v2839, %v2835
        %v3208 = vpack.c.b16 %v2840, %v2836
        %v3209 = vpack.c.b16 %v2841, %v2837
        %v3210 = vpack.c.b16 %v2846, %v2842
        %v3211 = vpack.c.b16 %v2847, %v2843
        %v3212 = vpack.c.b16 %v2848, %v2844
        %v3213 = vpack.c.b16 %v2849, %v2845
        %v3214 = vpack.c.b16 %v2854, %v2850
        %v3215 = vpack.c.b16 %v2855, %v2851
        %v3216 = vpack.c.b16 %v2856, %v2852
        %v3217 = vpack.c.b16 %v2857, %v2853
        %v3218 = vpack.c.b16 %v2862, %v2858
        %v3219 = vpack.c.b16 %v2863, %v2859
        %v3220 = vpack.c.b16 %v2864, %v2860
        %v3221 = vpack.c.b16 %v2865, %v2861
        %v3222 = vpack.c.b16 %v2870, %v2866
        %v3223 = vpack.c.b16 %v2871, %v2867
        %v3224 = vpack.c.b16 %v2872, %v2868
        %v3225 = vpack.c.b16 %v2873, %v2869
        %v3226 = vpack.c.b16 %v2878, %v2874
        %v3227 = vpack.c.b16 %v2879, %v2875
        %v3228 = vpack.c.b16 %v2880, %v2876
        %v3229 = vpack.c.b16 %v2881, %v2877
        %v3230 = vpack.c.b16 %v2886, %v2882
        %v3231 = vpack.c.b16 %v2887, %v2883
        %v3232 = vpack.c.b16 %v2888, %v2884
        %v3233 = vpack.c.b16 %v2889, %v2885
        %v3234 = vpack.c.b16 %v2894, %v2890
        %v3235 = vpack.c.b16 %v2895, %v2891
        %v3236 = vpack.c.b16 %v2896, %v2892
        %v3237 = vpack.c.b16 %v2897, %v2893
        %v3238 = vpack.c.b16 %v2902, %v2898
        %v3239 = vpack.c.b16 %v2903, %v2899
        %v3240 = vpack.c.b16 %v2904, %v2900
        %v3241 = vpack.c.b16 %v2905, %v2901
        %v3242 = vpack.c.b16 %v2910, %v2906
        %v3243 = vpack.c.b16 %v2911, %v2907
        %v3244 = vpack.c.b16 %v2912, %v2908
        %v3245 = vpack.c.b16 %v2913, %v2909
        %v3246 = vpack.c.b16 %v2918, %v2914
        %v3247 = vpack.c.b16 %v2919, %v2915
        %v3248 = vpack.c.b16 %v2920, %v2916
        %v3249 = vpack.c.b16 %v2921, %v2917
        %v3250 = vpack.c.b16 %v2926, %v2922
        %v3251 = vpack.c.b16 %v2927, %v2923
        %v3252 = vpack.c.b16 %v2928, %v2924
        %v3253 = vpack.c.b16 %v2929, %v2925
        %v3254 = vpack.c.b16 %v2934, %v2930
        %v3255 = vpack.c.b16 %v2935, %v2931
        %v3256 = vpack.c.b16 %v2936, %v2932
        %v3257 = vpack.c.b16 %v2937, %v2933
        %v3258 = vpack.c.b16 %v2942, %v2938
        %v3259 = vpack.c.b16 %v2943, %v2939
        %v3260 = vpack.c.b16 %v2944, %v2940
        %v3261 = vpack.c.b16 %v2945, %v2941
        %v3262 = vpack.c.b16 %v2950, %v2946
        %v3263 = vpack.c.b16 %v2951, %v2947
        %v3264 = vpack.c.b16 %v2952, %v2948
        %v3265 = vpack.c.b16 %v2953, %v2949
        %v3266 = vpack.c.b16 %v2958, %v2954
        %v3267 = vpack.c.b16 %v2959, %v2955
        %v3268 = vpack.c.b16 %v2960, %v2956
        %v3269 = vpack.c.b16 %v2961, %v2957
        %v3270 = vpack.c.b16 %v2966, %v2962
        %v3271 = vpack.c.b16 %v2967, %v2963
        %v3272 = vpack.c.b16 %v2968, %v2964
        %v3273 = vpack.c.b16 %v2969, %v2965
        %v3274 = vpack.c.b16 %v2974, %v2970
        %v3275 = vpack.c.b16 %v2975, %v2971
        %v3276 = vpack.c.b16 %v2976, %v2972
        %v3277 = vpack.c.b16 %v2977, %v2973
        %v3278 = vpack.c.b16 %v2982, %v2978
        %v3279 = vpack.c.b16 %v2983, %v2979
        %v3280 = vpack.c.b16 %v2984, %v2980
        %v3281 = vpack.c.b16 %v2985, %v2981
        %v3282 = vpack.c.b16 %v2990, %v2986
        %v3283 = vpack.c.b16 %v2991, %v2987
        %v3284 = vpack.c.b16 %v2992, %v2988
        %v3285 = vpack.c.b16 %v2993, %v2989
        %v3286 = vpack.c.b16 %v2998, %v2994
        %v3287 = vpack.c.b16 %v2999, %v2995
        %v3288 = vpack.c.b16 %v3000, %v2996
        %v3289 = vpack.c.b16 %v3001, %v2997
        %v3290 = vpack.c.b16 %v3006, %v3002
        %v3291 = vpack.c.b16 %v3007, %v3003
        %v3292 = vpack.c.b16 %v3008, %v3004
        %v3293 = vpack.c.b16 %v3009, %v3005
        %v3294 = vpack.c.b16 %v3014, %v3010
        %v3295 = vpack.c.b16 %v3015, %v3011
        %v3296 = vpack.c.b16 %v3016, %v3012
        %v3297 = vpack.c.b16 %v3017, %v3013
        %v3298 = vpack.c.b16 %v3022, %v3018
        %v3299 = vpack.c.b16 %v3023, %v3019
        %v3300 = vpack.c.b16 %v3024, %v3020
        %v3301 = vpack.c.b16 %v3025, %v3021
        %v3302 = vpack.c.b16 %v3030, %v3026
        %v3303 = vpack.c.b16 %v3031, %v3027
        %v3304 = vpack.c.b16 %v3032, %v3028
        %v3305 = vpack.c.b16 %v3033, %v3029
        %v3306 = vpack.c.b16 %v3038, %v3034
        %v3307 = vpack.c.b16 %v3039, %v3035
        %v3308 = vpack.c.b16 %v3040, %v3036
        %v3309 = vpack.c.b16 %v3041, %v3037
        %v3310 = vpack.c.b16 %v3046, %v3042
        %v3311 = vpack.c.b16 %v3047, %v3043
        %v3312 = vpack.c.b16 %v3048, %v3044
        %v3313 = vpack.c.b16 %v3049, %v3045
        %v3314 = vpack.c.b16 %v3054, %v3050
        %v3315 = vpack.c.b16 %v3055, %v3051
        %v3316 = vpack.c.b16 %v3056, %v3052
        %v3317 = vpack.c.b16 %v3057, %v3053
        %v3318 = vpack.c.b16 %v3062, %v3058
        %v3319 = vpack.c.b16 %v3063, %v3059
        %v3320 = vpack.c.b16 %v3064, %v3060
        %v3321 = vpack.c.b16 %v3065, %v3061
        %3578 = vmatpush.bf16.msra.mxu0 %v3094
        %3579 = vmatpush.bf16.msra.mxu0 %v3090
        %3580 = vmatpush.bf16.msra.mxu0 %v3086
        %3581 = vmatpush.bf16.msra.mxu0 %v3082
        %3582 = vmatpush.bf16.msra.mxu0 %v3078
        %3583 = vmatpush.bf16.msra.mxu0 %v3074
        %3584 = vmatpush.bf16.msra.mxu0 %v3070
        %3585 = vmatpush.bf16.msra.mxu0 %v3066
        %3586 = vmatmul.bf16.gmra.mxu0 %v2034
        %v3587 = vpop.f32.mrf.mxu0
        %v3588 = vadd.f32 0.0, %v3587
        %v3589 = vpop.f32.mrf.mxu0
        %v3590 = vadd.f32 0.0, %v3589
        %3591 = vdwg.mxu0
        %3592 = vmatpush.bf16.msra.mxu0 %v3126
        %3593 = vmatpush.bf16.msra.mxu0 %v3122
        %3594 = vmatpush.bf16.msra.mxu0 %v3118
        %3595 = vmatpush.bf16.msra.mxu0 %v3114
        %3596 = vmatpush.bf16.msra.mxu0 %v3110
        %3597 = vmatpush.bf16.msra.mxu0 %v3106
        %3598 = vmatpush.bf16.msra.mxu0 %v3102
        %3599 = vmatpush.bf16.msra.mxu0 %v3098
        %3600 = vmatmul.bf16.gmra.mxu0 %v2035
        %v3601 = vpop.f32.mrf.mxu0
        %v3602 = vadd.f32 %v3588, %v3601
        %v3603 = vpop.f32.mrf.mxu0
        %v3604 = vadd.f32 %v3590, %v3603
        %3605 = vdwg.mxu0
        %3606 = vmatpush.bf16.msra.mxu0 %v3158
        %3607 = vmatpush.bf16.msra.mxu0 %v3154
        %3608 = vmatpush.bf16.msra.mxu0 %v3150
        %3609 = vmatpush.bf16.msra.mxu0 %v3146
        %3610 = vmatpush.bf16.msra.mxu0 %v3142
        %3611 = vmatpush.bf16.msra.mxu0 %v3138
        %3612 = vmatpush.bf16.msra.mxu0 %v3134
        %3613 = vmatpush.bf16.msra.mxu0 %v3130
        %3614 = vmatmul.bf16.gmra.mxu0 %v2036
        %v3615 = vpop.f32.mrf.mxu0
        %v3616 = vadd.f32 %v3602, %v3615
        %v3617 = vpop.f32.mrf.mxu0
        %v3618 = vadd.f32 %v3604, %v3617
        %3619 = vdwg.mxu0
        %3620 = vmatpush.bf16.msra.mxu0 %v3190
        %3621 = vmatpush.bf16.msra.mxu0 %v3186
        %3622 = vmatpush.bf16.msra.mxu0 %v3182
        %3623 = vmatpush.bf16.msra.mxu0 %v3178
        %3624 = vmatpush.bf16.msra.mxu0 %v3174
        %3625 = vmatpush.bf16.msra.mxu0 %v3170
        %3626 = vmatpush.bf16.msra.mxu0 %v3166
        %3627 = vmatpush.bf16.msra.mxu0 %v3162
        %3628 = vmatmul.bf16.gmra.mxu0 %v2037
        %v3629 = vpop.f32.mrf.mxu0
        %v3630 = vadd.f32 %v3616, %v3629
        %v3631 = vpop.f32.mrf.mxu0
        %v3632 = vadd.f32 %v3618, %v3631
        %3633 = vdwg.mxu0
        %3634 = vmatpush.bf16.msra.mxu0 %v3222
        %3635 = vmatpush.bf16.msra.mxu0 %v3218
        %3636 = vmatpush.bf16.msra.mxu0 %v3214
        %3637 = vmatpush.bf16.msra.mxu0 %v3210
        %3638 = vmatpush.bf16.msra.mxu0 %v3206
        %3639 = vmatpush.bf16.msra.mxu0 %v3202
        %3640 = vmatpush.bf16.msra.mxu0 %v3198
        %3641 = vmatpush.bf16.msra.mxu0 %v3194
        %3642 = vmatmul.bf16.gmra.mxu0 %v2038
        %v3643 = vpop.f32.mrf.mxu0
        %v3644 = vadd.f32 %v3630, %v3643
        %v3645 = vpop.f32.mrf.mxu0
        %v3646 = vadd.f32 %v3632, %v3645
        %3647 = vdwg.mxu0
        %3648 = vmatpush.bf16.msra.mxu0 %v3254
        %3649 = vmatpush.bf16.msra.mxu0 %v3250
        %3650 = vmatpush.bf16.msra.mxu0 %v3246
        %3651 = vmatpush.bf16.msra.mxu0 %v3242
        %3652 = vmatpush.bf16.msra.mxu0 %v3238
        %3653 = vmatpush.bf16.msra.mxu0 %v3234
        %3654 = vmatpush.bf16.msra.mxu0 %v3230
        %3655 = vmatpush.bf16.msra.mxu0 %v3226
        %3656 = vmatmul.bf16.gmra.mxu0 %v2039
        %v3657 = vpop.f32.mrf.mxu0
        %v3658 = vadd.f32 %v3644, %v3657
        %v3659 = vpop.f32.mrf.mxu0
        %v3660 = vadd.f32 %v3646, %v3659
        %3661 = vdwg.mxu0
        %3662 = vmatpush.bf16.msra.mxu0 %v3286
        %3663 = vmatpush.bf16.msra.mxu0 %v3282
        %3664 = vmatpush.bf16.msra.mxu0 %v3278
        %3665 = vmatpush.bf16.msra.mxu0 %v3274
        %3666 = vmatpush.bf16.msra.mxu0 %v3270
        %3667 = vmatpush.bf16.msra.mxu0 %v3266
        %3668 = vmatpush.bf16.msra.mxu0 %v3262
        %3669 = vmatpush.bf16.msra.mxu0 %v3258
        %3670 = vmatmul.bf16.gmra.mxu0 %v2040
        %v3671 = vpop.f32.mrf.mxu0
        %v3672 = vadd.f32 %v3658, %v3671
        %v3673 = vpop.f32.mrf.mxu0
        %v3674 = vadd.f32 %v3660, %v3673
        %3675 = vdwg.mxu0
        %3676 = vmatpush.bf16.msra.mxu0 %v3318
        %3677 = vmatpush.bf16.msra.mxu0 %v3314
        %3678 = vmatpush.bf16.msra.mxu0 %v3310
        %3679 = vmatpush.bf16.msra.mxu0 %v3306
        %3680 = vmatpush.bf16.msra.mxu0 %v3302
        %3681 = vmatpush.bf16.msra.mxu0 %v3298
        %3682 = vmatpush.bf16.msra.mxu0 %v3294
        %3683 = vmatpush.bf16.msra.mxu0 %v3290
        %3684 = vmatmul.bf16.gmra.mxu0 %v2041
        %v3685 = vpop.f32.mrf.mxu0
        %v3686 = vadd.f32 %v3672, %v3685
        %v3687 = vpop.f32.mrf.mxu0
        %v3688 = vadd.f32 %v3674, %v3687
        %3689 = vdwg.mxu0
        %3690 = vmatpush.bf16.msra.mxu0 %v3095
        %3691 = vmatpush.bf16.msra.mxu0 %v3091
        %3692 = vmatpush.bf16.msra.mxu0 %v3087
        %3693 = vmatpush.bf16.msra.mxu0 %v3083
        %3694 = vmatpush.bf16.msra.mxu0 %v3079
        %3695 = vmatpush.bf16.msra.mxu0 %v3075
        %3696 = vmatpush.bf16.msra.mxu0 %v3071
        %3697 = vmatpush.bf16.msra.mxu0 %v3067
        %3698 = vmatmul.bf16.gmra.mxu0 %v2034
        %v3699 = vpop.f32.mrf.mxu0
        %v3700 = vadd.f32 0.0, %v3699
        %v3701 = vpop.f32.mrf.mxu0
        %v3702 = vadd.f32 0.0, %v3701
        %3703 = vdwg.mxu0
        %3704 = vmatpush.bf16.msra.mxu0 %v3127
        %3705 = vmatpush.bf16.msra.mxu0 %v3123
        %3706 = vmatpush.bf16.msra.mxu0 %v3119
        %3707 = vmatpush.bf16.msra.mxu0 %v3115
        %3708 = vmatpush.bf16.msra.mxu0 %v3111
        %3709 = vmatpush.bf16.msra.mxu0 %v3107
        %3710 = vmatpush.bf16.msra.mxu0 %v3103
        %3711 = vmatpush.bf16.msra.mxu0 %v3099
        %3712 = vmatmul.bf16.gmra.mxu0 %v2035
        %v3713 = vpop.f32.mrf.mxu0
        %v3714 = vadd.f32 %v3700, %v3713
        %v3715 = vpop.f32.mrf.mxu0
        %v3716 = vadd.f32 %v3702, %v3715
        %3717 = vdwg.mxu0
        %3718 = vmatpush.bf16.msra.mxu0 %v3159
        %3719 = vmatpush.bf16.msra.mxu0 %v3155
        %3720 = vmatpush.bf16.msra.mxu0 %v3151
        %3721 = vmatpush.bf16.msra.mxu0 %v3147
        %3722 = vmatpush.bf16.msra.mxu0 %v3143
        %3723 = vmatpush.bf16.msra.mxu0 %v3139
        %3724 = vmatpush.bf16.msra.mxu0 %v3135
        %3725 = vmatpush.bf16.msra.mxu0 %v3131
        %3726 = vmatmul.bf16.gmra.mxu0 %v2036
        %v3727 = vpop.f32.mrf.mxu0
        %v3728 = vadd.f32 %v3714, %v3727
        %v3729 = vpop.f32.mrf.mxu0
        %v3730 = vadd.f32 %v3716, %v3729
        %3731 = vdwg.mxu0
        %3732 = vmatpush.bf16.msra.mxu0 %v3191
        %3733 = vmatpush.bf16.msra.mxu0 %v3187
        %3734 = vmatpush.bf16.msra.mxu0 %v3183
        %3735 = vmatpush.bf16.msra.mxu0 %v3179
        %3736 = vmatpush.bf16.msra.mxu0 %v3175
        %3737 = vmatpush.bf16.msra.mxu0 %v3171
        %3738 = vmatpush.bf16.msra.mxu0 %v3167
        %3739 = vmatpush.bf16.msra.mxu0 %v3163
        %3740 = vmatmul.bf16.gmra.mxu0 %v2037
        %v3741 = vpop.f32.mrf.mxu0
        %v3742 = vadd.f32 %v3728, %v3741
        %v3743 = vpop.f32.mrf.mxu0
        %v3744 = vadd.f32 %v3730, %v3743
        %3745 = vdwg.mxu0
        %3746 = vmatpush.bf16.msra.mxu0 %v3223
        %3747 = vmatpush.bf16.msra.mxu0 %v3219
        %3748 = vmatpush.bf16.msra.mxu0 %v3215
        %3749 = vmatpush.bf16.msra.mxu0 %v3211
        %3750 = vmatpush.bf16.msra.mxu0 %v3207
        %3751 = vmatpush.bf16.msra.mxu0 %v3203
        %3752 = vmatpush.bf16.msra.mxu0 %v3199
        %3753 = vmatpush.bf16.msra.mxu0 %v3195
        %3754 = vmatmul.bf16.gmra.mxu0 %v2038
        %v3755 = vpop.f32.mrf.mxu0
        %v3756 = vadd.f32 %v3742, %v3755
        %v3757 = vpop.f32.mrf.mxu0
        %v3758 = vadd.f32 %v3744, %v3757
        %3759 = vdwg.mxu0
        %3760 = vmatpush.bf16.msra.mxu0 %v3255
        %3761 = vmatpush.bf16.msra.mxu0 %v3251
        %3762 = vmatpush.bf16.msra.mxu0 %v3247
        %3763 = vmatpush.bf16.msra.mxu0 %v3243
        %3764 = vmatpush.bf16.msra.mxu0 %v3239
        %3765 = vmatpush.bf16.msra.mxu0 %v3235
        %3766 = vmatpush.bf16.msra.mxu0 %v3231
        %3767 = vmatpush.bf16.msra.mxu0 %v3227
        %3768 = vmatmul.bf16.gmra.mxu0 %v2039
        %v3769 = vpop.f32.mrf.mxu0
        %v3770 = vadd.f32 %v3756, %v3769
        %v3771 = vpop.f32.mrf.mxu0
        %v3772 = vadd.f32 %v3758, %v3771
        %3773 = vdwg.mxu0
        %3774 = vmatpush.bf16.msra.mxu0 %v3287
        %3775 = vmatpush.bf16.msra.mxu0 %v3283
        %3776 = vmatpush.bf16.msra.mxu0 %v3279
        %3777 = vmatpush.bf16.msra.mxu0 %v3275
        %3778 = vmatpush.bf16.msra.mxu0 %v3271
        %3779 = vmatpush.bf16.msra.mxu0 %v3267
        %3780 = vmatpush.bf16.msra.mxu0 %v3263
        %3781 = vmatpush.bf16.msra.mxu0 %v3259
        %3782 = vmatmul.bf16.gmra.mxu0 %v2040
        %v3783 = vpop.f32.mrf.mxu0
        %v3784 = vadd.f32 %v3770, %v3783
        %v3785 = vpop.f32.mrf.mxu0
        %v3786 = vadd.f32 %v3772, %v3785
        %3787 = vdwg.mxu0
        %3788 = vmatpush.bf16.msra.mxu0 %v3319
        %3789 = vmatpush.bf16.msra.mxu0 %v3315
        %3790 = vmatpush.bf16.msra.mxu0 %v3311
        %3791 = vmatpush.bf16.msra.mxu0 %v3307
        %3792 = vmatpush.bf16.msra.mxu0 %v3303
        %3793 = vmatpush.bf16.msra.mxu0 %v3299
        %3794 = vmatpush.bf16.msra.mxu0 %v3295
        %3795 = vmatpush.bf16.msra.mxu0 %v3291
        %3796 = vmatmul.bf16.gmra.mxu0 %v2041
        %v3797 = vpop.f32.mrf.mxu0
        %v3798 = vadd.f32 %v3784, %v3797
        %v3799 = vpop.f32.mrf.mxu0
        %v3800 = vadd.f32 %v3786, %v3799
        %3801 = vdwg.mxu0
        %3802 = vmatpush.bf16.msra.mxu0 %v3096
        %3803 = vmatpush.bf16.msra.mxu0 %v3092
        %3804 = vmatpush.bf16.msra.mxu0 %v3088
        %3805 = vmatpush.bf16.msra.mxu0 %v3084
        %3806 = vmatpush.bf16.msra.mxu0 %v3080
        %3807 = vmatpush.bf16.msra.mxu0 %v3076
        %3808 = vmatpush.bf16.msra.mxu0 %v3072
        %3809 = vmatpush.bf16.msra.mxu0 %v3068
        %3810 = vmatmul.bf16.gmra.mxu0 %v2034
        %v3811 = vpop.f32.mrf.mxu0
        %v3812 = vadd.f32 0.0, %v3811
        %v3813 = vpop.f32.mrf.mxu0
        %v3814 = vadd.f32 0.0, %v3813
        %3815 = vdwg.mxu0
        %3816 = vmatpush.bf16.msra.mxu0 %v3128
        %3817 = vmatpush.bf16.msra.mxu0 %v3124
        %3818 = vmatpush.bf16.msra.mxu0 %v3120
        %3819 = vmatpush.bf16.msra.mxu0 %v3116
        %3820 = vmatpush.bf16.msra.mxu0 %v3112
        %3821 = vmatpush.bf16.msra.mxu0 %v3108
        %3822 = vmatpush.bf16.msra.mxu0 %v3104
        %3823 = vmatpush.bf16.msra.mxu0 %v3100
        %3824 = vmatmul.bf16.gmra.mxu0 %v2035
        %v3825 = vpop.f32.mrf.mxu0
        %v3826 = vadd.f32 %v3812, %v3825
        %v3827 = vpop.f32.mrf.mxu0
        %v3828 = vadd.f32 %v3814, %v3827
        %3829 = vdwg.mxu0
        %3830 = vmatpush.bf16.msra.mxu0 %v3160
        %3831 = vmatpush.bf16.msra.mxu0 %v3156
        %3832 = vmatpush.bf16.msra.mxu0 %v3152
        %3833 = vmatpush.bf16.msra.mxu0 %v3148
        %3834 = vmatpush.bf16.msra.mxu0 %v3144
        %3835 = vmatpush.bf16.msra.mxu0 %v3140
        %3836 = vmatpush.bf16.msra.mxu0 %v3136
        %3837 = vmatpush.bf16.msra.mxu0 %v3132
        %3838 = vmatmul.bf16.gmra.mxu0 %v2036
        %v3839 = vpop.f32.mrf.mxu0
        %v3840 = vadd.f32 %v3826, %v3839
        %v3841 = vpop.f32.mrf.mxu0
        %v3842 = vadd.f32 %v3828, %v3841
        %3843 = vdwg.mxu0
        %3844 = vmatpush.bf16.msra.mxu0 %v3192
        %3845 = vmatpush.bf16.msra.mxu0 %v3188
        %3846 = vmatpush.bf16.msra.mxu0 %v3184
        %3847 = vmatpush.bf16.msra.mxu0 %v3180
        %3848 = vmatpush.bf16.msra.mxu0 %v3176
        %3849 = vmatpush.bf16.msra.mxu0 %v3172
        %3850 = vmatpush.bf16.msra.mxu0 %v3168
        %3851 = vmatpush.bf16.msra.mxu0 %v3164
        %3852 = vmatmul.bf16.gmra.mxu0 %v2037
        %v3853 = vpop.f32.mrf.mxu0
        %v3854 = vadd.f32 %v3840, %v3853
        %v3855 = vpop.f32.mrf.mxu0
        %v3856 = vadd.f32 %v3842, %v3855
        %3857 = vdwg.mxu0
        %3858 = vmatpush.bf16.msra.mxu0 %v3224
        %3859 = vmatpush.bf16.msra.mxu0 %v3220
        %3860 = vmatpush.bf16.msra.mxu0 %v3216
        %3861 = vmatpush.bf16.msra.mxu0 %v3212
        %3862 = vmatpush.bf16.msra.mxu0 %v3208
        %3863 = vmatpush.bf16.msra.mxu0 %v3204
        %3864 = vmatpush.bf16.msra.mxu0 %v3200
        %3865 = vmatpush.bf16.msra.mxu0 %v3196
        %3866 = vmatmul.bf16.gmra.mxu0 %v2038
        %v3867 = vpop.f32.mrf.mxu0
        %v3868 = vadd.f32 %v3854, %v3867
        %v3869 = vpop.f32.mrf.mxu0
        %v3870 = vadd.f32 %v3856, %v3869
        %3871 = vdwg.mxu0
        %3872 = vmatpush.bf16.msra.mxu0 %v3256
        %3873 = vmatpush.bf16.msra.mxu0 %v3252
        %3874 = vmatpush.bf16.msra.mxu0 %v3248
        %3875 = vmatpush.bf16.msra.mxu0 %v3244
        %3876 = vmatpush.bf16.msra.mxu0 %v3240
        %3877 = vmatpush.bf16.msra.mxu0 %v3236
        %3878 = vmatpush.bf16.msra.mxu0 %v3232
        %3879 = vmatpush.bf16.msra.mxu0 %v3228
        %3880 = vmatmul.bf16.gmra.mxu0 %v2039
        %v3881 = vpop.f32.mrf.mxu0
        %v3882 = vadd.f32 %v3868, %v3881
        %v3883 = vpop.f32.mrf.mxu0
        %v3884 = vadd.f32 %v3870, %v3883
        %3885 = vdwg.mxu0
        %3886 = vmatpush.bf16.msra.mxu0 %v3288
        %3887 = vmatpush.bf16.msra.mxu0 %v3284
        %3888 = vmatpush.bf16.msra.mxu0 %v3280
        %3889 = vmatpush.bf16.msra.mxu0 %v3276
        %3890 = vmatpush.bf16.msra.mxu0 %v3272
        %3891 = vmatpush.bf16.msra.mxu0 %v3268
        %3892 = vmatpush.bf16.msra.mxu0 %v3264
        %3893 = vmatpush.bf16.msra.mxu0 %v3260
        %3894 = vmatmul.bf16.gmra.mxu0 %v2040
        %v3895 = vpop.f32.mrf.mxu0
        %v3896 = vadd.f32 %v3882, %v3895
        %v3897 = vpop.f32.mrf.mxu0
        %v3898 = vadd.f32 %v3884, %v3897
        %3899 = vdwg.mxu0
        %3900 = vmatpush.bf16.msra.mxu0 %v3320
        %3901 = vmatpush.bf16.msra.mxu0 %v3316
        %3902 = vmatpush.bf16.msra.mxu0 %v3312
        %3903 = vmatpush.bf16.msra.mxu0 %v3308
        %3904 = vmatpush.bf16.msra.mxu0 %v3304
        %3905 = vmatpush.bf16.msra.mxu0 %v3300
        %3906 = vmatpush.bf16.msra.mxu0 %v3296
        %3907 = vmatpush.bf16.msra.mxu0 %v3292
        %3908 = vmatmul.bf16.gmra.mxu0 %v2041
        %v3909 = vpop.f32.mrf.mxu0
        %v3910 = vadd.f32 %v3896, %v3909
        %v3911 = vpop.f32.mrf.mxu0
        %v3912 = vadd.f32 %v3898, %v3911
        %3913 = vdwg.mxu0
        %3914 = vmatpush.bf16.msra.mxu0 %v3097
        %3915 = vmatpush.bf16.msra.mxu0 %v3093
        %3916 = vmatpush.bf16.msra.mxu0 %v3089
        %3917 = vmatpush.bf16.msra.mxu0 %v3085
        %3918 = vmatpush.bf16.msra.mxu0 %v3081
        %3919 = vmatpush.bf16.msra.mxu0 %v3077
        %3920 = vmatpush.bf16.msra.mxu0 %v3073
        %3921 = vmatpush.bf16.msra.mxu0 %v3069
        %3922 = vmatmul.bf16.gmra.mxu0 %v2034
        %v3923 = vpop.f32.mrf.mxu0
        %v3924 = vadd.f32 0.0, %v3923
        %v3925 = vpop.f32.mrf.mxu0
        %v3926 = vadd.f32 0.0, %v3925
        %3927 = vdwg.mxu0
        %3928 = vmatpush.bf16.msra.mxu0 %v3129
        %3929 = vmatpush.bf16.msra.mxu0 %v3125
        %3930 = vmatpush.bf16.msra.mxu0 %v3121
        %3931 = vmatpush.bf16.msra.mxu0 %v3117
        %3932 = vmatpush.bf16.msra.mxu0 %v3113
        %3933 = vmatpush.bf16.msra.mxu0 %v3109
        %3934 = vmatpush.bf16.msra.mxu0 %v3105
        %3935 = vmatpush.bf16.msra.mxu0 %v3101
        %3936 = vmatmul.bf16.gmra.mxu0 %v2035
        %v3937 = vpop.f32.mrf.mxu0
        %v3938 = vadd.f32 %v3924, %v3937
        %v3939 = vpop.f32.mrf.mxu0
        %v3940 = vadd.f32 %v3926, %v3939
        %3941 = vdwg.mxu0
        %3942 = vmatpush.bf16.msra.mxu0 %v3161
        %3943 = vmatpush.bf16.msra.mxu0 %v3157
        %3944 = vmatpush.bf16.msra.mxu0 %v3153
        %3945 = vmatpush.bf16.msra.mxu0 %v3149
        %3946 = vmatpush.bf16.msra.mxu0 %v3145
        %3947 = vmatpush.bf16.msra.mxu0 %v3141
        %3948 = vmatpush.bf16.msra.mxu0 %v3137
        %3949 = vmatpush.bf16.msra.mxu0 %v3133
        %3950 = vmatmul.bf16.gmra.mxu0 %v2036
        %v3951 = vpop.f32.mrf.mxu0
        %v3952 = vadd.f32 %v3938, %v3951
        %v3953 = vpop.f32.mrf.mxu0
        %v3954 = vadd.f32 %v3940, %v3953
        %3955 = vdwg.mxu0
        %3956 = vmatpush.bf16.msra.mxu0 %v3193
        %3957 = vmatpush.bf16.msra.mxu0 %v3189
        %3958 = vmatpush.bf16.msra.mxu0 %v3185
        %3959 = vmatpush.bf16.msra.mxu0 %v3181
        %3960 = vmatpush.bf16.msra.mxu0 %v3177
        %3961 = vmatpush.bf16.msra.mxu0 %v3173
        %3962 = vmatpush.bf16.msra.mxu0 %v3169
        %3963 = vmatpush.bf16.msra.mxu0 %v3165
        %3964 = vmatmul.bf16.gmra.mxu0 %v2037
        %v3965 = vpop.f32.mrf.mxu0
        %v3966 = vadd.f32 %v3952, %v3965
        %v3967 = vpop.f32.mrf.mxu0
        %v3968 = vadd.f32 %v3954, %v3967
        %3969 = vdwg.mxu0
        %3970 = vmatpush.bf16.msra.mxu0 %v3225
        %3971 = vmatpush.bf16.msra.mxu0 %v3221
        %3972 = vmatpush.bf16.msra.mxu0 %v3217
        %3973 = vmatpush.bf16.msra.mxu0 %v3213
        %3974 = vmatpush.bf16.msra.mxu0 %v3209
        %3975 = vmatpush.bf16.msra.mxu0 %v3205
        %3976 = vmatpush.bf16.msra.mxu0 %v3201
        %3977 = vmatpush.bf16.msra.mxu0 %v3197
        %3978 = vmatmul.bf16.gmra.mxu0 %v2038
        %v3979 = vpop.f32.mrf.mxu0
        %v3980 = vadd.f32 %v3966, %v3979
        %v3981 = vpop.f32.mrf.mxu0
        %v3982 = vadd.f32 %v3968, %v3981
        %3983 = vdwg.mxu0
        %3984 = vmatpush.bf16.msra.mxu0 %v3257
        %3985 = vmatpush.bf16.msra.mxu0 %v3253
        %3986 = vmatpush.bf16.msra.mxu0 %v3249
        %3987 = vmatpush.bf16.msra.mxu0 %v3245
        %3988 = vmatpush.bf16.msra.mxu0 %v3241
        %3989 = vmatpush.bf16.msra.mxu0 %v3237
        %3990 = vmatpush.bf16.msra.mxu0 %v3233
        %3991 = vmatpush.bf16.msra.mxu0 %v3229
        %3992 = vmatmul.bf16.gmra.mxu0 %v2039
        %v3993 = vpop.f32.mrf.mxu0
        %v3994 = vadd.f32 %v3980, %v3993
        %v3995 = vpop.f32.mrf.mxu0
        %v3996 = vadd.f32 %v3982, %v3995
        %3997 = vdwg.mxu0
        %3998 = vmatpush.bf16.msra.mxu0 %v3289
        %3999 = vmatpush.bf16.msra.mxu0 %v3285
        %4000 = vmatpush.bf16.msra.mxu0 %v3281
        %4001 = vmatpush.bf16.msra.mxu0 %v3277
        %4002 = vmatpush.bf16.msra.mxu0 %v3273
        %4003 = vmatpush.bf16.msra.mxu0 %v3269
        %4004 = vmatpush.bf16.msra.mxu0 %v3265
        %4005 = vmatpush.bf16.msra.mxu0 %v3261
        %4006 = vmatmul.bf16.gmra.mxu0 %v2040
        %v4007 = vpop.f32.mrf.mxu0
        %v4008 = vadd.f32 %v3994, %v4007
        %v4009 = vpop.f32.mrf.mxu0
        %v4010 = vadd.f32 %v3996, %v4009
        %4011 = vdwg.mxu0
        %4012 = vmatpush.bf16.msra.mxu0 %v3321
        %4013 = vmatpush.bf16.msra.mxu0 %v3317
        %4014 = vmatpush.bf16.msra.mxu0 %v3313
        %4015 = vmatpush.bf16.msra.mxu0 %v3309
        %4016 = vmatpush.bf16.msra.mxu0 %v3305
        %4017 = vmatpush.bf16.msra.mxu0 %v3301
        %4018 = vmatpush.bf16.msra.mxu0 %v3297
        %4019 = vmatpush.bf16.msra.mxu0 %v3293
        %4020 = vmatmul.bf16.gmra.mxu0 %v2041
        %v4021 = vpop.f32.mrf.mxu0
        %v4022 = vadd.f32 %v4008, %v4021
        %v4023 = vpop.f32.mrf.mxu0
        %v4024 = vadd.f32 %v4010, %v4023
        %4025 = vdwg.mxu0
        %v4026 = vpack.c.bf16 %v3798, %v3686
        %v4027 = vpack.c.bf16 %v4022, %v3910
        %v4028 = vpack.c.bf16 %v3800, %v3688
        %v4029 = vpack.c.bf16 %v4024, %v3912
        %4030 = vst [vmem:[#allocation2] sm:$0xff] %v4026
        %4031 = vst [vmem:[#allocation2 + $0x8] sm:$0xf] %v4027
        %4032 = vst [vmem:[#allocation2 + $0xc] sm:$0xff] %v4028
        %4033 = vst [vmem:[#allocation2 + $0x14] sm:$0xf] %v4029
        %4038 = vrot.lane.b32.xlu0 %v4026, 127
        %v4039 = vpop.permute.xlu0 %4038
        %4040 = vrot.lane.b32.xlu0 %v4027, 127
        %v4041 = vpop.permute.xlu0 %4040
        %4042 = vrot.lane.b32.xlu0 %v4028, 127
        %v4043 = vpop.permute.xlu0 %4042
        %4044 = vrot.lane.b32.xlu0 %v4029, 127
        %v4045 = vpop.permute.xlu0 %4044
        %v4046 = vrot.slane %v4039, 4
        %v4047 = vrot.slane %v4041, 4
        %v4048 = vrot.slane %v4043, 4
        %v4049 = vrot.slane %v4045, 4
        %vm4050 = vcmask 1043456
        %v4051 = vsel %vm4050, %v4046, %v4047
        %vm4052 = vcmask 1039360
        %v4053 = vsel %vm4052, %v4039, %v4051
        %v4054 = vsel %vm4052, %v4041, %v4047
        %v4055 = vsel %vm4050, %v4048, %v4049
        %v4056 = vsel %vm4052, %v4043, %v4055
        %v4057 = vsel %vm4052, %v4045, %v4049
        %4062 = vst [vmem:[#allocation2 + $0x18] sm:$0xff] %v4053
        %4063 = vst [vmem:[#allocation2 + $0x20] sm:$0xf] %v4054
        %4064 = vst [vmem:[#allocation2 + $0x24] sm:$0xff] %v4056
        %4065 = vst [vmem:[#allocation2 + $0x2c] sm:$0xf] %v4057
        %4066 = vrot.lane.b32.xlu0 %v4026, 126
        %v4067 = vpop.permute.xlu0 %4066
        %4068 = vrot.lane.b32.xlu0 %v4027, 126
        %v4069 = vpop.permute.xlu0 %4068
        %4070 = vrot.lane.b32.xlu0 %v4028, 126
        %v4071 = vpop.permute.xlu0 %4070
        %4072 = vrot.lane.b32.xlu0 %v4029, 126
        %v4073 = vpop.permute.xlu0 %4072
        %v4074 = vrot.slane %v4067, 4
        %v4075 = vrot.slane %v4069, 4
        %v4076 = vrot.slane %v4071, 4
        %v4077 = vrot.slane %v4073, 4
        %v4078 = vsel %vm4050, %v4074, %v4075
        %vm4079 = vcmask 1031168
        %v4080 = vsel %vm4079, %v4067, %v4078
        %v4081 = vsel %vm4079, %v4069, %v4075
        %v4082 = vsel %vm4050, %v4076, %v4077
        %v4083 = vsel %vm4079, %v4071, %v4082
        %v4084 = vsel %vm4079, %v4073, %v4077
        %4089 = vst [vmem:[#allocation2 + $0x30] sm:$0xff] %v4080
        %4090 = vst [vmem:[#allocation2 + $0x38] sm:$0xf] %v4081
        %4091 = vst [vmem:[#allocation2 + $0x3c] sm:$0xff] %v4083
        %4092 = vst [vmem:[#allocation2 + $0x44] sm:$0xf] %v4084
        %4093 = vrot.lane.b32.xlu0 %v4026, 125
        %v4094 = vpop.permute.xlu0 %4093
        %4095 = vrot.lane.b32.xlu0 %v4027, 125
        %v4096 = vpop.permute.xlu0 %4095
        %4097 = vrot.lane.b32.xlu0 %v4028, 125
        %v4098 = vpop.permute.xlu0 %4097
        %4099 = vrot.lane.b32.xlu0 %v4029, 125
        %v4100 = vpop.permute.xlu0 %4099
        %v4101 = vrot.slane %v4094, 4
        %v4102 = vrot.slane %v4096, 4
        %v4103 = vrot.slane %v4098, 4
        %v4104 = vrot.slane %v4100, 4
        %v4105 = vsel %vm4050, %v4101, %v4102
        %vm4106 = vcmask 1022976
        %v4107 = vsel %vm4106, %v4094, %v4105
        %v4108 = vsel %vm4106, %v4096, %v4102
        %v4109 = vsel %vm4050, %v4103, %v4104
        %v4110 = vsel %vm4106, %v4098, %v4109
        %v4111 = vsel %vm4106, %v4100, %v4104
        %4116 = vst [vmem:[#allocation2 + $0x48] sm:$0xff] %v4107
        %4117 = vst [vmem:[#allocation2 + $0x50] sm:$0xf] %v4108
        %4118 = vst [vmem:[#allocation2 + $0x54] sm:$0xff] %v4110
        %4119 = vst [vmem:[#allocation2 + $0x5c] sm:$0xf] %v4111
        %4120 = vrot.lane.b32.xlu0 %v4026, 124
        %v4121 = vpop.permute.xlu0 %4120
        %4122 = vrot.lane.b32.xlu0 %v4027, 124
        %v4123 = vpop.permute.xlu0 %4122
        %4124 = vrot.lane.b32.xlu0 %v4028, 124
        %v4125 = vpop.permute.xlu0 %4124
        %4126 = vrot.lane.b32.xlu0 %v4029, 124
        %v4127 = vpop.permute.xlu0 %4126
        %v4128 = vrot.slane %v4121, 4
        %v4129 = vrot.slane %v4123, 4
        %v4130 = vrot.slane %v4125, 4
        %v4131 = vrot.slane %v4127, 4
        %v4132 = vsel %vm4050, %v4128, %v4129
        %vm4133 = vcmask 1014784
        %v4134 = vsel %vm4133, %v4121, %v4132
        %v4135 = vsel %vm4133, %v4123, %v4129
        %v4136 = vsel %vm4050, %v4130, %v4131
        %v4137 = vsel %vm4133, %v4125, %v4136
        %v4138 = vsel %vm4133, %v4127, %v4131
        %4143 = vst [vmem:[#allocation2 + $0x60] sm:$0xff] %v4134
        %4144 = vst [vmem:[#allocation2 + $0x68] sm:$0xf] %v4135
        %4145 = vst [vmem:[#allocation2 + $0x6c] sm:$0xff] %v4137
        %4146 = vst [vmem:[#allocation2 + $0x74] sm:$0xf] %v4138
        %4147 = vrot.lane.b32.xlu0 %v4026, 123
        %v4148 = vpop.permute.xlu0 %4147
        %4149 = vrot.lane.b32.xlu0 %v4027, 123
        %v4150 = vpop.permute.xlu0 %4149
        %4151 = vrot.lane.b32.xlu0 %v4028, 123
        %v4152 = vpop.permute.xlu0 %4151
        %4153 = vrot.lane.b32.xlu0 %v4029, 123
        %v4154 = vpop.permute.xlu0 %4153
        %v4155 = vrot.slane %v4148, 4
        %v4156 = vrot.slane %v4150, 4
        %v4157 = vrot.slane %v4152, 4
        %v4158 = vrot.slane %v4154, 4
        %v4159 = vsel %vm4050, %v4155, %v4156
        %vm4160 = vcmask 1006592
        %v4161 = vsel %vm4160, %v4148, %v4159
        %v4162 = vsel %vm4160, %v4150, %v4156
        %v4163 = vsel %vm4050, %v4157, %v4158
        %v4164 = vsel %vm4160, %v4152, %v4163
        %v4165 = vsel %vm4160, %v4154, %v4158
        %4170 = vst [vmem:[#allocation2 + $0x78] sm:$0xff] %v4161
        %4171 = vst [vmem:[#allocation2 + $0x80] sm:$0xf] %v4162
        %4172 = vst [vmem:[#allocation2 + $0x84] sm:$0xff] %v4164
        %4173 = vst [vmem:[#allocation2 + $0x8c] sm:$0xf] %v4165
        %4174 = vrot.lane.b32.xlu0 %v4026, 122
        %v4175 = vpop.permute.xlu0 %4174
        %4176 = vrot.lane.b32.xlu0 %v4027, 122
        %v4177 = vpop.permute.xlu0 %4176
        %4178 = vrot.lane.b32.xlu0 %v4028, 122
        %v4179 = vpop.permute.xlu0 %4178
        %4180 = vrot.lane.b32.xlu0 %v4029, 122
        %v4181 = vpop.permute.xlu0 %4180
        %v4182 = vrot.slane %v4175, 4
        %v4183 = vrot.slane %v4177, 4
        %v4184 = vrot.slane %v4179, 4
        %v4185 = vrot.slane %v4181, 4
        %v4186 = vsel %vm4050, %v4182, %v4183
        %vm4187 = vcmask 998400
        %v4188 = vsel %vm4187, %v4175, %v4186
        %v4189 = vsel %vm4187, %v4177, %v4183
        %v4190 = vsel %vm4050, %v4184, %v4185
        %v4191 = vsel %vm4187, %v4179, %v4190
        %v4192 = vsel %vm4187, %v4181, %v4185
        %4197 = vst [vmem:[#allocation2 + $0x90] sm:$0xff] %v4188
        %4198 = vst [vmem:[#allocation2 + $0x98] sm:$0xf] %v4189
        %4199 = vst [vmem:[#allocation2 + $0x9c] sm:$0xff] %v4191
        %4200 = vst [vmem:[#allocation2 + $0xa4] sm:$0xf] %v4192
        %4201 = vrot.lane.b32.xlu0 %v4026, 121
        %v4202 = vpop.permute.xlu0 %4201
        %4203 = vrot.lane.b32.xlu0 %v4027, 121
        %v4204 = vpop.permute.xlu0 %4203
        %4205 = vrot.lane.b32.xlu0 %v4028, 121
        %v4206 = vpop.permute.xlu0 %4205
        %4207 = vrot.lane.b32.xlu0 %v4029, 121
        %v4208 = vpop.permute.xlu0 %4207
        %v4209 = vrot.slane %v4202, 4
        %v4210 = vrot.slane %v4204, 4
        %v4211 = vrot.slane %v4206, 4
        %v4212 = vrot.slane %v4208, 4
        %v4213 = vsel %vm4050, %v4209, %v4210
        %vm4214 = vcmask 990208
        %v4215 = vsel %vm4214, %v4202, %v4213
        %v4216 = vsel %vm4214, %v4204, %v4210
        %v4217 = vsel %vm4050, %v4211, %v4212
        %v4218 = vsel %vm4214, %v4206, %v4217
        %v4219 = vsel %vm4214, %v4208, %v4212
        %4224 = vst [vmem:[#allocation2 + $0xa8] sm:$0xff] %v4215
        %4225 = vst [vmem:[#allocation2 + $0xb0] sm:$0xf] %v4216
        %4226 = vst [vmem:[#allocation2 + $0xb4] sm:$0xff] %v4218
        %4227 = vst [vmem:[#allocation2 + $0xbc] sm:$0xf] %v4219
        %4228 = vrot.lane.b32.xlu0 %v4026, 120
        %v4229 = vpop.permute.xlu0 %4228
        %4230 = vrot.lane.b32.xlu0 %v4027, 120
        %v4231 = vpop.permute.xlu0 %4230
        %4232 = vrot.lane.b32.xlu0 %v4028, 120
        %v4233 = vpop.permute.xlu0 %4232
        %4234 = vrot.lane.b32.xlu0 %v4029, 120
        %v4235 = vpop.permute.xlu0 %4234
        %v4236 = vrot.slane %v4229, 4
        %v4237 = vrot.slane %v4231, 4
        %v4238 = vrot.slane %v4233, 4
        %v4239 = vrot.slane %v4235, 4
        %v4240 = vsel %vm4050, %v4236, %v4237
        %vm4241 = vcmask 982016
        %v4242 = vsel %vm4241, %v4229, %v4240
        %v4243 = vsel %vm4241, %v4231, %v4237
        %v4244 = vsel %vm4050, %v4238, %v4239
        %v4245 = vsel %vm4241, %v4233, %v4244
        %v4246 = vsel %vm4241, %v4235, %v4239
        %4251 = vst [vmem:[#allocation2 + $0xc0] sm:$0xff] %v4242
        %4252 = vst [vmem:[#allocation2 + $0xc8] sm:$0xf] %v4243
        %4253 = vst [vmem:[#allocation2 + $0xcc] sm:$0xff] %v4245
        %4254 = vst [vmem:[#allocation2 + $0xd4] sm:$0xf] %v4246
        %4255 = vrot.lane.b32.xlu0 %v4026, 119
        %v4256 = vpop.permute.xlu0 %4255
        %4257 = vrot.lane.b32.xlu0 %v4027, 119
        %v4258 = vpop.permute.xlu0 %4257
        %4259 = vrot.lane.b32.xlu0 %v4028, 119
        %v4260 = vpop.permute.xlu0 %4259
        %4261 = vrot.lane.b32.xlu0 %v4029, 119
        %v4262 = vpop.permute.xlu0 %4261
        %v4263 = vrot.slane %v4256, 4
        %v4264 = vrot.slane %v4258, 4
        %v4265 = vrot.slane %v4260, 4
        %v4266 = vrot.slane %v4262, 4
        %v4267 = vsel %vm4050, %v4263, %v4264
        %vm4268 = vcmask 973824
        %v4269 = vsel %vm4268, %v4256, %v4267
        %v4270 = vsel %vm4268, %v4258, %v4264
        %v4271 = vsel %vm4050, %v4265, %v4266
        %v4272 = vsel %vm4268, %v4260, %v4271
        %v4273 = vsel %vm4268, %v4262, %v4266
        %4278 = vst [vmem:[#allocation2 + $0xd8] sm:$0xff] %v4269
        %4279 = vst [vmem:[#allocation2 + $0xe0] sm:$0xf] %v4270
        %4280 = vst [vmem:[#allocation2 + $0xe4] sm:$0xff] %v4272
        %4281 = vst [vmem:[#allocation2 + $0xec] sm:$0xf] %v4273
        %4282 = vrot.lane.b32.xlu0 %v4026, 118
        %v4283 = vpop.permute.xlu0 %4282
        %4284 = vrot.lane.b32.xlu0 %v4027, 118
        %v4285 = vpop.permute.xlu0 %4284
        %4286 = vrot.lane.b32.xlu0 %v4028, 118
        %v4287 = vpop.permute.xlu0 %4286
        %4288 = vrot.lane.b32.xlu0 %v4029, 118
        %v4289 = vpop.permute.xlu0 %4288
        %v4290 = vrot.slane %v4283, 4
        %v4291 = vrot.slane %v4285, 4
        %v4292 = vrot.slane %v4287, 4
        %v4293 = vrot.slane %v4289, 4
        %v4294 = vsel %vm4050, %v4290, %v4291
        %vm4295 = vcmask 965632
        %v4296 = vsel %vm4295, %v4283, %v4294
        %v4297 = vsel %vm4295, %v4285, %v4291
        %v4298 = vsel %vm4050, %v4292, %v4293
        %v4299 = vsel %vm4295, %v4287, %v4298
        %v4300 = vsel %vm4295, %v4289, %v4293
        %4305 = vst [vmem:[#allocation2 + $0xf0] sm:$0xff] %v4296
        %4306 = vst [vmem:[#allocation2 + $0xf8] sm:$0xf] %v4297
        %4307 = vst [vmem:[#allocation2 + $0xfc] sm:$0xff] %v4299
        %4308 = vst [vmem:[#allocation2 + $0x104] sm:$0xf] %v4300
        %4309 = vrot.lane.b32.xlu0 %v4026, 117
        %v4310 = vpop.permute.xlu0 %4309
        %4311 = vrot.lane.b32.xlu0 %v4027, 117
        %v4312 = vpop.permute.xlu0 %4311
        %4313 = vrot.lane.b32.xlu0 %v4028, 117
        %v4314 = vpop.permute.xlu0 %4313
        %4315 = vrot.lane.b32.xlu0 %v4029, 117
        %v4316 = vpop.permute.xlu0 %4315
        %v4317 = vrot.slane %v4310, 4
        %v4318 = vrot.slane %v4312, 4
        %v4319 = vrot.slane %v4314, 4
        %v4320 = vrot.slane %v4316, 4
        %v4321 = vsel %vm4050, %v4317, %v4318
        %vm4322 = vcmask 957440
        %v4323 = vsel %vm4322, %v4310, %v4321
        %v4324 = vsel %vm4322, %v4312, %v4318
        %v4325 = vsel %vm4050, %v4319, %v4320
        %v4326 = vsel %vm4322, %v4314, %v4325
        %v4327 = vsel %vm4322, %v4316, %v4320
        %4332 = vst [vmem:[#allocation2 + $0x108] sm:$0xff] %v4323
        %4333 = vst [vmem:[#allocation2 + $0x110] sm:$0xf] %v4324
        %4334 = vst [vmem:[#allocation2 + $0x114] sm:$0xff] %v4326
        %4335 = vst [vmem:[#allocation2 + $0x11c] sm:$0xf] %v4327
        %4336 = vrot.lane.b32.xlu0 %v4026, 116
        %v4337 = vpop.permute.xlu0 %4336
        %4338 = vrot.lane.b32.xlu0 %v4027, 116
        %v4339 = vpop.permute.xlu0 %4338
        %4340 = vrot.lane.b32.xlu0 %v4028, 116
        %v4341 = vpop.permute.xlu0 %4340
        %4342 = vrot.lane.b32.xlu0 %v4029, 116
        %v4343 = vpop.permute.xlu0 %4342
        %v4344 = vrot.slane %v4337, 4
        %v4345 = vrot.slane %v4339, 4
        %v4346 = vrot.slane %v4341, 4
        %v4347 = vrot.slane %v4343, 4
        %v4348 = vsel %vm4050, %v4344, %v4345
        %vm4349 = vcmask 949248
        %v4350 = vsel %vm4349, %v4337, %v4348
        %v4351 = vsel %vm4349, %v4339, %v4345
        %v4352 = vsel %vm4050, %v4346, %v4347
        %v4353 = vsel %vm4349, %v4341, %v4352
        %v4354 = vsel %vm4349, %v4343, %v4347
        %4359 = vst [vmem:[#allocation2 + $0x120] sm:$0xff] %v4350
        %4360 = vst [vmem:[#allocation2 + $0x128] sm:$0xf] %v4351
        %4361 = vst [vmem:[#allocation2 + $0x12c] sm:$0xff] %v4353
        %4362 = vst [vmem:[#allocation2 + $0x134] sm:$0xf] %v4354
        %4363 = vrot.lane.b32.xlu0 %v4026, 115
        %v4364 = vpop.permute.xlu0 %4363
        %4365 = vrot.lane.b32.xlu0 %v4027, 115
        %v4366 = vpop.permute.xlu0 %4365
        %4367 = vrot.lane.b32.xlu0 %v4028, 115
        %v4368 = vpop.permute.xlu0 %4367
        %4369 = vrot.lane.b32.xlu0 %v4029, 115
        %v4370 = vpop.permute.xlu0 %4369
        %v4371 = vrot.slane %v4364, 4
        %v4372 = vrot.slane %v4366, 4
        %v4373 = vrot.slane %v4368, 4
        %v4374 = vrot.slane %v4370, 4
        %v4375 = vsel %vm4050, %v4371, %v4372
        %vm4376 = vcmask 941056
        %v4377 = vsel %vm4376, %v4364, %v4375
        %v4378 = vsel %vm4376, %v4366, %v4372
        %v4379 = vsel %vm4050, %v4373, %v4374
        %v4380 = vsel %vm4376, %v4368, %v4379
        %v4381 = vsel %vm4376, %v4370, %v4374
        %4386 = vst [vmem:[#allocation2 + $0x138] sm:$0xff] %v4377
        %4387 = vst [vmem:[#allocation2 + $0x140] sm:$0xf] %v4378
        %4388 = vst [vmem:[#allocation2 + $0x144] sm:$0xff] %v4380
        %4389 = vst [vmem:[#allocation2 + $0x14c] sm:$0xf] %v4381
        %4390 = vrot.lane.b32.xlu0 %v4026, 114
        %v4391 = vpop.permute.xlu0 %4390
        %4392 = vrot.lane.b32.xlu0 %v4027, 114
        %v4393 = vpop.permute.xlu0 %4392
        %4394 = vrot.lane.b32.xlu0 %v4028, 114
        %v4395 = vpop.permute.xlu0 %4394
        %4396 = vrot.lane.b32.xlu0 %v4029, 114
        %v4397 = vpop.permute.xlu0 %4396
        %v4398 = vrot.slane %v4391, 4
        %v4399 = vrot.slane %v4393, 4
        %v4400 = vrot.slane %v4395, 4
        %v4401 = vrot.slane %v4397, 4
        %v4402 = vsel %vm4050, %v4398, %v4399
        %vm4403 = vcmask 932864
        %v4404 = vsel %vm4403, %v4391, %v4402
        %v4405 = vsel %vm4403, %v4393, %v4399
        %v4406 = vsel %vm4050, %v4400, %v4401
        %v4407 = vsel %vm4403, %v4395, %v4406
        %v4408 = vsel %vm4403, %v4397, %v4401
        %4413 = vst [vmem:[#allocation2 + $0x150] sm:$0xff] %v4404
        %4414 = vst [vmem:[#allocation2 + $0x158] sm:$0xf] %v4405
        %4415 = vst [vmem:[#allocation2 + $0x15c] sm:$0xff] %v4407
        %4416 = vst [vmem:[#allocation2 + $0x164] sm:$0xf] %v4408
        %4417 = vrot.lane.b32.xlu0 %v4026, 113
        %v4418 = vpop.permute.xlu0 %4417
        %4419 = vrot.lane.b32.xlu0 %v4027, 113
        %v4420 = vpop.permute.xlu0 %4419
        %4421 = vrot.lane.b32.xlu0 %v4028, 113
        %v4422 = vpop.permute.xlu0 %4421
        %4423 = vrot.lane.b32.xlu0 %v4029, 113
        %v4424 = vpop.permute.xlu0 %4423
        %v4425 = vrot.slane %v4418, 4
        %v4426 = vrot.slane %v4420, 4
        %v4427 = vrot.slane %v4422, 4
        %v4428 = vrot.slane %v4424, 4
        %v4429 = vsel %vm4050, %v4425, %v4426
        %vm4430 = vcmask 924672
        %v4431 = vsel %vm4430, %v4418, %v4429
        %v4432 = vsel %vm4430, %v4420, %v4426
        %v4433 = vsel %vm4050, %v4427, %v4428
        %v4434 = vsel %vm4430, %v4422, %v4433
        %v4435 = vsel %vm4430, %v4424, %v4428
        %4440 = vst [vmem:[#allocation2 + $0x168] sm:$0xff] %v4431
        %4441 = vst [vmem:[#allocation2 + $0x170] sm:$0xf] %v4432
        %4442 = vst [vmem:[#allocation2 + $0x174] sm:$0xff] %v4434
        %4443 = vst [vmem:[#allocation2 + $0x17c] sm:$0xf] %v4435
        %v4444 = vld [vmem:[%s6] sm:$0xff]
        %v4445 = vld [vmem:[%s6 + $0x8] sm:$0xff]
        %v4446 = vld [vmem:[#allocation2] sm:$0xff]
        %v4447 = vld [vmem:[#allocation2 + $0x8] sm:$0xf]
        %v4448 = vld [vmem:[#allocation2 + $0xc] sm:$0xff]
        %v4449 = vld [vmem:[#allocation2 + $0x14] sm:$0xf]
        %v4450 = vld [vmem:[#allocation2 + $0x18] sm:$0xff]
        %v4451 = vld [vmem:[#allocation2 + $0x20] sm:$0xf]
        %v4452 = vld [vmem:[#allocation2 + $0x24] sm:$0xff]
        %v4453 = vld [vmem:[#allocation2 + $0x2c] sm:$0xf]
        %v4454 = vld [vmem:[#allocation2 + $0x30] sm:$0xff]
        %v4455 = vld [vmem:[#allocation2 + $0x38] sm:$0xf]
        %v4456 = vld [vmem:[#allocation2 + $0x3c] sm:$0xff]
        %v4457 = vld [vmem:[#allocation2 + $0x44] sm:$0xf]
        %v4458 = vld [vmem:[#allocation2 + $0x48] sm:$0xff]
        %v4459 = vld [vmem:[#allocation2 + $0x50] sm:$0xf]
        %v4460 = vld [vmem:[#allocation2 + $0x54] sm:$0xff]
        %v4461 = vld [vmem:[#allocation2 + $0x5c] sm:$0xf]
        %v4462 = vld [vmem:[#allocation2 + $0x60] sm:$0xff]
        %v4463 = vld [vmem:[#allocation2 + $0x68] sm:$0xf]
        %v4464 = vld [vmem:[#allocation2 + $0x6c] sm:$0xff]
        %v4465 = vld [vmem:[#allocation2 + $0x74] sm:$0xf]
        %v4466 = vld [vmem:[#allocation2 + $0x78] sm:$0xff]
        %v4467 = vld [vmem:[#allocation2 + $0x80] sm:$0xf]
        %v4468 = vld [vmem:[#allocation2 + $0x84] sm:$0xff]
        %v4469 = vld [vmem:[#allocation2 + $0x8c] sm:$0xf]
        %v4470 = vld [vmem:[#allocation2 + $0x90] sm:$0xff]
        %v4471 = vld [vmem:[#allocation2 + $0x98] sm:$0xf]
        %v4472 = vld [vmem:[#allocation2 + $0x9c] sm:$0xff]
        %v4473 = vld [vmem:[#allocation2 + $0xa4] sm:$0xf]
        %v4474 = vld [vmem:[#allocation2 + $0xa8] sm:$0xff]
        %v4475 = vld [vmem:[#allocation2 + $0xb0] sm:$0xf]
        %v4476 = vld [vmem:[#allocation2 + $0xb4] sm:$0xff]
        %v4477 = vld [vmem:[#allocation2 + $0xbc] sm:$0xf]
        %v4478 = vld [vmem:[#allocation2 + $0xc0] sm:$0xff]
        %v4479 = vld [vmem:[#allocation2 + $0xc8] sm:$0xf]
        %v4480 = vld [vmem:[#allocation2 + $0xcc] sm:$0xff]
        %v4481 = vld [vmem:[#allocation2 + $0xd4] sm:$0xf]
        %v4482 = vld [vmem:[#allocation2 + $0xd8] sm:$0xff]
        %v4483 = vld [vmem:[#allocation2 + $0xe0] sm:$0xf]
        %v4484 = vld [vmem:[#allocation2 + $0xe4] sm:$0xff]
        %v4485 = vld [vmem:[#allocation2 + $0xec] sm:$0xf]
        %v4486 = vld [vmem:[#allocation2 + $0xf0] sm:$0xff]
        %v4487 = vld [vmem:[#allocation2 + $0xf8] sm:$0xf]
        %v4488 = vld [vmem:[#allocation2 + $0xfc] sm:$0xff]
        %v4489 = vld [vmem:[#allocation2 + $0x104] sm:$0xf]
        %v4490 = vld [vmem:[#allocation2 + $0x108] sm:$0xff]
        %v4491 = vld [vmem:[#allocation2 + $0x110] sm:$0xf]
        %v4492 = vld [vmem:[#allocation2 + $0x114] sm:$0xff]
        %v4493 = vld [vmem:[#allocation2 + $0x11c] sm:$0xf]
        %v4494 = vld [vmem:[#allocation2 + $0x120] sm:$0xff]
        %v4495 = vld [vmem:[#allocation2 + $0x128] sm:$0xf]
        %v4496 = vld [vmem:[#allocation2 + $0x12c] sm:$0xff]
        %v4497 = vld [vmem:[#allocation2 + $0x134] sm:$0xf]
        %v4498 = vld [vmem:[#allocation2 + $0x138] sm:$0xff]
        %v4499 = vld [vmem:[#allocation2 + $0x140] sm:$0xf]
        %v4500 = vld [vmem:[#allocation2 + $0x144] sm:$0xff]
        %v4501 = vld [vmem:[#allocation2 + $0x14c] sm:$0xf]
        %v4502 = vld [vmem:[#allocation2 + $0x150] sm:$0xff]
        %v4503 = vld [vmem:[#allocation2 + $0x158] sm:$0xf]
        %v4504 = vld [vmem:[#allocation2 + $0x15c] sm:$0xff]
        %v4505 = vld [vmem:[#allocation2 + $0x164] sm:$0xf]
        %v4506 = vld [vmem:[#allocation2 + $0x168] sm:$0xff]
        %v4507 = vld [vmem:[#allocation2 + $0x170] sm:$0xf]
        %v4508 = vld [vmem:[#allocation2 + $0x174] sm:$0xff]
        %v4509 = vld [vmem:[#allocation2 + $0x17c] sm:$0xf]
        %v4510 = vld [vmem:[%s7] sm:$0xff]
        %v4511 = vld [vmem:[%s7 + $0x8] sm:$0xff]
        %4513 = vset.pattern.permute.xlu0 0
        %4514 = vperm.xlu0 %4513, %v4510
        %v4515 = vpop.permute.xlu0 %4514
        %4518 = vset.pattern.permute.xlu0 0
        %4519 = vperm.xlu0 %4518, %v4511
        %v4520 = vpop.permute.xlu0 %4519
        %v4524 = vunpack.c.l.b16 %v4444
        %v4525 = vunpack.c.h.b16 %v4444
        %v4526 = vunpack.c.l.b16 %v4445
        %v4527 = vunpack.c.h.b16 %v4445
        %v4528 = vpack.c.b16 %v4526, %v4524
        %v4529 = vpack.c.b16 %v4527, %v4525
        %v4596 = vunpack.c.l.b16 %v4446
        %v4597 = vunpack.c.h.b16 %v4446
        %v4598 = vunpack.c.l.b16 %v4447
        %v4599 = vunpack.c.l.b16 %v4448
        %v4600 = vunpack.c.h.b16 %v4448
        %v4601 = vunpack.c.l.b16 %v4449
        %v4602 = vunpack.c.l.b16 %v4450
        %v4603 = vunpack.c.h.b16 %v4450
        %v4604 = vunpack.c.l.b16 %v4451
        %v4605 = vunpack.c.l.b16 %v4452
        %v4606 = vunpack.c.h.b16 %v4452
        %v4607 = vunpack.c.l.b16 %v4453
        %v4608 = vunpack.c.l.b16 %v4454
        %v4609 = vunpack.c.h.b16 %v4454
        %v4610 = vunpack.c.l.b16 %v4455
        %v4611 = vunpack.c.l.b16 %v4456
        %v4612 = vunpack.c.h.b16 %v4456
        %v4613 = vunpack.c.l.b16 %v4457
        %v4614 = vunpack.c.l.b16 %v4458
        %v4615 = vunpack.c.h.b16 %v4458
        %v4616 = vunpack.c.l.b16 %v4459
        %v4617 = vunpack.c.l.b16 %v4460
        %v4618 = vunpack.c.h.b16 %v4460
        %v4619 = vunpack.c.l.b16 %v4461
        %v4620 = vunpack.c.l.b16 %v4462
        %v4621 = vunpack.c.h.b16 %v4462
        %v4622 = vunpack.c.l.b16 %v4463
        %v4623 = vunpack.c.l.b16 %v4464
        %v4624 = vunpack.c.h.b16 %v4464
        %v4625 = vunpack.c.l.b16 %v4465
        %v4626 = vunpack.c.l.b16 %v4466
        %v4627 = vunpack.c.h.b16 %v4466
        %v4628 = vunpack.c.l.b16 %v4467
        %v4629 = vunpack.c.l.b16 %v4468
        %v4630 = vunpack.c.h.b16 %v4468
        %v4631 = vunpack.c.l.b16 %v4469
        %v4632 = vunpack.c.l.b16 %v4470
        %v4633 = vunpack.c.h.b16 %v4470
        %v4634 = vunpack.c.l.b16 %v4471
        %v4635 = vunpack.c.l.b16 %v4472
        %v4636 = vunpack.c.h.b16 %v4472
        %v4637 = vunpack.c.l.b16 %v4473
        %v4638 = vunpack.c.l.b16 %v4474
        %v4639 = vunpack.c.h.b16 %v4474
        %v4640 = vunpack.c.l.b16 %v4475
        %v4641 = vunpack.c.l.b16 %v4476
        %v4642 = vunpack.c.h.b16 %v4476
        %v4643 = vunpack.c.l.b16 %v4477
        %v4644 = vunpack.c.l.b16 %v4478
        %v4645 = vunpack.c.h.b16 %v4478
        %v4646 = vunpack.c.l.b16 %v4479
        %v4647 = vunpack.c.l.b16 %v4480
        %v4648 = vunpack.c.h.b16 %v4480
        %v4649 = vunpack.c.l.b16 %v4481
        %v4650 = vunpack.c.l.b16 %v4482
        %v4651 = vunpack.c.h.b16 %v4482
        %v4652 = vunpack.c.l.b16 %v4483
        %v4653 = vunpack.c.l.b16 %v4484
        %v4654 = vunpack.c.h.b16 %v4484
        %v4655 = vunpack.c.l.b16 %v4485
        %v4656 = vunpack.c.l.b16 %v4486
        %v4657 = vunpack.c.h.b16 %v4486
        %v4658 = vunpack.c.l.b16 %v4487
        %v4659 = vunpack.c.l.b16 %v4488
        %v4660 = vunpack.c.h.b16 %v4488
        %v4661 = vunpack.c.l.b16 %v4489
        %v4662 = vunpack.c.l.b16 %v4490
        %v4663 = vunpack.c.h.b16 %v4490
        %v4664 = vunpack.c.l.b16 %v4491
        %v4665 = vunpack.c.l.b16 %v4492
        %v4666 = vunpack.c.h.b16 %v4492
        %v4667 = vunpack.c.l.b16 %v4493
        %v4668 = vunpack.c.l.b16 %v4494
        %v4669 = vunpack.c.h.b16 %v4494
        %v4670 = vunpack.c.l.b16 %v4495
        %v4671 = vunpack.c.l.b16 %v4496
        %v4672 = vunpack.c.h.b16 %v4496
        %v4673 = vunpack.c.l.b16 %v4497
        %v4674 = vunpack.c.l.b16 %v4498
        %v4675 = vunpack.c.h.b16 %v4498
        %v4676 = vunpack.c.l.b16 %v4499
        %v4677 = vunpack.c.l.b16 %v4500
        %v4678 = vunpack.c.h.b16 %v4500
        %v4679 = vunpack.c.l.b16 %v4501
        %v4680 = vunpack.c.l.b16 %v4502
        %v4681 = vunpack.c.h.b16 %v4502
        %v4682 = vunpack.c.l.b16 %v4503
        %v4683 = vunpack.c.l.b16 %v4504
        %v4684 = vunpack.c.h.b16 %v4504
        %v4685 = vunpack.c.l.b16 %v4505
        %v4686 = vunpack.c.l.b16 %v4506
        %v4687 = vunpack.c.h.b16 %v4506
        %v4688 = vunpack.c.l.b16 %v4507
        %v4689 = vunpack.c.l.b16 %v4508
        %v4690 = vunpack.c.h.b16 %v4508
        %v4691 = vunpack.c.l.b16 %v4509
        %v4692 = vpack.c.b16 %v4599, %v4596
        %v4693 = vpack.c.b16 %v4600, %v4597
        %v4694 = vpack.c.b16 %v4601, %v4598
        %v4695 = vpack.c.b16 %v4605, %v4602
        %v4696 = vpack.c.b16 %v4606, %v4603
        %v4697 = vpack.c.b16 %v4607, %v4604
        %v4698 = vpack.c.b16 %v4611, %v4608
        %v4699 = vpack.c.b16 %v4612, %v4609
        %v4700 = vpack.c.b16 %v4613, %v4610
        %v4701 = vpack.c.b16 %v4617, %v4614
        %v4702 = vpack.c.b16 %v4618, %v4615
        %v4703 = vpack.c.b16 %v4619, %v4616
        %v4704 = vpack.c.b16 %v4623, %v4620
        %v4705 = vpack.c.b16 %v4624, %v4621
        %v4706 = vpack.c.b16 %v4625, %v4622
        %v4707 = vpack.c.b16 %v4629, %v4626
        %v4708 = vpack.c.b16 %v4630, %v4627
        %v4709 = vpack.c.b16 %v4631, %v4628
        %v4710 = vpack.c.b16 %v4635, %v4632
        %v4711 = vpack.c.b16 %v4636, %v4633
        %v4712 = vpack.c.b16 %v4637, %v4634
        %v4713 = vpack.c.b16 %v4641, %v4638
        %v4714 = vpack.c.b16 %v4642, %v4639
        %v4715 = vpack.c.b16 %v4643, %v4640
        %v4716 = vpack.c.b16 %v4647, %v4644
        %v4717 = vpack.c.b16 %v4648, %v4645
        %v4718 = vpack.c.b16 %v4649, %v4646
        %v4719 = vpack.c.b16 %v4653, %v4650
        %v4720 = vpack.c.b16 %v4654, %v4651
        %v4721 = vpack.c.b16 %v4655, %v4652
        %v4722 = vpack.c.b16 %v4659, %v4656
        %v4723 = vpack.c.b16 %v4660, %v4657
        %v4724 = vpack.c.b16 %v4661, %v4658
        %v4725 = vpack.c.b16 %v4665, %v4662
        %v4726 = vpack.c.b16 %v4666, %v4663
        %v4727 = vpack.c.b16 %v4667, %v4664
        %v4728 = vpack.c.b16 %v4671, %v4668
        %v4729 = vpack.c.b16 %v4672, %v4669
        %v4730 = vpack.c.b16 %v4673, %v4670
        %v4731 = vpack.c.b16 %v4677, %v4674
        %v4732 = vpack.c.b16 %v4678, %v4675
        %v4733 = vpack.c.b16 %v4679, %v4676
        %v4734 = vpack.c.b16 %v4683, %v4680
        %v4735 = vpack.c.b16 %v4684, %v4681
        %v4736 = vpack.c.b16 %v4685, %v4682
        %v4737 = vpack.c.b16 %v4689, %v4686
        %v4738 = vpack.c.b16 %v4690, %v4687
        %v4739 = vpack.c.b16 %v4691, %v4688
        %4788 = vmatpush.bf16.msra.mxu0 %v4713
        %4789 = vmatpush.bf16.msra.mxu0 %v4710
        %4790 = vmatpush.bf16.msra.mxu0 %v4707
        %4791 = vmatpush.bf16.msra.mxu0 %v4704
        %4792 = vmatpush.bf16.msra.mxu0 %v4701
        %4793 = vmatpush.bf16.msra.mxu0 %v4698
        %4794 = vmatpush.bf16.msra.mxu0 %v4695
        %4795 = vmatpush.bf16.msra.mxu0 %v4692
        %4796 = vmatmul.bf16.gmra.mxu0 %v4528
        %v4797 = vpop.f32.mrf.mxu0
        %v4798 = vadd.f32 %v4515, %v4797
        %v4799 = vpop.f32.mrf.mxu0
        %v4800 = vadd.f32 %v4520, %v4799
        %4801 = vdwg.mxu0
        %4802 = vmatpush.bf16.msra.mxu0 %v4737
        %4803 = vmatpush.bf16.msra.mxu0 %v4734
        %4804 = vmatpush.bf16.msra.mxu0 %v4731
        %4805 = vmatpush.bf16.msra.mxu0 %v4728
        %4806 = vmatpush.bf16.msra.mxu0 %v4725
        %4807 = vmatpush.bf16.msra.mxu0 %v4722
        %4808 = vmatpush.bf16.msra.mxu0 %v4719
        %4809 = vmatpush.bf16.msra.mxu0 %v4716
        %4810 = vmatmul.bf16.gmra.mxu0 %v4529
        %v4811 = vpop.f32.mrf.mxu0
        %v4812 = vadd.f32 %v4798, %v4811
        %v4813 = vpop.f32.mrf.mxu0
        %v4814 = vadd.f32 %v4800, %v4813
        %4815 = vdwg.mxu0
        %4816 = vmatpush.bf16.msra.mxu0 %v4714
        %4817 = vmatpush.bf16.msra.mxu0 %v4711
        %4818 = vmatpush.bf16.msra.mxu0 %v4708
        %4819 = vmatpush.bf16.msra.mxu0 %v4705
        %4820 = vmatpush.bf16.msra.mxu0 %v4702
        %4821 = vmatpush.bf16.msra.mxu0 %v4699
        %4822 = vmatpush.bf16.msra.mxu0 %v4696
        %4823 = vmatpush.bf16.msra.mxu0 %v4693
        %4824 = vmatmul.bf16.gmra.mxu0 %v4528
        %v4825 = vpop.f32.mrf.mxu0
        %v4826 = vadd.f32 %v4515, %v4825
        %v4827 = vpop.f32.mrf.mxu0
        %v4828 = vadd.f32 %v4520, %v4827
        %4829 = vdwg.mxu0
        %4830 = vmatpush.bf16.msra.mxu0 %v4738
        %4831 = vmatpush.bf16.msra.mxu0 %v4735
        %4832 = vmatpush.bf16.msra.mxu0 %v4732
        %4833 = vmatpush.bf16.msra.mxu0 %v4729
        %4834 = vmatpush.bf16.msra.mxu0 %v4726
        %4835 = vmatpush.bf16.msra.mxu0 %v4723
        %4836 = vmatpush.bf16.msra.mxu0 %v4720
        %4837 = vmatpush.bf16.msra.mxu0 %v4717
        %4838 = vmatmul.bf16.gmra.mxu0 %v4529
        %v4839 = vpop.f32.mrf.mxu0
        %v4840 = vadd.f32 %v4826, %v4839
        %v4841 = vpop.f32.mrf.mxu0
        %v4842 = vadd.f32 %v4828, %v4841
        %4843 = vdwg.mxu0
        %4844 = vmatpush.bf16.msra.mxu0 %v4715
        %4845 = vmatpush.bf16.msra.mxu0 %v4712
        %4846 = vmatpush.bf16.msra.mxu0 %v4709
        %4847 = vmatpush.bf16.msra.mxu0 %v4706
        %4848 = vmatpush.bf16.msra.mxu0 %v4703
        %4849 = vmatpush.bf16.msra.mxu0 %v4700
        %4850 = vmatpush.bf16.msra.mxu0 %v4697
        %4851 = vmatpush.bf16.msra.mxu0 %v4694
        %4852 = vmatmul.bf16.gmra.mxu0 %v4528
        %v4853 = vpop.f32.mrf.mxu0
        %v4854 = vadd.f32 %v4515, %v4853
        %v4855 = vpop.f32.mrf.mxu0
        %v4856 = vadd.f32 %v4520, %v4855
        %4857 = vdwg.mxu0
        %4858 = vmatpush.bf16.msra.mxu0 %v4739
        %4859 = vmatpush.bf16.msra.mxu0 %v4736
        %4860 = vmatpush.bf16.msra.mxu0 %v4733
        %4861 = vmatpush.bf16.msra.mxu0 %v4730
        %4862 = vmatpush.bf16.msra.mxu0 %v4727
        %4863 = vmatpush.bf16.msra.mxu0 %v4724
        %4864 = vmatpush.bf16.msra.mxu0 %v4721
        %4865 = vmatpush.bf16.msra.mxu0 %v4718
        %4866 = vmatmul.bf16.gmra.mxu0 %v4529
        %v4867 = vpop.f32.mrf.mxu0
        %v4868 = vadd.f32 %v4854, %v4867
        %v4869 = vpop.f32.mrf.mxu0
        %v4870 = vadd.f32 %v4856, %v4869
        %4871 = vdwg.mxu0
        %v4872 = vmax.f32 %v4812, 0.0
        %v4873 = vmax.f32 %v4840, 0.0
        %v4874 = vmax.f32 %v4868, 0.0
        %v4875 = vmax.f32 %v4814, 0.0
        %v4876 = vmax.f32 %v4842, 0.0
        %v4877 = vmax.f32 %v4870, 0.0
        %v4878 = vpack.c.bf16 %v4875, %v4872
        %v4879 = vpack.c.bf16 %v4876, %v4873
        %v4880 = vpack.c.bf16 %v4877, %v4874
        %v4881 = vld [vmem:[%s8] sm:$0xf]
        %v4882 = vld [vmem:[%s8 + $0x4] sm:$0xf]
        %v4883 = vld [vmem:[%s8 + $0x8] sm:$0xf]
        %v4884 = vld [vmem:[%s8 + $0xc] sm:$0xf]
        %v4885 = vld [vmem:[%s8 + $0x10] sm:$0xf]
        %v4886 = vld [vmem:[%s8 + $0x14] sm:$0xf]
        %v4887 = vld [vmem:[%s8 + $0x18] sm:$0xf]
        %v4888 = vld [vmem:[%s8 + $0x1c] sm:$0xf]
        %v4889 = vld [vmem:[%s8 + $0x20] sm:$0xf]
        %v4890 = vld [vmem:[%s8 + $0x24] sm:$0xf]
        %v4891 = vld [vmem:[%s8 + $0x28] sm:$0xf]
        %v4892 = vld [vmem:[%s8 + $0x2c] sm:$0xf]
        %v4893 = vld [vmem:[%s8 + $0x30] sm:$0xf]
        %v4894 = vld [vmem:[%s8 + $0x34] sm:$0xf]
        %v4895 = vld [vmem:[%s8 + $0x38] sm:$0xf]
        %v4896 = vld [vmem:[%s8 + $0x3c] sm:$0xf]
        %v4897 = vld [vmem:[%s8 + $0x40] sm:$0xf]
        %v4898 = vld [vmem:[%s8 + $0x44] sm:$0xf]
        %v4899 = vld [vmem:[%s8 + $0x48] sm:$0xf]
        %v4900 = vld [vmem:[%s8 + $0x4c] sm:$0xf]
        %v4901 = vld [vmem:[%s8 + $0x50] sm:$0xf]
        %v4902 = vld [vmem:[%s8 + $0x54] sm:$0xf]
        %v4903 = vld [vmem:[%s8 + $0x58] sm:$0xf]
        %v4904 = vld [vmem:[%s8 + $0x5c] sm:$0xf]
        %v4905 = vld [vmem:[%s8 + $0x60] sm:$0xf]
        %v4906 = vld [vmem:[%s8 + $0x64] sm:$0xf]
        %v4907 = vld [vmem:[%s8 + $0x68] sm:$0xf]
        %v4908 = vld [vmem:[%s8 + $0x6c] sm:$0xf]
        %v4909 = vld [vmem:[%s8 + $0x70] sm:$0xf]
        %v4910 = vld [vmem:[%s8 + $0x74] sm:$0xf]
        %v4911 = vld [vmem:[%s8 + $0x78] sm:$0xf]
        %v4912 = vld [vmem:[%s8 + $0x7c] sm:$0xf]
        %v4913 = vld [vmem:[%s8 + $0x80] sm:$0xf]
        %v4914 = vld [vmem:[%s8 + $0x84] sm:$0xf]
        %v4915 = vld [vmem:[%s8 + $0x88] sm:$0xf]
        %v4916 = vld [vmem:[%s8 + $0x8c] sm:$0xf]
        %v4917 = vld [vmem:[%s8 + $0x90] sm:$0xf]
        %v4918 = vld [vmem:[%s8 + $0x94] sm:$0xf]
        %v4919 = vld [vmem:[%s8 + $0x98] sm:$0xf]
        %v4920 = vld [vmem:[%s8 + $0x9c] sm:$0xf]
        %v4921 = vld [vmem:[%s8 + $0xa0] sm:$0xf]
        %v4922 = vld [vmem:[%s8 + $0xa4] sm:$0xf]
        %v4923 = vld [vmem:[%s8 + $0xa8] sm:$0xf]
        %v4924 = vld [vmem:[%s8 + $0xac] sm:$0xf]
        %v4925 = vld [vmem:[%s8 + $0xb0] sm:$0xf]
        %v4926 = vld [vmem:[%s8 + $0xb4] sm:$0xf]
        %v4927 = vld [vmem:[%s8 + $0xb8] sm:$0xf]
        %v4928 = vld [vmem:[%s8 + $0xbc] sm:$0xf]
        %v4977 = vunpack.c.l.b16 %v4881
        %v4978 = vunpack.c.l.b16 %v4882
        %v4979 = vunpack.c.l.b16 %v4883
        %v4980 = vunpack.c.l.b16 %v4884
        %v4981 = vunpack.c.l.b16 %v4885
        %v4982 = vunpack.c.l.b16 %v4886
        %v4983 = vunpack.c.l.b16 %v4887
        %v4984 = vunpack.c.l.b16 %v4888
        %v4985 = vunpack.c.l.b16 %v4889
        %v4986 = vunpack.c.l.b16 %v4890
        %v4987 = vunpack.c.l.b16 %v4891
        %v4988 = vunpack.c.l.b16 %v4892
        %v4989 = vunpack.c.l.b16 %v4893
        %v4990 = vunpack.c.l.b16 %v4894
        %v4991 = vunpack.c.l.b16 %v4895
        %v4992 = vunpack.c.l.b16 %v4896
        %v4993 = vunpack.c.l.b16 %v4897
        %v4994 = vunpack.c.l.b16 %v4898
        %v4995 = vunpack.c.l.b16 %v4899
        %v4996 = vunpack.c.l.b16 %v4900
        %v4997 = vunpack.c.l.b16 %v4901
        %v4998 = vunpack.c.l.b16 %v4902
        %v4999 = vunpack.c.l.b16 %v4903
        %v5000 = vunpack.c.l.b16 %v4904
        %v5001 = vunpack.c.l.b16 %v4905
        %v5002 = vunpack.c.l.b16 %v4906
        %v5003 = vunpack.c.l.b16 %v4907
        %v5004 = vunpack.c.l.b16 %v4908
        %v5005 = vunpack.c.l.b16 %v4909
        %v5006 = vunpack.c.l.b16 %v4910
        %v5007 = vunpack.c.l.b16 %v4911
        %v5008 = vunpack.c.l.b16 %v4912
        %v5009 = vunpack.c.l.b16 %v4913
        %v5010 = vunpack.c.l.b16 %v4914
        %v5011 = vunpack.c.l.b16 %v4915
        %v5012 = vunpack.c.l.b16 %v4916
        %v5013 = vunpack.c.l.b16 %v4917
        %v5014 = vunpack.c.l.b16 %v4918
        %v5015 = vunpack.c.l.b16 %v4919
        %v5016 = vunpack.c.l.b16 %v4920
        %v5017 = vunpack.c.l.b16 %v4921
        %v5018 = vunpack.c.l.b16 %v4922
        %v5019 = vunpack.c.l.b16 %v4923
        %v5020 = vunpack.c.l.b16 %v4924
        %v5021 = vunpack.c.l.b16 %v4925
        %v5022 = vunpack.c.l.b16 %v4926
        %v5023 = vunpack.c.l.b16 %v4927
        %v5024 = vunpack.c.l.b16 %v4928
        %v5025 = vpack.c.b16 %v4978, %v4977
        %v5026 = vpack.c.b16 %v4980, %v4979
        %v5027 = vpack.c.b16 %v4982, %v4981
        %v5028 = vpack.c.b16 %v4984, %v4983
        %v5029 = vpack.c.b16 %v4986, %v4985
        %v5030 = vpack.c.b16 %v4988, %v4987
        %v5031 = vpack.c.b16 %v4990, %v4989
        %v5032 = vpack.c.b16 %v4992, %v4991
        %v5033 = vpack.c.b16 %v4994, %v4993
        %v5034 = vpack.c.b16 %v4996, %v4995
        %v5035 = vpack.c.b16 %v4998, %v4997
        %v5036 = vpack.c.b16 %v5000, %v4999
        %v5037 = vpack.c.b16 %v5002, %v5001
        %v5038 = vpack.c.b16 %v5004, %v5003
        %v5039 = vpack.c.b16 %v5006, %v5005
        %v5040 = vpack.c.b16 %v5008, %v5007
        %v5041 = vpack.c.b16 %v5010, %v5009
        %v5042 = vpack.c.b16 %v5012, %v5011
        %v5043 = vpack.c.b16 %v5014, %v5013
        %v5044 = vpack.c.b16 %v5016, %v5015
        %v5045 = vpack.c.b16 %v5018, %v5017
        %v5046 = vpack.c.b16 %v5020, %v5019
        %v5047 = vpack.c.b16 %v5022, %v5021
        %v5048 = vpack.c.b16 %v5024, %v5023
        %5073 = vmatpush.bf16.msra.mxu0 %v5032
        %5074 = vmatpush.bf16.msra.mxu0 %v5031
        %5075 = vmatpush.bf16.msra.mxu0 %v5030
        %5076 = vmatpush.bf16.msra.mxu0 %v5029
        %5077 = vmatpush.bf16.msra.mxu0 %v5028
        %5078 = vmatpush.bf16.msra.mxu0 %v5027
        %5079 = vmatpush.bf16.msra.mxu0 %v5026
        %5080 = vmatpush.bf16.msra.mxu0 %v5025
        %5081 = vmatmul.bf16.gmra.mxu0 %v4878
        %v5082 = vpop.f32.mrf.mxu0
        %v5083 = vadd.f32 0.0, %v5082
        %v5084 = vpop.f32.mrf.mxu0
        %v5085 = vadd.f32 0.0, %v5084
        %5086 = vdwg.mxu0
        %5087 = vmatpush.bf16.msra.mxu0 %v5040
        %5088 = vmatpush.bf16.msra.mxu0 %v5039
        %5089 = vmatpush.bf16.msra.mxu0 %v5038
        %5090 = vmatpush.bf16.msra.mxu0 %v5037
        %5091 = vmatpush.bf16.msra.mxu0 %v5036
        %5092 = vmatpush.bf16.msra.mxu0 %v5035
        %5093 = vmatpush.bf16.msra.mxu0 %v5034
        %5094 = vmatpush.bf16.msra.mxu0 %v5033
        %5095 = vmatmul.bf16.gmra.mxu0 %v4879
        %v5096 = vpop.f32.mrf.mxu0
        %v5097 = vadd.f32 %v5083, %v5096
        %v5098 = vpop.f32.mrf.mxu0
        %v5099 = vadd.f32 %v5085, %v5098
        %5100 = vdwg.mxu0
        %5101 = vmatpush.bf16.msra.mxu0 %v5048
        %5102 = vmatpush.bf16.msra.mxu0 %v5047
        %5103 = vmatpush.bf16.msra.mxu0 %v5046
        %5104 = vmatpush.bf16.msra.mxu0 %v5045
        %5105 = vmatpush.bf16.msra.mxu0 %v5044
        %5106 = vmatpush.bf16.msra.mxu0 %v5043
        %5107 = vmatpush.bf16.msra.mxu0 %v5042
        %5108 = vmatpush.bf16.msra.mxu0 %v5041
        %5109 = vmatmul.bf16.gmra.mxu0 %v4880
        %v5110 = vpop.f32.mrf.mxu0
        %v5111 = vadd.f32 %v5097, %v5110
        %v5112 = vpop.f32.mrf.mxu0
        %v5113 = vadd.f32 %v5099, %v5112
        %5114 = vdwg.mxu0
        %v5115 = vld [vmem:[%s9] sm:$0xf]
        %v5116 = vld [vmem:[%s9 + $0x4] sm:$0xf]
        %v5117 = vpack.c.bf16 %v5113, %v5111
        %v5120 = vunpack.c.l.b16 %v5115
        %v5121 = vunpack.c.l.b16 %v5116
        %v5122 = vpack.c.b16 %v5121, %v5120
        %vm5123 = vcmask 130048
        %v5125 = vsel %vm5123, %v5122, 0
        %5127 = vmatpush.bf16.msra.mxu0 0
        %5128 = vmatpush.bf16.msra.mxu0 0
        %5129 = vmatpush.bf16.msra.mxu0 0
        %5130 = vmatpush.bf16.msra.mxu0 0
        %5131 = vmatpush.bf16.msra.mxu0 0
        %5132 = vmatpush.bf16.msra.mxu0 0
        %5133 = vmatpush.bf16.msra.mxu0 0
        %5134 = vmatpush.bf16.msra.mxu0 %v5117
        %5135 = vmatmul.bf16.gmra.mxu0 %v5125
        %v5136 = vpop.f32.mrf.mxu0
        %v5137 = vadd.f32 0.0, %v5136
        %v5138 = vpop.f32.mrf.mxu0
        %v5139 = vadd.f32 0.0, %v5138
        %5140 = vdwg.mxu0
        %v5141 = vmax.f32 %v5137, 0.0
        %v5142 = vmax.f32 %v5139, 0.0
        %v5143 = vpack.c.bf16 %v5142, %v5141
        %v5144 = vld [vmem:[%s10] sm:$0xf]
        %v5145 = vld [vmem:[%s10 + $0x4] sm:$0xf]
        %v5146 = vld [vmem:[%s10 + $0x8] sm:$0xf]
        %v5147 = vld [vmem:[%s10 + $0xc] sm:$0xf]
        %v5152 = vunpack.c.l.b16 %v5144
        %v5153 = vunpack.c.l.b16 %v5145
        %v5154 = vunpack.c.l.b16 %v5146
        %v5155 = vunpack.c.l.b16 %v5147
        %v5156 = vpack.c.b16 %v5153, %v5152
        %v5157 = vpack.c.b16 %v5155, %v5154
        %v5161 = vsel %vm1902, %v5143, 0
        %5163 = vmatpush.bf16.msra.mxu0 0
        %5164 = vmatpush.bf16.msra.mxu0 0
        %5165 = vmatpush.bf16.msra.mxu0 0
        %5166 = vmatpush.bf16.msra.mxu0 0
        %5167 = vmatpush.bf16.msra.mxu0 0
        %5168 = vmatpush.bf16.msra.mxu0 0
        %5169 = vmatpush.bf16.msra.mxu0 %v5157
        %5170 = vmatpush.bf16.msra.mxu0 %v5156
        %5171 = vmatmul.bf16.gmra.mxu0 %v5161
        %v5172 = vpop.f32.mrf.mxu0
        %v5173 = vadd.f32 0.0, %v5172
        %v5174 = vpop.f32.mrf.mxu0
        %v5175 = vadd.f32 0.0, %v5174
        %5176 = vdwg.mxu0
        %v5177 = vpack.c.bf16 %v5175, %v5173
        %v5178 = vld [vmem:[%s11] sm:$0xf]
        %v5179 = vld [vmem:[%s11 + $0x4] sm:$0xf]
        %v5180 = vld [vmem:[%s12] sm:$0x1]
        %v5182 = vperm.slane %v5180, 0
        %5184 = vxpose.xlu0.c.b16.start [1/8] %v5177, 128
        %5185 = vxpose.xlu0.c.b16.cont [2/8] 0, 128
        %5186 = vxpose.xlu0.c.b16.cont [3/8] 0, 128
        %5187 = vxpose.xlu0.c.b16.cont [4/8] 0, 128
        %5188 = vxpose.xlu0.c.b16.cont [5/8] 0, 128
        %5189 = vxpose.xlu0.c.b16.cont [6/8] 0, 128
        %5190 = vxpose.xlu0.c.b16.cont [7/8] 0, 128
        %5191 = vxpose.xlu0.c.b16.end [8/8] 0, 128
        %v5192 = vpop.trf.xlu0
        %v5193 = vpop.trf.xlu0
        %v5194 = vpop.trf.xlu0
        %v5195 = vpop.trf.xlu0
        %v5196 = vpop.trf.xlu0
        %v5197 = vpop.trf.xlu0
        %v5198 = vpop.trf.xlu0
        %v5199 = vpop.trf.xlu0
        %v5202 = vunpack.c.l.b16 %v5178
        %v5203 = vunpack.c.l.b16 %v5179
        %v5204 = vpack.c.b16 %v5203, %v5202
        %v5207 = vsel %vm5123, %v5192, 0
        %5209 = vmatpush.bf16.msra.mxu0 0
        %5210 = vmatpush.bf16.msra.mxu0 0
        %5211 = vmatpush.bf16.msra.mxu0 0
        %5212 = vmatpush.bf16.msra.mxu0 0
        %5213 = vmatpush.bf16.msra.mxu0 0
        %5214 = vmatpush.bf16.msra.mxu0 0
        %5215 = vmatpush.bf16.msra.mxu0 0
        %5216 = vmatpush.bf16.msra.mxu0 %v5204
        %5217 = vmatmul.bf16.gmra.mxu0 %v5207
        %v5218 = vpop.f32.mrf.mxu0
        %v5219 = vadd.f32 %v5182, %v5218
        %v5220 = vpop.f32.mrf.mxu0
        %5221 = vdwg.mxu0
        %5222 = vst [vmem:[%s713] sm:$0xff] %v5219
        %p5223 = scmp.lt.s32.totalorder %s24, 1
        %s5224 = scalar_select %p5223, %s24, 1
        %s5225 = smul.addr %s5224, 8
        %s5226 = scalar_lea.vmem %s13, %s5225
        // Predicated region
        $region96: #{eegnet_forward.1} parent=90 // pred_check
          %p5227 = pneg %p320
        $region97: #{eegnet_forward.1} parent=90 // pred_check_branch
          %5229 = sbr.rel (%p5227) target = $region99
        $region98: #{eegnet_forward.1} parent=90 // pred_region
          _
        $region99: #{eegnet_forward.1} parent=90 // pred_fallthru
          _
      $region91: #{eegnet_forward.1} parent=5 // pred_fallthru
        _
      %p5230 = scmp.le.s32.totalorder 2, %s19
      // Predicated region
      $region100: #{eegnet_forward.1} parent=5 // pred_check
        %p5231 = pneg %p5230
      $region101: #{eegnet_forward.1} parent=5 // pred_check_branch
        %5233 = sbr.rel (%p5231) target = $region103
      $region102: #{eegnet_forward.1} parent=5 // pred_region
        %s5234 = ssub.s32 %s19, 2
        // Predicated region
        $region104: #{eegnet_forward.1} parent=102 // pred_check
          %p5235 = pneg %p326
        $region105: #{eegnet_forward.1} parent=102 // pred_check_branch
          %5237 = sbr.rel (%p5235) target = $region107
        $region106: #{eegnet_forward.1} parent=102 // pred_region
          %p5238 = scmp.lt.s32.totalorder %s25, 1
          %s5239 = scalar_select %p5238, %s25, 1
          %s5240 = smul.addr %s5239, 8
          %s5241 = scalar_lea.vmem %s13, %s5240
        $region107: #{eegnet_forward.1} parent=102 // pred_fallthru
          _
      $region103: #{eegnet_forward.1} parent=5 // pred_fallthru
        _
    $region6: #{eegnet_forward.1} parent=1 // loop_footer
      %s23 = sadd.s32 1, %s19
    $region7: #{eegnet_forward.1} parent=1 // loop_footer_branch
      %18 = sbr.rel target = $region3
    $region8: #{eegnet_forward.1} parent=1 // loop_exit
      _

</llo_original>
